<compile_context>
chip_gen: v5e
topology: v5e:2x2
jax: 0.10.0
libtpu: 0.0.40
codegen_flags: <defaults>
</compile_context>

<pallas_src>
import jax
import jax.numpy as jnp
from jax import lax
from jax.experimental import pallas as pl
from jax.experimental.pallas import tpu as pltpu

EPS = 1e-5                      # PyTorch BatchNorm2d default eps
LANES = 128                     # TPU lane width
VMEM_LIMIT = 48 * 1024 * 1024   # > 32 MiB default scope, < v7x 64 MiB physical


# ----------------------------------------------------------------------------
# helpers
# ----------------------------------------------------------------------------
def _round_up(x, m):
    return (x + m - 1) // m * m


def _pad_last(a, n):
    pad = n - a.shape[-1]
    if pad == 0:
        return a
    return jnp.pad(a, [(0, 0)] * (a.ndim - 1) + [(0, pad)])


def _pad_axis(a, axis, n):
    pad = n - a.shape[axis]
    if pad == 0:
        return a
    cfg = [(0, 0)] * a.ndim
    cfg[axis] = (0, pad)
    return jnp.pad(a, cfg)


def _spatial_pad1(x_nhwc):
    """Zero-pad H and W by 1 on each side (NHWC)."""
    return jnp.pad(x_nhwc, ((0, 0), (1, 1), (1, 1), (0, 0)))


def _pick_tile_m(m, cap=512):
    """Largest power-of-two tile <= cap dividing m; otherwise pad m up so the
    grid stays multi-step and double-buffered (never one giant block)."""
    t = cap
    while t >= 8:
        if m % t == 0:
            return t, m
        t //= 2
    t = min(cap, _round_up(m, 8))
    return t, _round_up(m, t)


# ----------------------------------------------------------------------------
# elementwise / GEMM kernels
# ----------------------------------------------------------------------------
def _gemm_bias_kernel(x_ref, w_ref, b_ref, o_ref):
    acc = jnp.dot(x_ref[...], w_ref[...], preferred_element_type=jnp.float32)
    o_ref[...] = (acc + b_ref[...]).astype(o_ref.dtype)


def _bn_relu_kernel(y_ref, sc_ref, sh_ref, o_ref):
    y = y_ref[...].astype(jnp.float32)          # bf16 pre-BN intermediate
    o_ref[...] = jnp.maximum(y * sc_ref[...] + sh_ref[...], 0.0).astype(o_ref.dtype)


def _gemm_bias(x, w, b, out_dtype):
    """x:(M,K) bf16 @ w:(K,Npad) bf16 + b:(1,Npad) f32 -> (M,Npad)."""
    M, K = x.shape
    N = w.shape[1]
    tm, mp = _pick_tile_m(M)
    if mp != M:
        x = jnp.pad(x, ((0, mp - M), (0, 0)))
    nt = mp // tm
    ce = pl.CostEstimate(flops=2 * mp * K * N, transcendentals=0,
                         bytes_accessed=mp * K * 2 + K * N * 2 + N * 4 + mp * N * 2)
    out = pl.pallas_call(
        _gemm_bias_kernel,
        out_shape=jax.ShapeDtypeStruct((mp, N), out_dtype),
        grid=(nt,),
        in_specs=[pl.BlockSpec((tm, K), lambda i: (i, 0)),
                  pl.BlockSpec((K, N), lambda i: (0, 0)),
                  pl.BlockSpec((1, N), lambda i: (0, 0))],
        out_specs=pl.BlockSpec((tm, N), lambda i: (i, 0)),
        compiler_params=pltpu.CompilerParams(
            dimension_semantics=("parallel",), vmem_limit_bytes=VMEM_LIMIT),
        cost_estimate=ce,
    )(x, w, b)
    return out[:M]


def _bn_relu(y, scale, shift, out_dtype):
    """y:(M,Npad) bf16, scale/shift:(Npad,) f32 -> relu(y*scale+shift)."""
    M, N = y.shape
    tm, mp = _pick_tile_m(M)
    if mp != M:
        y = jnp.pad(y, ((0, mp - M), (0, 0)))
    nt = mp // tm
    ce = pl.CostEstimate(flops=3 * mp * N, transcendentals=0,
                         bytes_accessed=mp * N * 2 + 2 * N * 4 + mp * N * 4)
    out = pl.pallas_call(
        _bn_relu_kernel,
        out_shape=jax.ShapeDtypeStruct((mp, N), out_dtype),
        grid=(nt,),
        in_specs=[pl.BlockSpec((tm, N), lambda i: (i, 0)),
                  pl.BlockSpec((1, N), lambda i: (0, 0)),
                  pl.BlockSpec((1, N), lambda i: (0, 0))],
        out_specs=pl.BlockSpec((tm, N), lambda i: (i, 0)),
        compiler_params=pltpu.CompilerParams(
            dimension_semantics=("parallel",), vmem_limit_bytes=VMEM_LIMIT),
        cost_estimate=ce,
    )(y, scale.reshape(1, N), shift.reshape(1, N))
    return out[:M]


# ----------------------------------------------------------------------------
# fused 3x3 conv kernels (in-kernel im2col + single-pass BN statistics)
# ----------------------------------------------------------------------------
def _conv3x3_dual_stats(up_pad, sk_pad, w_up, w_sk):
    """3x3 conv over concat([up, skip], C) without materializing the concat.

    Inputs are spatially pre-padded (+1 halo), channel lane-padded, bf16 NHWC.
    Per grid step (b, row): 18 shifted tap matmuls accumulated in f32; emits the
    pre-BN bf16 row plus per-row sum / sum-of-squares for BatchNorm statistics.
    The padded image is a grid-invariant block along the row axis, so it is
    DMA'd to VMEM once per image and sliced in-place for every output row.
    """
    B, Hp2, Wp2, Cu = up_pad.shape
    Ck = sk_pad.shape[-1]
    H, W = Hp2 - 2, Wp2 - 2
    NP = w_up.shape[-1]

    def kernel(u_ref, k_ref, wu_ref, wk_ref, y_ref, sm_ref, sq_ref):
        r = pl.program_id(1)
        acc = jnp.zeros((W, NP), jnp.float32)
        for di in range(3):
            for dj in range(3):
                ut = u_ref[0, r + di, pl.ds(dj, W), :]        # (W, Cu) bf16
                kt = k_ref[0, r + di, pl.ds(dj, W), :]        # (W, Ck) bf16
                acc += jnp.dot(ut, wu_ref[di, dj, :, :],
                               preferred_element_type=jnp.float32)
                acc += jnp.dot(kt, wk_ref[di, dj, :, :],
                               preferred_element_type=jnp.float32)
        y_ref[...] = acc.astype(y_ref.dtype).reshape(y_ref.shape)
        sm_ref[...] = jnp.sum(acc, axis=0).reshape(sm_ref.shape)
        sq_ref[...] = jnp.sum(acc * acc, axis=0).reshape(sq_ref.shape)

    flops = 2 * B * H * W * 9 * (Cu + Ck) * NP
    bytes_acc = ((up_pad.size + sk_pad.size + w_up.size + w_sk.size) * 2
                 + B * H * W * NP * 2 + 2 * B * H * NP * 4)
    ce = pl.CostEstimate(flops=flops, transcendentals=0, bytes_accessed=bytes_acc)

    return pl.pallas_call(
        kernel,
        out_shape=(jax.ShapeDtypeStruct((B, H, W, NP), jnp.bfloat16),
                   jax.ShapeDtypeStruct((B, H, 1, NP), jnp.float32),
                   jax.ShapeDtypeStruct((B, H, 1, NP), jnp.float32)),
        grid=(B, H),
        in_specs=[
            pl.BlockSpec((1, Hp2, Wp2, Cu), lambda b, r: (b, 0, 0, 0)),
            pl.BlockSpec((1, Hp2, Wp2, Ck), lambda b, r: (b, 0, 0, 0)),
            pl.BlockSpec((3, 3, Cu, NP), lambda b, r: (0, 0, 0, 0)),
            pl.BlockSpec((3, 3, Ck, NP), lambda b, r: (0, 0, 0, 0)),
        ],
        out_specs=(
            pl.BlockSpec((1, 1, W, NP), lambda b, r: (b, r, 0, 0)),
            pl.BlockSpec((1, 1, 1, NP), lambda b, r: (b, r, 0, 0)),
            pl.BlockSpec((1, 1, 1, NP), lambda b, r: (b, r, 0, 0)),
        ),
        compiler_params=pltpu.CompilerParams(
            dimension_semantics=("parallel", "parallel"),
            vmem_limit_bytes=VMEM_LIMIT),
        cost_estimate=ce,
    )(up_pad, sk_pad, w_up, w_sk)


def _conv3x3_bnin_stats(x_pad, w, scale_in, shift_in):
    """3x3 conv whose input is the *pre-BatchNorm* bf16 output of the previous
    conv: the folded BN scale/shift + ReLU is applied per tap while gathering,
    and the zero-pad border is re-masked after the affine transform, so the
    normalized activation never exists in HBM."""
    B, Hp2, Wp2, Ci = x_pad.shape
    H, W = Hp2 - 2, Wp2 - 2
    NP = w.shape[-1]

    def kernel(x_ref, w_ref, sc_ref, sh_ref, y_ref, sm_ref, sq_ref):
        r = pl.program_id(1)
        sc = sc_ref[...]                                        # (1, Ci) f32
        sh = sh_ref[...]
        col = lax.broadcasted_iota(jnp.int32, (W, Ci), 0)
        # tap dj reads padded columns [dj, dj+W); valid padded columns are [1, W]
        colmasks = (col >= 1, col >= 0, col <= W - 2)
        acc = jnp.zeros((W, NP), jnp.float32)
        for di in range(3):
            rok = jnp.logical_and(r + di >= 1, r + di <= H)     # valid padded row?
            for dj in range(3):
                raw = x_ref[0, r + di, pl.ds(dj, W), :].astype(jnp.float32)
                act = jnp.maximum(raw * sc + sh, 0.0)           # fused BN1 + ReLU
                act = jnp.where(jnp.logical_and(colmasks[dj], rok), act,
                                0.0).astype(jnp.bfloat16)
                acc += jnp.dot(act, w_ref[di, dj, :, :],
                               preferred_element_type=jnp.float32)
        y_ref[...] = acc.astype(y_ref.dtype).reshape(y_ref.shape)
        sm_ref[...] = jnp.sum(acc, axis=0).reshape(sm_ref.shape)
        sq_ref[...] = jnp.sum(acc * acc, axis=0).reshape(sq_ref.shape)

    flops = 2 * B * H * W * 9 * Ci * NP
    bytes_acc = (x_pad.size * 2 + w.size * 2 + 2 * Ci * 4
                 + B * H * W * NP * 2 + 2 * B * H * NP * 4)
    ce = pl.CostEstimate(flops=flops, transcendentals=0, bytes_accessed=bytes_acc)

    return pl.pallas_call(
        kernel,
        out_shape=(jax.ShapeDtypeStruct((B, H, W, NP), jnp.bfloat16),
                   jax.ShapeDtypeStruct((B, H, 1, NP), jnp.float32),
                   jax.ShapeDtypeStruct((B, H, 1, NP), jnp.float32)),
        grid=(B, H),
        in_specs=[
            pl.BlockSpec((1, Hp2, Wp2, Ci), lambda b, r: (b, 0, 0, 0)),
            pl.BlockSpec((3, 3, Ci, NP), lambda b, r: (0, 0, 0, 0)),
            pl.BlockSpec((1, Ci), lambda b, r: (0, 0)),
            pl.BlockSpec((1, Ci), lambda b, r: (0, 0)),
        ],
        out_specs=(
            pl.BlockSpec((1, 1, W, NP), lambda b, r: (b, r, 0, 0)),
            pl.BlockSpec((1, 1, 1, NP), lambda b, r: (b, r, 0, 0)),
            pl.BlockSpec((1, 1, 1, NP), lambda b, r: (b, r, 0, 0)),
        ),
        compiler_params=pltpu.CompilerParams(
            dimension_semantics=("parallel", "parallel"),
            vmem_limit_bytes=VMEM_LIMIT),
        cost_estimate=ce,
    )(x_pad, w, scale_in.reshape(1, Ci), shift_in.reshape(1, Ci))


# ----------------------------------------------------------------------------
# module building blocks (NHWC, bf16 activations)
# ----------------------------------------------------------------------------
def _bn_fold(sm, sq, count, gamma, beta, npad):
    """Fold batch mean/var + gamma/beta into per-channel scale/shift (f32).
    Padded channels have zero stats and zero gamma/beta -> scale = shift = 0."""
    ssum = jnp.sum(sm, axis=(0, 1, 2))
    ssq = jnp.sum(sq, axis=(0, 1, 2))
    mean = ssum / count
    # TODO(synk): single-pass E[x^2]-E[x]^2 is cancellation-prone for huge M;
    # switch to per-tile mean-shifted accumulation at production sizes.
    var = jnp.maximum(ssq / count - mean * mean, 0.0)
    g = _pad_last(gamma.reshape(1, -1), npad)[0]
    b = _pad_last(beta.reshape(1, -1), npad)[0]
    scale = g * lax.rsqrt(var + EPS)
    shift = b - mean * scale
    return scale, shift


def upsample_conv_transpose(x_nhwc, w, b):
    """ConvTranspose2d(kernel=2, stride=2). w: (Cin, Cup, 2, 2) PyTorch layout."""
    B, H, W, Cin = x_nhwc.shape
    Cup = w.shape[1]
    n_real = 4 * Cup
    n_pad = _round_up(n_real, LANES)
    # out[b, 2h+d, 2w+k, oc] = sum_ic x[b,h,w,ic] * w[ic,oc,d,k] + bias[oc]
    w_flat = jnp.transpose(w, (0, 2, 3, 1)).reshape(Cin, n_real)     # cols (d,k,oc)
    w_pad = _pad_last(w_flat, n_pad).astype(jnp.bfloat16)
    b_pad = _pad_last(jnp.tile(b, 4).reshape(1, n_real), n_pad).astype(jnp.float32)
    y = _gemm_bias(x_nhwc.reshape(B * H * W, Cin), w_pad, b_pad, jnp.bfloat16)
    # TODO(synk): fold this 2x2 pixel interleave into the consumer's indexing so
    # the upsampled activation never round-trips HBM in a second layout.
    y = y[:, :n_real].reshape(B, H, W, 2, 2, Cup)
    y = y.transpose(0, 1, 3, 2, 4, 5).reshape(B, 2 * H, 2 * W, Cup)
    return y


def expanding_block_forward(x_nhwc, skip_nhwc, p):
    """ExpandingBlock (transpose=True) forward; training-mode BatchNorm."""
    B, H, W, Cin = x_nhwc.shape
    Cup = Cin // 2
    Csk = skip_nhwc.shape[-1]
    Cout = p["conv1_w"].shape[0]
    Hh, Wh = 2 * H, 2 * W
    M = B * Hh * Wh
    NP = _round_up(Cout, LANES)
    cu_pad = _round_up(Cup, LANES)      # lane-pad conv1 sources (no-op at prod sizes)
    ck_pad = _round_up(Csk, LANES)

    xb = x_nhwc.astype(jnp.bfloat16)
    sb = skip_nhwc.astype(jnp.bfloat16)

    # --- upsample (ConvTranspose2d k=2 s=2) ---
    up = upsample_conv_transpose(xb, p["up_w"], p["up_b"])            # (B,Hh,Wh,Cup)

    # --- conv1 + BN1 stats: dual-source fused conv, xcat never materialized ---
    # (conv bias dropped: a per-channel constant cancels against the batch mean)
    up_pad = _spatial_pad1(_pad_axis(up, 3, cu_pad))
    sk_pad = _spatial_pad1(_pad_axis(sb, 3, ck_pad))
    w1 = jnp.transpose(p["conv1_w"], (2, 3, 1, 0))                    # (3,3,Cin,Cout)
    w1u = _pad_last(_pad_axis(w1[:, :, :Cup, :], 2, cu_pad), NP).astype(jnp.bfloat16)
    w1k = _pad_last(_pad_axis(w1[:, :, Cup:, :], 2, ck_pad), NP).astype(jnp.bfloat16)
    y1, s1, q1 = _conv3x3_dual_stats(up_pad, sk_pad, w1u, w1k)        # y1: pre-BN bf16
    scale1, shift1 = _bn_fold(s1, q1, M, p["bn1_g"], p["bn1_b"], NP)

    # --- conv2 + BN2 stats: BN1-apply + ReLU fused into the tap gather ---
    w2 = jnp.transpose(p["conv2_w"], (2, 3, 1, 0))                    # (3,3,Cout,Cout)
    w2p = _pad_last(_pad_axis(w2, 2, NP), NP).astype(jnp.bfloat16)
    y2, s2, q2 = _conv3x3_bnin_stats(_spatial_pad1(y1), w2p, scale1, shift1)
    scale2, shift2 = _bn_fold(s2, q2, M, p["bn2_g"], p["bn2_b"], NP)

    # --- final BN2-apply + ReLU (bf16 pre-BN in, f32 out; use bf16 out if the
    #     downstream consumer tolerates it) ---
    out = _bn_relu(y2.reshape(M, NP), scale2, shift2, jnp.float32)
    return out[:, :Cout].reshape(B, Hh, Wh, Cout)


# ----------------------------------------------------------------------------
# parameters (deterministic, synthetic) and pure-JAX f32 reference (NCHW)
# ----------------------------------------------------------------------------
def init_params(key, cin, cout):
    ks = jax.random.split(key, 6)
    cup = cin // 2
    n = lambda k, s: 0.1 * jax.random.normal(k, s, jnp.float32)
    return dict(
        up_w=n(ks[0], (cin, cup, 2, 2)),       # ConvTranspose2d weight (in, out, kH, kW)
        up_b=n(ks[1], (cup,)),
        conv1_w=n(ks[2], (cout, cin, 3, 3)),   # Conv2d weight (out, in, kH, kW)
        conv1_b=n(ks[3], (cout,)),
        conv2_w=n(ks[4], (cout, cout, 3, 3)),
        conv2_b=n(ks[5], (cout,)),
        bn1_g=jnp.ones((cout,), jnp.float32), bn1_b=jnp.zeros((cout,), jnp.float32),
        bn2_g=jnp.ones((cout,), jnp.float32), bn2_b=jnp.zeros((cout,), jnp.float32),
    )


def reference_forward(x, skip, p):
    """Mirrors the PyTorch module (transpose=True, training-mode BN), f32, NCHW."""
    t = jnp.einsum("nihw,iodk->nohwdk", x, p["up_w"])
    B, Co, H, W = t.shape[:4]
    up = t.transpose(0, 1, 2, 4, 3, 5).reshape(B, Co, 2 * H, 2 * W)
    up = up + p["up_b"][None, :, None, None]
    xcat = jnp.concatenate([up, skip], axis=1)

    def conv3(v, w, b):
        o = lax.conv_general_dilated(v, w, (1, 1), ((1, 1), (1, 1)),
                                     dimension_numbers=("NCHW", "OIHW", "NCHW"))
        return o + b[None, :, None, None]

    def bn_relu(v, g, bt):
        m = v.mean(axis=(0, 2, 3), keepdims=True)
        var = ((v - m) ** 2).mean(axis=(0, 2, 3), keepdims=True)
        y = (v - m) * lax.rsqrt(var + EPS)
        y = y * g[None, :, None, None] + bt[None, :, None, None]
        return jnp.maximum(y, 0.0)

    h = bn_relu(conv3(xcat, p["conv1_w"], p["conv1_b"]), p["bn1_g"], p["bn1_b"])
    h = bn_relu(conv3(h, p["conv2_w"], p["conv2_b"]), p["bn2_g"], p["bn2_b"])
    return h


# ----------------------------------------------------------------------------
# main
# ----------------------------------------------------------------------------
if __name__ == "__main__":
    B, Cin, Cout, H, W = 2, 4, 8, 8, 8           # x: (2,4,8,8), skip: (2,2,16,16)
    key = jax.random.PRNGKey(0)
    k_x, k_s, k_p = jax.random.split(key, 3)

    x_nchw = jax.random.normal(k_x, (B, Cin, H, W), jnp.float32)
    skip_nchw = jax.random.normal(k_s, (B, Cin // 2, 2 * H, 2 * W), jnp.float32)
    params = init_params(k_p, Cin, Cout)

    # NCHW -> NHWC for the Pallas path
    x_nhwc = jnp.transpose(x_nchw, (0, 2, 3, 1))
    skip_nhwc = jnp.transpose(skip_nchw, (0, 2, 3, 1))

    fwd = jax.jit(expanding_block_forward)
    out_nhwc = jax.block_until_ready(fwd(x_nhwc, skip_nhwc, params))
    out_nchw = jnp.transpose(out_nhwc, (0, 3, 1, 2))

    ref = reference_forward(x_nchw, skip_nchw, params)

    assert out_nchw.shape == (B, Cout, 2 * H, 2 * W), out_nchw.shape
    max_err = float(jnp.max(jnp.abs(out_nchw.astype(jnp.float32) - ref)))
    # bf16 MXU inputs and bf16 pre-BN intermediates vs an all-f32 reference;
    # a real indexing/tap bug would produce O(1) errors, so this stays tight.
    assert max_err < 6e-2, max_err

    print("KERNEL_OK")
</pallas_src>

<mosaic_0001>
module attributes {stable_mosaic.version = 11 : i64} {
  func.func @_gemm_bias_kernel(%arg0: i32, %arg1: memref<128x4xbf16, #tpu.memory_space<vmem>>, %arg2: memref<4x128xbf16, #tpu.memory_space<vmem>>, %arg3: memref<1x128xf32, #tpu.memory_space<vmem>>, %arg4: memref<128x128xbf16, #tpu.memory_space<vmem>>) attributes {dimension_semantics = [#tpu.dimension_semantics<parallel>], iteration_bounds = array<i64: 1>, scalar_prefetch = 0 : i64, scratch_operands = 0 : i64, tpu.core_type = #tpu.core_type<tc>, window_params = [{transform_indices = @transform_0, window_bounds = array<i64: 128, 4>}, {pipeline_mode = #tpu.pipeline_mode<synchronous>, transform_indices = @transform_1, window_bounds = array<i64: 4, 128>}, {pipeline_mode = #tpu.pipeline_mode<synchronous>, transform_indices = @transform_2, window_bounds = array<i64: 1, 128>}, {transform_indices = @transform_3, window_bounds = array<i64: 128, 128>}]} {
    %c0 = arith.constant 0 : index
    %c0_0 = arith.constant 0 : index
    %0 = vector.load %arg1[%c0, %c0_0] : memref<128x4xbf16, #tpu.memory_space<vmem>>, vector<128x4xbf16>
    %c0_1 = arith.constant 0 : index
    %c0_2 = arith.constant 0 : index
    %1 = vector.load %arg2[%c0_1, %c0_2] : memref<4x128xbf16, #tpu.memory_space<vmem>>, vector<4x128xbf16>
    %cst = arith.constant dense<0.000000e+00> : vector<128x128xf32>
    %2 = tpu.matmul %0, %1, %cst {dimension_numbers = #tpu.dot_dimension_numbers<[1], [0], [0], [1], [0, 0, 1, 1], [], []>} : vector<128x4xbf16>, vector<4x128xbf16>, vector<128x128xf32> -> vector<128x128xf32>
    %c0_3 = arith.constant 0 : index
    %c0_4 = arith.constant 0 : index
    %3 = vector.load %arg3[%c0_3, %c0_4] : memref<1x128xf32, #tpu.memory_space<vmem>>, vector<1x128xf32>
    %4 = vector.broadcast %3 : vector<1x128xf32> to vector<128x128xf32>
    %5 = arith.addf %2, %4 : vector<128x128xf32>
    %6 = arith.truncf %5 : vector<128x128xf32> to vector<128x128xbf16>
    %c0_5 = arith.constant 0 : index
    %c0_6 = arith.constant 0 : index
    %7 = vector.load %arg4[%c0_5, %c0_6] : memref<128x128xbf16, #tpu.memory_space<vmem>>, vector<128x128xbf16>
    tpu.vector_store %arg4[%c0_5, %c0_6], %6 {strides = array<i32>} : memref<128x128xbf16, #tpu.memory_space<vmem>>, vector<128x128xbf16>,
    return
  }
  func.func @transform_0(%arg0: i32) -> (i32, i32) {
    %c0_i32 = arith.constant 0 : i32
    %c0_i32_0 = arith.constant 0 : i32
    return %arg0, %c0_i32 : i32, i32
  }
  func.func @transform_1(%arg0: i32) -> (i32, i32) {
    %c0_i32 = arith.constant 0 : i32
    %c0_i32_0 = arith.constant 0 : i32
    %c0_i32_1 = arith.constant 0 : i32
    return %c0_i32, %c0_i32_0 : i32, i32
  }
  func.func @transform_2(%arg0: i32) -> (i32, i32) {
    %c0_i32 = arith.constant 0 : i32
    %c0_i32_0 = arith.constant 0 : i32
    %c0_i32_1 = arith.constant 0 : i32
    return %c0_i32, %c0_i32_0 : i32, i32
  }
  func.func @transform_3(%arg0: i32) -> (i32, i32) {
    %c0_i32 = arith.constant 0 : i32
    %c0_i32_0 = arith.constant 0 : i32
    return %arg0, %c0_i32 : i32, i32
  }
}

module attributes {stable_mosaic.version = 11 : i64} {
  func.func @kernel(%arg0: i32, %arg1: i32, %arg2: memref<1x18x18x128xbf16, #tpu.memory_space<vmem>>, %arg3: memref<1x18x18x128xbf16, #tpu.memory_space<vmem>>, %arg4: memref<3x3x128x128xbf16, #tpu.memory_space<vmem>>, %arg5: memref<3x3x128x128xbf16, #tpu.memory_space<vmem>>, %arg6: memref<1x1x16x128xbf16, #tpu.memory_space<vmem>>, %arg7: memref<1x1x1x128xf32, #tpu.memory_space<vmem>>, %arg8: memref<1x1x1x128xf32, #tpu.memory_space<vmem>>) attributes {dimension_semantics = [#tpu.dimension_semantics<parallel>, #tpu.dimension_semantics<parallel>], iteration_bounds = array<i64: 2, 16>, scalar_prefetch = 0 : i64, scratch_operands = 0 : i64, tpu.core_type = #tpu.core_type<tc>, window_params = [{transform_indices = @transform_0, window_bounds = array<i64: 1, 18, 18, 128>}, {transform_indices = @transform_1, window_bounds = array<i64: 1, 18, 18, 128>}, {pipeline_mode = #tpu.pipeline_mode<synchronous>, transform_indices = @transform_2, window_bounds = array<i64: 3, 3, 128, 128>}, {pipeline_mode = #tpu.pipeline_mode<synchronous>, transform_indices = @transform_3, window_bounds = array<i64: 3, 3, 128, 128>}, {transform_indices = @transform_4, window_bounds = array<i64: 1, 1, 16, 128>}, {transform_indices = @transform_5, window_bounds = array<i64: 1, 1, 1, 128>}, {transform_indices = @transform_6, window_bounds = array<i64: 1, 1, 1, 128>}]} {
    %cst = arith.constant 0.000000e+00 : f32
    %0 = vector.broadcast %cst : f32 to vector<16x128xf32>
    %c0_i32 = arith.constant 0 : i32
    %1 = arith.addi %arg1, %c0_i32 : i32
    %c0 = arith.constant 0 : index
    %2 = arith.index_cast %1 : i32 to index
    %c0_0 = arith.constant 0 : index
    %c0_1 = arith.constant 0 : index
    %3 = vector.load %arg2[%c0, %2, %c0_0, %c0_1] : memref<1x18x18x128xbf16, #tpu.memory_space<vmem>>, vector<1x1x16x128xbf16>
    %4 = vector.shape_cast %3 : vector<1x1x16x128xbf16> to vector<16x128xbf16>
    %c0_i32_2 = arith.constant 0 : i32
    %5 = arith.addi %arg1, %c0_i32_2 : i32
    %c0_3 = arith.constant 0 : index
    %6 = arith.index_cast %5 : i32 to index
    %c0_4 = arith.constant 0 : index
    %c0_5 = arith.constant 0 : index
    %7 = vector.load %arg3[%c0_3, %6, %c0_4, %c0_5] : memref<1x18x18x128xbf16, #tpu.memory_space<vmem>>, vector<1x1x16x128xbf16>
    %8 = vector.shape_cast %7 : vector<1x1x16x128xbf16> to vector<16x128xbf16>
    %c0_6 = arith.constant 0 : index
    %c0_7 = arith.constant 0 : index
    %c0_8 = arith.constant 0 : index
    %c0_9 = arith.constant 0 : index
    %9 = vector.load %arg4[%c0_6, %c0_7, %c0_8, %c0_9] : memref<3x3x128x128xbf16, #tpu.memory_space<vmem>>, vector<1x1x128x128xbf16>
    %10 = vector.shape_cast %9 : vector<1x1x128x128xbf16> to vector<128x128xbf16>
    %cst_10 = arith.constant dense<0.000000e+00> : vector<16x128xf32>
    %11 = tpu.matmul %4, %10, %cst_10 {dimension_numbers = #tpu.dot_dimension_numbers<[1], [0], [0], [1], [0, 0, 1, 1], [], []>} : vector<16x128xbf16>, vector<128x128xbf16>, vector<16x128xf32> -> vector<16x128xf32>
    %12 = arith.addf %0, %11 : vector<16x128xf32>
    %c0_11 = arith.constant 0 : index
    %c0_12 = arith.constant 0 : index
    %c0_13 = arith.constant 0 : index
    %c0_14 = arith.constant 0 : index
    %13 = vector.load %arg5[%c0_11, %c0_12, %c0_13, %c0_14] : memref<3x3x128x128xbf16, #tpu.memory_space<vmem>>, vector<1x1x128x128xbf16>
    %14 = vector.shape_cast %13 : vector<1x1x128x128xbf16> to vector<128x128xbf16>
    %cst_15 = arith.constant dense<0.000000e+00> : vector<16x128xf32>
    %15 = tpu.matmul %8, %14, %cst_15 {dimension_numbers = #tpu.dot_dimension_numbers<[1], [0], [0], [1], [0, 0, 1, 1], [], []>} : vector<16x128xbf16>, vector<128x128xbf16>, vector<16x128xf32> -> vector<16x128xf32>
    %16 = arith.addf %12, %15 : vector<16x128xf32>
    %c0_i32_16 = arith.constant 0 : i32
    %17 = arith.addi %arg1, %c0_i32_16 : i32
    %c0_17 = arith.constant 0 : index
    %18 = arith.index_cast %17 : i32 to index
    %c1 = arith.constant 1 : index
    %c0_18 = arith.constant 0 : index
    %19 = vector.load %arg2[%c0_17, %18, %c1, %c0_18] : memref<1x18x18x128xbf16, #tpu.memory_space<vmem>>, vector<1x1x16x128xbf16>
    %20 = vector.shape_cast %19 : vector<1x1x16x128xbf16> to vector<16x128xbf16>
    %c0_i32_19 = arith.constant 0 : i32
    %21 = arith.addi %arg1, %c0_i32_19 : i32
    %c0_20 = arith.constant 0 : index
    %22 = arith.index_cast %21 : i32 to index
    %c1_21 = arith.constant 1 : index
    %c0_22 = arith.constant 0 : index
    %23 = vector.load %arg3[%c0_20, %22, %c1_21, %c0_22] : memref<1x18x18x128xbf16, #tpu.memory_space<vmem>>, vector<1x1x16x128xbf16>
    %24 = vector.shape_cast %23 : vector<1x1x16x128xbf16> to vector<16x128xbf16>
    %c0_23 = arith.constant 0 : index
    %c1_24 = arith.constant 1 : index
    %c0_25 = arith.constant 0 : index
    %c0_26 = arith.constant 0 : index
    %25 = vector.load %arg4[%c0_23, %c1_24, %c0_25, %c0_26] : memref<3x3x128x128xbf16, #tpu.memory_space<vmem>>, vector<1x1x128x128xbf16>
    %26 = vector.shape_cast %25 : vector<1x1x128x128xbf16> to vector<128x128xbf16>
    %cst_27 = arith.constant dense<0.000000e+00> : vector<16x128xf32>
    %27 = tpu.matmul %20, %26, %cst_27 {dimension_numbers = #tpu.dot_dimension_numbers<[1], [0], [0], [1], [0, 0, 1, 1], [], []>} : vector<16x128xbf16>, vector<128x128xbf16>, vector<16x128xf32> -> vector<16x128xf32>
    %28 = arith.addf %16, %27 : vector<16x128xf32>
    %c0_28 = arith.constant 0 : index
    %c1_29 = arith.constant 1 : index
    %c0_30 = arith.constant 0 : index
    %c0_31 = arith.constant 0 : index
    %29 = vector.load %arg5[%c0_28, %c1_29, %c0_30, %c0_31] : memref<3x3x128x128xbf16, #tpu.memory_space<vmem>>, vector<1x1x128x128xbf16>
    %30 = vector.shape_cast %29 : vector<1x1x128x128xbf16> to vector<128x128xbf16>
    %cst_32 = arith.constant dense<0.000000e+00> : vector<16x128xf32>
    %31 = tpu.matmul %24, %30, %cst_32 {dimension_numbers = #tpu.dot_dimension_numbers<[1], [0], [0], [1], [0, 0, 1, 1], [], []>} : vector<16x128xbf16>, vector<128x128xbf16>, vector<16x128xf32> -> vector<16x128xf32>
    %32 = arith.addf %28, %31 : vector<16x128xf32>
    %c0_i32_33 = arith.constant 0 : i32
    %33 = arith.addi %arg1, %c0_i32_33 : i32
    %c0_34 = arith.constant 0 : index
    %34 = arith.index_cast %33 : i32 to index
    %c2 = arith.constant 2 : index
    %c0_35 = arith.constant 0 : index
    %35 = vector.load %arg2[%c0_34, %34, %c2, %c0_35] : memref<1x18x18x128xbf16, #tpu.memory_space<vmem>>, vector<1x1x16x128xbf16>
    %36 = vector.shape_cast %35 : vector<1x1x16x128xbf16> to vector<16x128xbf16>
    %c0_i32_36 = arith.constant 0 : i32
    %37 = arith.addi %arg1, %c0_i32_36 : i32
    %c0_37 = arith.constant 0 : index
    %38 = arith.index_cast %37 : i32 to index
    %c2_38 = arith.constant 2 : index
    %c0_39 = arith.constant 0 : index
    %39 = vector.load %arg3[%c0_37, %38, %c2_38, %c0_39] : memref<1x18x18x128xbf16, #tpu.memory_space<vmem>>, vector<1x1x16x128xbf16>
    %40 = vector.shape_cast %39 : vector<1x1x16x128xbf16> to vector<16x128xbf16>
    %c0_40 = arith.constant 0 : index
    %c2_41 = arith.constant 2 : index
    %c0_42 = arith.constant 0 : index
    %c0_43 = arith.constant 0 : index
    %41 = vector.load %arg4[%c0_40, %c2_41, %c0_42, %c0_43] : memref<3x3x128x128xbf16, #tpu.memory_space<vmem>>, vector<1x1x128x128xbf16>
    %42 = vector.shape_cast %41 : vector<1x1x128x128xbf16> to vector<128x128xbf16>
    %cst_44 = arith.constant dense<0.000000e+00> : vector<16x128xf32>
    %43 = tpu.matmul %36, %42, %cst_44 {dimension_numbers = #tpu.dot_dimension_numbers<[1], [0], [0], [1], [0, 0, 1, 1], [], []>} : vector<16x128xbf16>, vector<128x128xbf16>, vector<16x128xf32> -> vector<16x128xf32>
    %44 = arith.addf %32, %43 : vector<16x128xf32>
    %c0_45 = arith.constant 0 : index
    %c2_46 = arith.constant 2 : index
    %c0_47 = arith.constant 0 : index
    %c0_48 = arith.constant 0 : index
    %45 = vector.load %arg5[%c0_45, %c2_46, %c0_47, %c0_48] : memref<3x3x128x128xbf16, #tpu.memory_space<vmem>>, vector<1x1x128x128xbf16>
    %46 = vector.shape_cast %45 : vector<1x1x128x128xbf16> to vector<128x128xbf16>
    %cst_49 = arith.constant dense<0.000000e+00> : vector<16x128xf32>
    %47 = tpu.matmul %40, %46, %cst_49 {dimension_numbers = #tpu.dot_dimension_numbers<[1], [0], [0], [1], [0, 0, 1, 1], [], []>} : vector<16x128xbf16>, vector<128x128xbf16>, vector<16x128xf32> -> vector<16x128xf32>
    %48 = arith.addf %44, %47 : vector<16x128xf32>
    %c1_i32 = arith.constant 1 : i32
    %49 = arith.addi %arg1, %c1_i32 : i32
    %c0_50 = arith.constant 0 : index
    %50 = arith.index_cast %49 : i32 to index
    %c0_51 = arith.constant 0 : index
    %c0_52 = arith.constant 0 : index
    %51 = vector.load %arg2[%c0_50, %50, %c0_51, %c0_52] : memref<1x18x18x128xbf16, #tpu.memory_space<vmem>>, vector<1x1x16x128xbf16>
    %52 = vector.shape_cast %51 : vector<1x1x16x128xbf16> to vector<16x128xbf16>
    %c1_i32_53 = arith.constant 1 : i32
    %53 = arith.addi %arg1, %c1_i32_53 : i32
    %c0_54 = arith.constant 0 : index
    %54 = arith.index_cast %53 : i32 to index
    %c0_55 = arith.constant 0 : index
    %c0_56 = arith.constant 0 : index
    %55 = vector.load %arg3[%c0_54, %54, %c0_55, %c0_56] : memref<1x18x18x128xbf16, #tpu.memory_space<vmem>>, vector<1x1x16x128xbf16>
    %56 = vector.shape_cast %55 : vector<1x1x16x128xbf16> to vector<16x128xbf16>
    %c1_57 = arith.constant 1 : index
    %c0_58 = arith.constant 0 : index
    %c0_59 = arith.constant 0 : index
    %c0_60 = arith.constant 0 : index
    %57 = vector.load %arg4[%c1_57, %c0_58, %c0_59, %c0_60] : memref<3x3x128x128xbf16, #tpu.memory_space<vmem>>, vector<1x1x128x128xbf16>
    %58 = vector.shape_cast %57 : vector<1x1x128x128xbf16> to vector<128x128xbf16>
    %cst_61 = arith.constant dense<0.000000e+00> : vector<16x128xf32>
    %59 = tpu.matmul %52, %58, %cst_61 {dimension_numbers = #tpu.dot_dimension_numbers<[1], [0], [0], [1], [0, 0, 1, 1], [], []>} : vector<16x128xbf16>, vector<128x128xbf16>, vector<16x128xf32> -> vector<16x128xf32>
    %60 = arith.addf %48, %59 : vector<16x128xf32>
    %c1_62 = arith.constant 1 : index
    %c0_63 = arith.constant 0 : index
    %c0_64 = arith.constant 0 : index
    %c0_65 = arith.constant 0 : index
    %61 = vector.load %arg5[%c1_62, %c0_63, %c0_64, %c0_65] : memref<3x3x128x128xbf16, #tpu.memory_space<vmem>>, vector<1x1x128x128xbf16>
    %62 = vector.shape_cast %61 : vector<1x1x128x128xbf16> to vector<128x128xbf16>
    %cst_66 = arith.constant dense<0.000000e+00> : vector<16x128xf32>
    %63 = tpu.matmul %56, %62, %cst_66 {dimension_numbers = #tpu.dot_dimension_numbers<[1], [0], [0], [1], [0, 0, 1, 1], [], []>} : vector<16x128xbf16>, vector<128x128xbf16>, vector<16x128xf32> -> vector<16x128xf32>
    %64 = arith.addf %60, %63 : vector<16x128xf32>
    %c1_i32_67 = arith.constant 1 : i32
    %65 = arith.addi %arg1, %c1_i32_67 : i32
    %c0_68 = arith.constant 0 : index
    %66 = arith.index_cast %65 : i32 to index
    %c1_69 = arith.constant 1 : index
    %c0_70 = arith.constant 0 : index
    %67 = vector.load %arg2[%c0_68, %66, %c1_69, %c0_70] : memref<1x18x18x128xbf16, #tpu.memory_space<vmem>>, vector<1x1x16x128xbf16>
    %68 = vector.shape_cast %67 : vector<1x1x16x128xbf16> to vector<16x128xbf16>
    %c1_i32_71 = arith.constant 1 : i32
    %69 = arith.addi %arg1, %c1_i32_71 : i32
    %c0_72 = arith.constant 0 : index
    %70 = arith.index_cast %69 : i32 to index
    %c1_73 = arith.constant 1 : index
    %c0_74 = arith.constant 0 : index
    %71 = vector.load %arg3[%c0_72, %70, %c1_73, %c0_74] : memref<1x18x18x128xbf16, #tpu.memory_space<vmem>>, vector<1x1x16x128xbf16>
    %72 = vector.shape_cast %71 : vector<1x1x16x128xbf16> to vector<16x128xbf16>
    %c1_75 = arith.constant 1 : index
    %c1_76 = arith.constant 1 : index
    %c0_77 = arith.constant 0 : index
    %c0_78 = arith.constant 0 : index
    %73 = vector.load %arg4[%c1_75, %c1_76, %c0_77, %c0_78] : memref<3x3x128x128xbf16, #tpu.memory_space<vmem>>, vector<1x1x128x128xbf16>
    %74 = vector.shape_cast %73 : vector<1x1x128x128xbf16> to vector<128x128xbf16>
    %cst_79 = arith.constant dense<0.000000e+00> : vector<16x128xf32>
    %75 = tpu.matmul %68, %74, %cst_79 {dimension_numbers = #tpu.dot_dimension_numbers<[1], [0], [0], [1], [0, 0, 1, 1], [], []>} : vector<16x128xbf16>, vector<128x128xbf16>, vector<16x128xf32> -> vector<16x128xf32>
    %76 = arith.addf %64, %75 : vector<16x128xf32>
    %c1_80 = arith.constant 1 : index
    %c1_81 = arith.constant 1 : index
    %c0_82 = arith.constant 0 : index
    %c0_83 = arith.constant 0 : index
    %77 = vector.load %arg5[%c1_80, %c1_81, %c0_82, %c0_83] : memref<3x3x128x128xbf16, #tpu.memory_space<vmem>>, vector<1x1x128x128xbf16>
    %78 = vector.shape_cast %77 : vector<1x1x128x128xbf16> to vector<128x128xbf16>
    %cst_84 = arith.constant dense<0.000000e+00> : vector<16x128xf32>
    %79 = tpu.matmul %72, %78, %cst_84 {dimension_numbers = #tpu.dot_dimension_numbers<[1], [0], [0], [1], [0, 0, 1, 1], [], []>} : vector<16x128xbf16>, vector<128x128xbf16>, vector<16x128xf32> -> vector<16x128xf32>
    %80 = arith.addf %76, %79 : vector<16x128xf32>
    %c1_i32_85 = arith.constant 1 : i32
    %81 = arith.addi %arg1, %c1_i32_85 : i32
    %c0_86 = arith.constant 0 : index
    %82 = arith.index_cast %81 : i32 to index
    %c2_87 = arith.constant 2 : index
    %c0_88 = arith.constant 0 : index
    %83 = vector.load %arg2[%c0_86, %82, %c2_87, %c0_88] : memref<1x18x18x128xbf16, #tpu.memory_space<vmem>>, vector<1x1x16x128xbf16>
    %84 = vector.shape_cast %83 : vector<1x1x16x128xbf16> to vector<16x128xbf16>
    %c1_i32_89 = arith.constant 1 : i32
    %85 = arith.addi %arg1, %c1_i32_89 : i32
    %c0_90 = arith.constant 0 : index
    %86 = arith.index_cast %85 : i32 to index
    %c2_91 = arith.constant 2 : index
    %c0_92 = arith.constant 0 : index
    %87 = vector.load %arg3[%c0_90, %86, %c2_91, %c0_92] : memref<1x18x18x128xbf16, #tpu.memory_space<vmem>>, vector<1x1x16x128xbf16>
    %88 = vector.shape_cast %87 : vector<1x1x16x128xbf16> to vector<16x128xbf16>
    %c1_93 = arith.constant 1 : index
    %c2_94 = arith.constant 2 : index
    %c0_95 = arith.constant 0 : index
    %c0_96 = arith.constant 0 : index
    %89 = vector.load %arg4[%c1_93, %c2_94, %c0_95, %c0_96] : memref<3x3x128x128xbf16, #tpu.memory_space<vmem>>, vector<1x1x128x128xbf16>
    %90 = vector.shape_cast %89 : vector<1x1x128x128xbf16> to vector<128x128xbf16>
    %cst_97 = arith.constant dense<0.000000e+00> : vector<16x128xf32>
    %91 = tpu.matmul %84, %90, %cst_97 {dimension_numbers = #tpu.dot_dimension_numbers<[1], [0], [0], [1], [0, 0, 1, 1], [], []>} : vector<16x128xbf16>, vector<128x128xbf16>, vector<16x128xf32> -> vector<16x128xf32>
    %92 = arith.addf %80, %91 : vector<16x128xf32>
    %c1_98 = arith.constant 1 : index
    %c2_99 = arith.constant 2 : index
    %c0_100 = arith.constant 0 : index
    %c0_101 = arith.constant 0 : index
    %93 = vector.load %arg5[%c1_98, %c2_99, %c0_100, %c0_101] : memref<3x3x128x128xbf16, #tpu.memory_space<vmem>>, vector<1x1x128x128xbf16>
    %94 = vector.shape_cast %93 : vector<1x1x128x128xbf16> to vector<128x128xbf16>
    %cst_102 = arith.constant dense<0.000000e+00> : vector<16x128xf32>
    %95 = tpu.matmul %88, %94, %cst_102 {dimension_numbers = #tpu.dot_dimension_numbers<[1], [0], [0], [1], [0, 0, 1, 1], [], []>} : vector<16x128xbf16>, vector<128x128xbf16>, vector<16x128xf32> -> vector<16x128xf32>
    %96 = arith.addf %92, %95 : vector<16x128xf32>
    %c2_i32 = arith.constant 2 : i32
    %97 = arith.addi %arg1, %c2_i32 : i32
    %c0_103 = arith.constant 0 : index
    %98 = arith.index_cast %97 : i32 to index
    %c0_104 = arith.constant 0 : index
    %c0_105 = arith.constant 0 : index
    %99 = vector.load %arg2[%c0_103, %98, %c0_104, %c0_105] : memref<1x18x18x128xbf16, #tpu.memory_space<vmem>>, vector<1x1x16x128xbf16>
    %100 = vector.shape_cast %99 : vector<1x1x16x128xbf16> to vector<16x128xbf16>
    %c2_i32_106 = arith.constant 2 : i32
    %101 = arith.addi %arg1, %c2_i32_106 : i32
    %c0_107 = arith.constant 0 : index
    %102 = arith.index_cast %101 : i32 to index
    %c0_108 = arith.constant 0 : index
    %c0_109 = arith.constant 0 : index
    %103 = vector.load %arg3[%c0_107, %102, %c0_108, %c0_109] : memref<1x18x18x128xbf16, #tpu.memory_space<vmem>>, vector<1x1x16x128xbf16>
    %104 = vector.shape_cast %103 : vector<1x1x16x128xbf16> to vector<16x128xbf16>
    %c2_110 = arith.constant 2 : index
    %c0_111 = arith.constant 0 : index
    %c0_112 = arith.constant 0 : index
    %c0_113 = arith.constant 0 : index
    %105 = vector.load %arg4[%c2_110, %c0_111, %c0_112, %c0_113] : memref<3x3x128x128xbf16, #tpu.memory_space<vmem>>, vector<1x1x128x128xbf16>
    %106 = vector.shape_cast %105 : vector<1x1x128x128xbf16> to vector<128x128xbf16>
    %cst_114 = arith.constant dense<0.000000e+00> : vector<16x128xf32>
    %107 = tpu.matmul %100, %106, %cst_114 {dimension_numbers = #tpu.dot_dimension_numbers<[1], [0], [0], [1], [0, 0, 1, 1], [], []>} : vector<16x128xbf16>, vector<128x128xbf16>, vector<16x128xf32> -> vector<16x128xf32>
    %108 = arith.addf %96, %107 : vector<16x128xf32>
    %c2_115 = arith.constant 2 : index
    %c0_116 = arith.constant 0 : index
    %c0_117 = arith.constant 0 : index
    %c0_118 = arith.constant 0 : index
    %109 = vector.load %arg5[%c2_115, %c0_116, %c0_117, %c0_118] : memref<3x3x128x128xbf16, #tpu.memory_space<vmem>>, vector<1x1x128x128xbf16>
    %110 = vector.shape_cast %109 : vector<1x1x128x128xbf16> to vector<128x128xbf16>
    %cst_119 = arith.constant dense<0.000000e+00> : vector<16x128xf32>
    %111 = tpu.matmul %104, %110, %cst_119 {dimension_numbers = #tpu.dot_dimension_numbers<[1], [0], [0], [1], [0, 0, 1, 1], [], []>} : vector<16x128xbf16>, vector<128x128xbf16>, vector<16x128xf32> -> vector<16x128xf32>
    %112 = arith.addf %108, %111 : vector<16x128xf32>
    %c2_i32_120 = arith.constant 2 : i32
    %113 = arith.addi %arg1, %c2_i32_120 : i32
    %c0_121 = arith.constant 0 : index
    %114 = arith.index_cast %113 : i32 to index
    %c1_122 = arith.constant 1 : index
    %c0_123 = arith.constant 0 : index
    %115 = vector.load %arg2[%c0_121, %114, %c1_122, %c0_123] : memref<1x18x18x128xbf16, #tpu.memory_space<vmem>>, vector<1x1x16x128xbf16>
    %116 = vector.shape_cast %115 : vector<1x1x16x128xbf16> to vector<16x128xbf16>
    %c2_i32_124 = arith.constant 2 : i32
    %117 = arith.addi %arg1, %c2_i32_124 : i32
    %c0_125 = arith.constant 0 : index
    %118 = arith.index_cast %117 : i32 to index
    %c1_126 = arith.constant 1 : index
    %c0_127 = arith.constant 0 : index
    %119 = vector.load %arg3[%c0_125, %118, %c1_126, %c0_127] : memref<1x18x18x128xbf16, #tpu.memory_space<vmem>>, vector<1x1x16x128xbf16>
    %120 = vector.shape_cast %119 : vector<1x1x16x128xbf16> to vector<16x128xbf16>
    %c2_128 = arith.constant 2 : index
    %c1_129 = arith.constant 1 : index
    %c0_130 = arith.constant 0 : index
    %c0_131 = arith.constant 0 : index
    %121 = vector.load %arg4[%c2_128, %c1_129, %c0_130, %c0_131] : memref<3x3x128x128xbf16, #tpu.memory_space<vmem>>, vector<1x1x128x128xbf16>
    %122 = vector.shape_cast %121 : vector<1x1x128x128xbf16> to vector<128x128xbf16>
    %cst_132 = arith.constant dense<0.000000e+00> : vector<16x128xf32>
    %123 = tpu.matmul %116, %122, %cst_132 {dimension_numbers = #tpu.dot_dimension_numbers<[1], [0], [0], [1], [0, 0, 1, 1], [], []>} : vector<16x128xbf16>, vector<128x128xbf16>, vector<16x128xf32> -> vector<16x128xf32>
    %124 = arith.addf %112, %123 : vector<16x128xf32>
    %c2_133 = arith.constant 2 : index
    %c1_134 = arith.constant 1 : index
    %c0_135 = arith.constant 0 : index
    %c0_136 = arith.constant 0 : index
    %125 = vector.load %arg5[%c2_133, %c1_134, %c0_135, %c0_136] : memref<3x3x128x128xbf16, #tpu.memory_space<vmem>>, vector<1x1x128x128xbf16>
    %126 = vector.shape_cast %125 : vector<1x1x128x128xbf16> to vector<128x128xbf16>
    %cst_137 = arith.constant dense<0.000000e+00> : vector<16x128xf32>
    %127 = tpu.matmul %120, %126, %cst_137 {dimension_numbers = #tpu.dot_dimension_numbers<[1], [0], [0], [1], [0, 0, 1, 1], [], []>} : vector<16x128xbf16>, vector<128x128xbf16>, vector<16x128xf32> -> vector<16x128xf32>
    %128 = arith.addf %124, %127 : vector<16x128xf32>
    %c2_i32_138 = arith.constant 2 : i32
    %129 = arith.addi %arg1, %c2_i32_138 : i32
    %c0_139 = arith.constant 0 : index
    %130 = arith.index_cast %129 : i32 to index
    %c2_140 = arith.constant 2 : index
    %c0_141 = arith.constant 0 : index
    %131 = vector.load %arg2[%c0_139, %130, %c2_140, %c0_141] : memref<1x18x18x128xbf16, #tpu.memory_space<vmem>>, vector<1x1x16x128xbf16>
    %132 = vector.shape_cast %131 : vector<1x1x16x128xbf16> to vector<16x128xbf16>
    %c2_i32_142 = arith.constant 2 : i32
    %133 = arith.addi %arg1, %c2_i32_142 : i32
    %c0_143 = arith.constant 0 : index
    %134 = arith.index_cast %133 : i32 to index
    %c2_144 = arith.constant 2 : index
    %c0_145 = arith.constant 0 : index
    %135 = vector.load %arg3[%c0_143, %134, %c2_144, %c0_145] : memref<1x18x18x128xbf16, #tpu.memory_space<vmem>>, vector<1x1x16x128xbf16>
    %136 = vector.shape_cast %135 : vector<1x1x16x128xbf16> to vector<16x128xbf16>
    %c2_146 = arith.constant 2 : index
    %c2_147 = arith.constant 2 : index
    %c0_148 = arith.constant 0 : index
    %c0_149 = arith.constant 0 : index
    %137 = vector.load %arg4[%c2_146, %c2_147, %c0_148, %c0_149] : memref<3x3x128x128xbf16, #tpu.memory_space<vmem>>, vector<1x1x128x128xbf16>
    %138 = vector.shape_cast %137 : vector<1x1x128x128xbf16> to vector<128x128xbf16>
    %cst_150 = arith.constant dense<0.000000e+00> : vector<16x128xf32>
    %139 = tpu.matmul %132, %138, %cst_150 {dimension_numbers = #tpu.dot_dimension_numbers<[1], [0], [0], [1], [0, 0, 1, 1], [], []>} : vector<16x128xbf16>, vector<128x128xbf16>, vector<16x128xf32> -> vector<16x128xf32>
    %140 = arith.addf %128, %139 : vector<16x128xf32>
    %c2_151 = arith.constant 2 : index
    %c2_152 = arith.constant 2 : index
    %c0_153 = arith.constant 0 : index
    %c0_154 = arith.constant 0 : index
    %141 = vector.load %arg5[%c2_151, %c2_152, %c0_153, %c0_154] : memref<3x3x128x128xbf16, #tpu.memory_space<vmem>>, vector<1x1x128x128xbf16>
    %142 = vector.shape_cast %141 : vector<1x1x128x128xbf16> to vector<128x128xbf16>
    %cst_155 = arith.constant dense<0.000000e+00> : vector<16x128xf32>
    %143 = tpu.matmul %136, %142, %cst_155 {dimension_numbers = #tpu.dot_dimension_numbers<[1], [0], [0], [1], [0, 0, 1, 1], [], []>} : vector<16x128xbf16>, vector<128x128xbf16>, vector<16x128xf32> -> vector<16x128xf32>
    %144 = arith.addf %140, %143 : vector<16x128xf32>
    %145 = arith.truncf %144 : vector<16x128xf32> to vector<16x128xbf16>
    %146 = vector.shape_cast %145 : vector<16x128xbf16> to vector<1x1x16x128xbf16>
    %c0_156 = arith.constant 0 : index
    %c0_157 = arith.constant 0 : index
    %c0_158 = arith.constant 0 : index
    %c0_159 = arith.constant 0 : index
    %147 = vector.load %arg6[%c0_156, %c0_157, %c0_158, %c0_159] : memref<1x1x16x128xbf16, #tpu.memory_space<vmem>>, vector<1x1x16x128xbf16>
    tpu.vector_store %arg6[%c0_156, %c0_157, %c0_158, %c0_159], %146 {strides = array<i32>} : memref<1x1x16x128xbf16, #tpu.memory_space<vmem>>, vector<1x1x16x128xbf16>,
    %cst_160 = arith.constant dense<0.000000e+00> : vector<128xf32>
    %148 = vector.multi_reduction <add>, %144, %cst_160 [0] : vector<16x128xf32> to vector<128xf32>
    %149 = vector.shape_cast %148 : vector<128xf32> to vector<1x1x1x128xf32>
    %c0_161 = arith.constant 0 : index
    %c0_162 = arith.constant 0 : index
    %c0_163 = arith.constant 0 : index
    %c0_164 = arith.constant 0 : index
    %150 = vector.load %arg7[%c0_161, %c0_162, %c0_163, %c0_164] : memref<1x1x1x128xf32, #tpu.memory_space<vmem>>, vector<1x1x1x128xf32>
    tpu.vector_store %arg7[%c0_161, %c0_162, %c0_163, %c0_164], %149 {strides = array<i32>} : memref<1x1x1x128xf32, #tpu.memory_space<vmem>>, vector<1x1x1x128xf32>,
    %151 = arith.mulf %144, %144 : vector<16x128xf32>
    %cst_165 = arith.constant dense<0.000000e+00> : vector<128xf32>
    %152 = vector.multi_reduction <add>, %151, %cst_165 [0] : vector<16x128xf32> to vector<128xf32>
    %153 = vector.shape_cast %152 : vector<128xf32> to vector<1x1x1x128xf32>
    %c0_166 = arith.constant 0 : index
    %c0_167 = arith.constant 0 : index
    %c0_168 = arith.constant 0 : index
    %c0_169 = arith.constant 0 : index
    %154 = vector.load %arg8[%c0_166, %c0_167, %c0_168, %c0_169] : memref<1x1x1x128xf32, #tpu.memory_space<vmem>>, vector<1x1x1x128xf32>
    tpu.vector_store %arg8[%c0_166, %c0_167, %c0_168, %c0_169], %153 {strides = array<i32>} : memref<1x1x1x128xf32, #tpu.memory_space<vmem>>, vector<1x1x1x128xf32>,
    return
  }
  func.func @transform_0(%arg0: i32, %arg1: i32) -> (i32, i32, i32, i32) {
    %c0_i32 = arith.constant 0 : i32
    %c0_i32_0 = arith.constant 0 : i32
    %c0_i32_1 = arith.constant 0 : i32
    %c0_i32_2 = arith.constant 0 : i32
    return %arg0, %c0_i32, %c0_i32_0, %c0_i32_1 : i32, i32, i32, i32
  }
  func.func @transform_1(%arg0: i32, %arg1: i32) -> (i32, i32, i32, i32) {
    %c0_i32 = arith.constant 0 : i32
    %c0_i32_0 = arith.constant 0 : i32
    %c0_i32_1 = arith.constant 0 : i32
    %c0_i32_2 = arith.constant 0 : i32
    return %arg0, %c0_i32, %c0_i32_0, %c0_i32_1 : i32, i32, i32, i32
  }
  func.func @transform_2(%arg0: i32, %arg1: i32) -> (i32, i32, i32, i32) {
    %c0_i32 = arith.constant 0 : i32
    %c0_i32_0 = arith.constant 0 : i32
    %c0_i32_1 = arith.constant 0 : i32
    %c0_i32_2 = arith.constant 0 : i32
    %c0_i32_3 = arith.constant 0 : i32
    return %c0_i32, %c0_i32_0, %c0_i32_1, %c0_i32_2 : i32, i32, i32, i32
  }
  func.func @transform_3(%arg0: i32, %arg1: i32) -> (i32, i32, i32, i32) {
    %c0_i32 = arith.constant 0 : i32
    %c0_i32_0 = arith.constant 0 : i32
    %c0_i32_1 = arith.constant 0 : i32
    %c0_i32_2 = arith.constant 0 : i32
    %c0_i32_3 = arith.constant 0 : i32
    return %c0_i32, %c0_i32_0, %c0_i32_1, %c0_i32_2 : i32, i32, i32, i32
  }
  func.func @transform_4(%arg0: i32, %arg1: i32) -> (i32, i32, i32, i32) {
    %c0_i32 = arith.constant 0 : i32
    %c0_i32_0 = arith.constant 0 : i32
    %c0_i32_1 = arith.constant 0 : i32
    return %arg0, %arg1, %c0_i32, %c0_i32_0 : i32, i32, i32, i32
  }
  func.func @transform_5(%arg0: i32, %arg1: i32) -> (i32, i32, i32, i32) {
    %c0_i32 = arith.constant 0 : i32
    %c0_i32_0 = arith.constant 0 : i32
    %c0_i32_1 = arith.constant 0 : i32
    return %arg0, %arg1, %c0_i32, %c0_i32_0 : i32, i32, i32, i32
  }
  func.func @transform_6(%arg0: i32, %arg1: i32) -> (i32, i32, i32, i32) {
    %c0_i32 = arith.constant 0 : i32
    %c0_i32_0 = arith.constant 0 : i32
    %c0_i32_1 = arith.constant 0 : i32
    return %arg0, %arg1, %c0_i32, %c0_i32_0 : i32, i32, i32, i32
  }
}

module attributes {stable_mosaic.version = 11 : i64} {
  func.func @kernel(%arg0: i32, %arg1: i32, %arg2: memref<1x18x18x128xbf16, #tpu.memory_space<vmem>>, %arg3: memref<3x3x128x128xbf16, #tpu.memory_space<vmem>>, %arg4: memref<1x128xf32, #tpu.memory_space<vmem>>, %arg5: memref<1x128xf32, #tpu.memory_space<vmem>>, %arg6: memref<1x1x16x128xbf16, #tpu.memory_space<vmem>>, %arg7: memref<1x1x1x128xf32, #tpu.memory_space<vmem>>, %arg8: memref<1x1x1x128xf32, #tpu.memory_space<vmem>>) attributes {dimension_semantics = [#tpu.dimension_semantics<parallel>, #tpu.dimension_semantics<parallel>], iteration_bounds = array<i64: 2, 16>, scalar_prefetch = 0 : i64, scratch_operands = 0 : i64, tpu.core_type = #tpu.core_type<tc>, window_params = [{transform_indices = @transform_0, window_bounds = array<i64: 1, 18, 18, 128>}, {pipeline_mode = #tpu.pipeline_mode<synchronous>, transform_indices = @transform_1, window_bounds = array<i64: 3, 3, 128, 128>}, {pipeline_mode = #tpu.pipeline_mode<synchronous>, transform_indices = @transform_2, window_bounds = array<i64: 1, 128>}, {pipeline_mode = #tpu.pipeline_mode<synchronous>, transform_indices = @transform_3, window_bounds = array<i64: 1, 128>}, {transform_indices = @transform_4, window_bounds = array<i64: 1, 1, 16, 128>}, {transform_indices = @transform_5, window_bounds = array<i64: 1, 1, 1, 128>}, {transform_indices = @transform_6, window_bounds = array<i64: 1, 1, 1, 128>}]} {
    %c0 = arith.constant 0 : index
    %c0_0 = arith.constant 0 : index
    %0 = vector.load %arg4[%c0, %c0_0] : memref<1x128xf32, #tpu.memory_space<vmem>>, vector<1x128xf32>
    %c0_1 = arith.constant 0 : index
    %c0_2 = arith.constant 0 : index
    %1 = vector.load %arg5[%c0_1, %c0_2] : memref<1x128xf32, #tpu.memory_space<vmem>>, vector<1x128xf32>
    %2 = tpu.iota {dimensions = array<i32: 0>} : vector<16x128xi32>
    %c1_i32 = arith.constant 1 : i32
    %3 = vector.broadcast %c1_i32 : i32 to vector<16x128xi32>
    %4 = arith.cmpi sge, %2, %3 : vector<16x128xi32>
    %c0_i32 = arith.constant 0 : i32
    %5 = vector.broadcast %c0_i32 : i32 to vector<16x128xi32>
    %6 = arith.cmpi sge, %2, %5 : vector<16x128xi32>
    %c14_i32 = arith.constant 14 : i32
    %7 = vector.broadcast %c14_i32 : i32 to vector<16x128xi32>
    %8 = arith.cmpi sle, %2, %7 : vector<16x128xi32>
    %cst = arith.constant 0.000000e+00 : f32
    %9 = vector.broadcast %cst : f32 to vector<16x128xf32>
    %c0_i32_3 = arith.constant 0 : i32
    %10 = arith.addi %arg1, %c0_i32_3 : i32
    %c1_i32_4 = arith.constant 1 : i32
    %11 = arith.cmpi sge, %10, %c1_i32_4 : i32
    %c0_i32_5 = arith.constant 0 : i32
    %12 = arith.addi %arg1, %c0_i32_5 : i32
    %c16_i32 = arith.constant 16 : i32
    %13 = arith.cmpi sle, %12, %c16_i32 : i32
    %14 = arith.andi %11, %13 : i1
    %c0_i32_6 = arith.constant 0 : i32
    %15 = arith.addi %arg1, %c0_i32_6 : i32
    %c0_7 = arith.constant 0 : index
    %16 = arith.index_cast %15 : i32 to index
    %c0_8 = arith.constant 0 : index
    %c0_9 = arith.constant 0 : index
    %17 = vector.load %arg2[%c0_7, %16, %c0_8, %c0_9] : memref<1x18x18x128xbf16, #tpu.memory_space<vmem>>, vector<1x1x16x128xbf16>
    %18 = vector.shape_cast %17 : vector<1x1x16x128xbf16> to vector<16x128xbf16>
    %19 = arith.extf %18 : vector<16x128xbf16> to vector<16x128xf32>
    %20 = vector.broadcast %0 : vector<1x128xf32> to vector<16x128xf32>
    %21 = arith.mulf %19, %20 : vector<16x128xf32>
    %22 = vector.broadcast %1 : vector<1x128xf32> to vector<16x128xf32>
    %23 = arith.addf %21, %22 : vector<16x128xf32>
    %cst_10 = arith.constant 0.000000e+00 : f32
    %24 = vector.broadcast %cst_10 : f32 to vector<16x128xf32>
    %25 = arith.maximumf %23, %24 : vector<16x128xf32>
    %26 = vector.broadcast %14 : i1 to vector<16x128xi1>
    %27 = arith.andi %4, %26 : vector<16x128xi1>
    %cst_11 = arith.constant 0.000000e+00 : f32
    %28 = vector.broadcast %cst_11 : f32 to vector<16x128xf32>
    %29 = arith.select %27, %25, %28 : vector<16x128xi1>, vector<16x128xf32>
    %30 = arith.truncf %29 : vector<16x128xf32> to vector<16x128xbf16>
    %c0_12 = arith.constant 0 : index
    %c0_13 = arith.constant 0 : index
    %c0_14 = arith.constant 0 : index
    %c0_15 = arith.constant 0 : index
    %31 = vector.load %arg3[%c0_12, %c0_13, %c0_14, %c0_15] : memref<3x3x128x128xbf16, #tpu.memory_space<vmem>>, vector<1x1x128x128xbf16>
    %32 = vector.shape_cast %31 : vector<1x1x128x128xbf16> to vector<128x128xbf16>
    %cst_16 = arith.constant dense<0.000000e+00> : vector<16x128xf32>
    %33 = tpu.matmul %30, %32, %cst_16 {dimension_numbers = #tpu.dot_dimension_numbers<[1], [0], [0], [1], [0, 0, 1, 1], [], []>} : vector<16x128xbf16>, vector<128x128xbf16>, vector<16x128xf32> -> vector<16x128xf32>
    %34 = arith.addf %9, %33 : vector<16x128xf32>
    %c0_i32_17 = arith.constant 0 : i32
    %35 = arith.addi %arg1, %c0_i32_17 : i32
    %c0_18 = arith.constant 0 : index
    %36 = arith.index_cast %35 : i32 to index
    %c1 = arith.constant 1 : index
    %c0_19 = arith.constant 0 : index
    %37 = vector.load %arg2[%c0_18, %36, %c1, %c0_19] : memref<1x18x18x128xbf16, #tpu.memory_space<vmem>>, vector<1x1x16x128xbf16>
    %38 = vector.shape_cast %37 : vector<1x1x16x128xbf16> to vector<16x128xbf16>
    %39 = arith.extf %38 : vector<16x128xbf16> to vector<16x128xf32>
    %40 = vector.broadcast %0 : vector<1x128xf32> to vector<16x128xf32>
    %41 = arith.mulf %39, %40 : vector<16x128xf32>
    %42 = vector.broadcast %1 : vector<1x128xf32> to vector<16x128xf32>
    %43 = arith.addf %41, %42 : vector<16x128xf32>
    %cst_20 = arith.constant 0.000000e+00 : f32
    %44 = vector.broadcast %cst_20 : f32 to vector<16x128xf32>
    %45 = arith.maximumf %43, %44 : vector<16x128xf32>
    %46 = vector.broadcast %14 : i1 to vector<16x128xi1>
    %47 = arith.andi %6, %46 : vector<16x128xi1>
    %cst_21 = arith.constant 0.000000e+00 : f32
    %48 = vector.broadcast %cst_21 : f32 to vector<16x128xf32>
    %49 = arith.select %47, %45, %48 : vector<16x128xi1>, vector<16x128xf32>
    %50 = arith.truncf %49 : vector<16x128xf32> to vector<16x128xbf16>
    %c0_22 = arith.constant 0 : index
    %c1_23 = arith.constant 1 : index
    %c0_24 = arith.constant 0 : index
    %c0_25 = arith.constant 0 : index
    %51 = vector.load %arg3[%c0_22, %c1_23, %c0_24, %c0_25] : memref<3x3x128x128xbf16, #tpu.memory_space<vmem>>, vector<1x1x128x128xbf16>
    %52 = vector.shape_cast %51 : vector<1x1x128x128xbf16> to vector<128x128xbf16>
    %cst_26 = arith.constant dense<0.000000e+00> : vector<16x128xf32>
    %53 = tpu.matmul %50, %52, %cst_26 {dimension_numbers = #tpu.dot_dimension_numbers<[1], [0], [0], [1], [0, 0, 1, 1], [], []>} : vector<16x128xbf16>, vector<128x128xbf16>, vector<16x128xf32> -> vector<16x128xf32>
    %54 = arith.addf %34, %53 : vector<16x128xf32>
    %c0_i32_27 = arith.constant 0 : i32
    %55 = arith.addi %arg1, %c0_i32_27 : i32
    %c0_28 = arith.constant 0 : index
    %56 = arith.index_cast %55 : i32 to index
    %c2 = arith.constant 2 : index
    %c0_29 = arith.constant 0 : index
    %57 = vector.load %arg2[%c0_28, %56, %c2, %c0_29] : memref<1x18x18x128xbf16, #tpu.memory_space<vmem>>, vector<1x1x16x128xbf16>
    %58 = vector.shape_cast %57 : vector<1x1x16x128xbf16> to vector<16x128xbf16>
    %59 = arith.extf %58 : vector<16x128xbf16> to vector<16x128xf32>
    %60 = vector.broadcast %0 : vector<1x128xf32> to vector<16x128xf32>
    %61 = arith.mulf %59, %60 : vector<16x128xf32>
    %62 = vector.broadcast %1 : vector<1x128xf32> to vector<16x128xf32>
    %63 = arith.addf %61, %62 : vector<16x128xf32>
    %cst_30 = arith.constant 0.000000e+00 : f32
    %64 = vector.broadcast %cst_30 : f32 to vector<16x128xf32>
    %65 = arith.maximumf %63, %64 : vector<16x128xf32>
    %66 = vector.broadcast %14 : i1 to vector<16x128xi1>
    %67 = arith.andi %8, %66 : vector<16x128xi1>
    %cst_31 = arith.constant 0.000000e+00 : f32
    %68 = vector.broadcast %cst_31 : f32 to vector<16x128xf32>
    %69 = arith.select %67, %65, %68 : vector<16x128xi1>, vector<16x128xf32>
    %70 = arith.truncf %69 : vector<16x128xf32> to vector<16x128xbf16>
    %c0_32 = arith.constant 0 : index
    %c2_33 = arith.constant 2 : index
    %c0_34 = arith.constant 0 : index
    %c0_35 = arith.constant 0 : index
    %71 = vector.load %arg3[%c0_32, %c2_33, %c0_34, %c0_35] : memref<3x3x128x128xbf16, #tpu.memory_space<vmem>>, vector<1x1x128x128xbf16>
    %72 = vector.shape_cast %71 : vector<1x1x128x128xbf16> to vector<128x128xbf16>
    %cst_36 = arith.constant dense<0.000000e+00> : vector<16x128xf32>
    %73 = tpu.matmul %70, %72, %cst_36 {dimension_numbers = #tpu.dot_dimension_numbers<[1], [0], [0], [1], [0, 0, 1, 1], [], []>} : vector<16x128xbf16>, vector<128x128xbf16>, vector<16x128xf32> -> vector<16x128xf32>
    %74 = arith.addf %54, %73 : vector<16x128xf32>
    %c1_i32_37 = arith.constant 1 : i32
    %75 = arith.addi %arg1, %c1_i32_37 : i32
    %c1_i32_38 = arith.constant 1 : i32
    %76 = arith.cmpi sge, %75, %c1_i32_38 : i32
    %c1_i32_39 = arith.constant 1 : i32
    %77 = arith.addi %arg1, %c1_i32_39 : i32
    %c16_i32_40 = arith.constant 16 : i32
    %78 = arith.cmpi sle, %77, %c16_i32_40 : i32
    %79 = arith.andi %76, %78 : i1
    %c1_i32_41 = arith.constant 1 : i32
    %80 = arith.addi %arg1, %c1_i32_41 : i32
    %c0_42 = arith.constant 0 : index
    %81 = arith.index_cast %80 : i32 to index
    %c0_43 = arith.constant 0 : index
    %c0_44 = arith.constant 0 : index
    %82 = vector.load %arg2[%c0_42, %81, %c0_43, %c0_44] : memref<1x18x18x128xbf16, #tpu.memory_space<vmem>>, vector<1x1x16x128xbf16>
    %83 = vector.shape_cast %82 : vector<1x1x16x128xbf16> to vector<16x128xbf16>
    %84 = arith.extf %83 : vector<16x128xbf16> to vector<16x128xf32>
    %85 = vector.broadcast %0 : vector<1x128xf32> to vector<16x128xf32>
    %86 = arith.mulf %84, %85 : vector<16x128xf32>
    %87 = vector.broadcast %1 : vector<1x128xf32> to vector<16x128xf32>
    %88 = arith.addf %86, %87 : vector<16x128xf32>
    %cst_45 = arith.constant 0.000000e+00 : f32
    %89 = vector.broadcast %cst_45 : f32 to vector<16x128xf32>
    %90 = arith.maximumf %88, %89 : vector<16x128xf32>
    %91 = vector.broadcast %79 : i1 to vector<16x128xi1>
    %92 = arith.andi %4, %91 : vector<16x128xi1>
    %cst_46 = arith.constant 0.000000e+00 : f32
    %93 = vector.broadcast %cst_46 : f32 to vector<16x128xf32>
    %94 = arith.select %92, %90, %93 : vector<16x128xi1>, vector<16x128xf32>
    %95 = arith.truncf %94 : vector<16x128xf32> to vector<16x128xbf16>
    %c1_47 = arith.constant 1 : index
    %c0_48 = arith.constant 0 : index
    %c0_49 = arith.constant 0 : index
    %c0_50 = arith.constant 0 : index
    %96 = vector.load %arg3[%c1_47, %c0_48, %c0_49, %c0_50] : memref<3x3x128x128xbf16, #tpu.memory_space<vmem>>, vector<1x1x128x128xbf16>
    %97 = vector.shape_cast %96 : vector<1x1x128x128xbf16> to vector<128x128xbf16>
    %cst_51 = arith.constant dense<0.000000e+00> : vector<16x128xf32>
    %98 = tpu.matmul %95, %97, %cst_51 {dimension_numbers = #tpu.dot_dimension_numbers<[1], [0], [0], [1], [0, 0, 1, 1], [], []>} : vector<16x128xbf16>, vector<128x128xbf16>, vector<16x128xf32> -> vector<16x128xf32>
    %99 = arith.addf %74, %98 : vector<16x128xf32>
    %c1_i32_52 = arith.constant 1 : i32
    %100 = arith.addi %arg1, %c1_i32_52 : i32
    %c0_53 = arith.constant 0 : index
    %101 = arith.index_cast %100 : i32 to index
    %c1_54 = arith.constant 1 : index
    %c0_55 = arith.constant 0 : index
    %102 = vector.load %arg2[%c0_53, %101, %c1_54, %c0_55] : memref<1x18x18x128xbf16, #tpu.memory_space<vmem>>, vector<1x1x16x128xbf16>
    %103 = vector.shape_cast %102 : vector<1x1x16x128xbf16> to vector<16x128xbf16>
    %104 = arith.extf %103 : vector<16x128xbf16> to vector<16x128xf32>
    %105 = vector.broadcast %0 : vector<1x128xf32> to vector<16x128xf32>
    %106 = arith.mulf %104, %105 : vector<16x128xf32>
    %107 = vector.broadcast %1 : vector<1x128xf32> to vector<16x128xf32>
    %108 = arith.addf %106, %107 : vector<16x128xf32>
    %cst_56 = arith.constant 0.000000e+00 : f32
    %109 = vector.broadcast %cst_56 : f32 to vector<16x128xf32>
    %110 = arith.maximumf %108, %109 : vector<16x128xf32>
    %111 = vector.broadcast %79 : i1 to vector<16x128xi1>
    %112 = arith.andi %6, %111 : vector<16x128xi1>
    %cst_57 = arith.constant 0.000000e+00 : f32
    %113 = vector.broadcast %cst_57 : f32 to vector<16x128xf32>
    %114 = arith.select %112, %110, %113 : vector<16x128xi1>, vector<16x128xf32>
    %115 = arith.truncf %114 : vector<16x128xf32> to vector<16x128xbf16>
    %c1_58 = arith.constant 1 : index
    %c1_59 = arith.constant 1 : index
    %c0_60 = arith.constant 0 : index
    %c0_61 = arith.constant 0 : index
    %116 = vector.load %arg3[%c1_58, %c1_59, %c0_60, %c0_61] : memref<3x3x128x128xbf16, #tpu.memory_space<vmem>>, vector<1x1x128x128xbf16>
    %117 = vector.shape_cast %116 : vector<1x1x128x128xbf16> to vector<128x128xbf16>
    %cst_62 = arith.constant dense<0.000000e+00> : vector<16x128xf32>
    %118 = tpu.matmul %115, %117, %cst_62 {dimension_numbers = #tpu.dot_dimension_numbers<[1], [0], [0], [1], [0, 0, 1, 1], [], []>} : vector<16x128xbf16>, vector<128x128xbf16>, vector<16x128xf32> -> vector<16x128xf32>
    %119 = arith.addf %99, %118 : vector<16x128xf32>
    %c1_i32_63 = arith.constant 1 : i32
    %120 = arith.addi %arg1, %c1_i32_63 : i32
    %c0_64 = arith.constant 0 : index
    %121 = arith.index_cast %120 : i32 to index
    %c2_65 = arith.constant 2 : index
    %c0_66 = arith.constant 0 : index
    %122 = vector.load %arg2[%c0_64, %121, %c2_65, %c0_66] : memref<1x18x18x128xbf16, #tpu.memory_space<vmem>>, vector<1x1x16x128xbf16>
    %123 = vector.shape_cast %122 : vector<1x1x16x128xbf16> to vector<16x128xbf16>
    %124 = arith.extf %123 : vector<16x128xbf16> to vector<16x128xf32>
    %125 = vector.broadcast %0 : vector<1x128xf32> to vector<16x128xf32>
    %126 = arith.mulf %124, %125 : vector<16x128xf32>
    %127 = vector.broadcast %1 : vector<1x128xf32> to vector<16x128xf32>
    %128 = arith.addf %126, %127 : vector<16x128xf32>
    %cst_67 = arith.constant 0.000000e+00 : f32
    %129 = vector.broadcast %cst_67 : f32 to vector<16x128xf32>
    %130 = arith.maximumf %128, %129 : vector<16x128xf32>
    %131 = vector.broadcast %79 : i1 to vector<16x128xi1>
    %132 = arith.andi %8, %131 : vector<16x128xi1>
    %cst_68 = arith.constant 0.000000e+00 : f32
    %133 = vector.broadcast %cst_68 : f32 to vector<16x128xf32>
    %134 = arith.select %132, %130, %133 : vector<16x128xi1>, vector<16x128xf32>
    %135 = arith.truncf %134 : vector<16x128xf32> to vector<16x128xbf16>
    %c1_69 = arith.constant 1 : index
    %c2_70 = arith.constant 2 : index
    %c0_71 = arith.constant 0 : index
    %c0_72 = arith.constant 0 : index
    %136 = vector.load %arg3[%c1_69, %c2_70, %c0_71, %c0_72] : memref<3x3x128x128xbf16, #tpu.memory_space<vmem>>, vector<1x1x128x128xbf16>
    %137 = vector.shape_cast %136 : vector<1x1x128x128xbf16> to vector<128x128xbf16>
    %cst_73 = arith.constant dense<0.000000e+00> : vector<16x128xf32>
    %138 = tpu.matmul %135, %137, %cst_73 {dimension_numbers = #tpu.dot_dimension_numbers<[1], [0], [0], [1], [0, 0, 1, 1], [], []>} : vector<16x128xbf16>, vector<128x128xbf16>, vector<16x128xf32> -> vector<16x128xf32>
    %139 = arith.addf %119, %138 : vector<16x128xf32>
    %c2_i32 = arith.constant 2 : i32
    %140 = arith.addi %arg1, %c2_i32 : i32
    %c1_i32_74 = arith.constant 1 : i32
    %141 = arith.cmpi sge, %140, %c1_i32_74 : i32
    %c2_i32_75 = arith.constant 2 : i32
    %142 = arith.addi %arg1, %c2_i32_75 : i32
    %c16_i32_76 = arith.constant 16 : i32
    %143 = arith.cmpi sle, %142, %c16_i32_76 : i32
    %144 = arith.andi %141, %143 : i1
    %c2_i32_77 = arith.constant 2 : i32
    %145 = arith.addi %arg1, %c2_i32_77 : i32
    %c0_78 = arith.constant 0 : index
    %146 = arith.index_cast %145 : i32 to index
    %c0_79 = arith.constant 0 : index
    %c0_80 = arith.constant 0 : index
    %147 = vector.load %arg2[%c0_78, %146, %c0_79, %c0_80] : memref<1x18x18x128xbf16, #tpu.memory_space<vmem>>, vector<1x1x16x128xbf16>
    %148 = vector.shape_cast %147 : vector<1x1x16x128xbf16> to vector<16x128xbf16>
    %149 = arith.extf %148 : vector<16x128xbf16> to vector<16x128xf32>
    %150 = vector.broadcast %0 : vector<1x128xf32> to vector<16x128xf32>
    %151 = arith.mulf %149, %150 : vector<16x128xf32>
    %152 = vector.broadcast %1 : vector<1x128xf32> to vector<16x128xf32>
    %153 = arith.addf %151, %152 : vector<16x128xf32>
    %cst_81 = arith.constant 0.000000e+00 : f32
    %154 = vector.broadcast %cst_81 : f32 to vector<16x128xf32>
    %155 = arith.maximumf %153, %154 : vector<16x128xf32>
    %156 = vector.broadcast %144 : i1 to vector<16x128xi1>
    %157 = arith.andi %4, %156 : vector<16x128xi1>
    %cst_82 = arith.constant 0.000000e+00 : f32
    %158 = vector.broadcast %cst_82 : f32 to vector<16x128xf32>
    %159 = arith.select %157, %155, %158 : vector<16x128xi1>, vector<16x128xf32>
    %160 = arith.truncf %159 : vector<16x128xf32> to vector<16x128xbf16>
    %c2_83 = arith.constant 2 : index
    %c0_84 = arith.constant 0 : index
    %c0_85 = arith.constant 0 : index
    %c0_86 = arith.constant 0 : index
    %161 = vector.load %arg3[%c2_83, %c0_84, %c0_85, %c0_86] : memref<3x3x128x128xbf16, #tpu.memory_space<vmem>>, vector<1x1x128x128xbf16>
    %162 = vector.shape_cast %161 : vector<1x1x128x128xbf16> to vector<128x128xbf16>
    %cst_87 = arith.constant dense<0.000000e+00> : vector<16x128xf32>
    %163 = tpu.matmul %160, %162, %cst_87 {dimension_numbers = #tpu.dot_dimension_numbers<[1], [0], [0], [1], [0, 0, 1, 1], [], []>} : vector<16x128xbf16>, vector<128x128xbf16>, vector<16x128xf32> -> vector<16x128xf32>
    %164 = arith.addf %139, %163 : vector<16x128xf32>
    %c2_i32_88 = arith.constant 2 : i32
    %165 = arith.addi %arg1, %c2_i32_88 : i32
    %c0_89 = arith.constant 0 : index
    %166 = arith.index_cast %165 : i32 to index
    %c1_90 = arith.constant 1 : index
    %c0_91 = arith.constant 0 : index
    %167 = vector.load %arg2[%c0_89, %166, %c1_90, %c0_91] : memref<1x18x18x128xbf16, #tpu.memory_space<vmem>>, vector<1x1x16x128xbf16>
    %168 = vector.shape_cast %167 : vector<1x1x16x128xbf16> to vector<16x128xbf16>
    %169 = arith.extf %168 : vector<16x128xbf16> to vector<16x128xf32>
    %170 = vector.broadcast %0 : vector<1x128xf32> to vector<16x128xf32>
    %171 = arith.mulf %169, %170 : vector<16x128xf32>
    %172 = vector.broadcast %1 : vector<1x128xf32> to vector<16x128xf32>
    %173 = arith.addf %171, %172 : vector<16x128xf32>
    %cst_92 = arith.constant 0.000000e+00 : f32
    %174 = vector.broadcast %cst_92 : f32 to vector<16x128xf32>
    %175 = arith.maximumf %173, %174 : vector<16x128xf32>
    %176 = vector.broadcast %144 : i1 to vector<16x128xi1>
    %177 = arith.andi %6, %176 : vector<16x128xi1>
    %cst_93 = arith.constant 0.000000e+00 : f32
    %178 = vector.broadcast %cst_93 : f32 to vector<16x128xf32>
    %179 = arith.select %177, %175, %178 : vector<16x128xi1>, vector<16x128xf32>
    %180 = arith.truncf %179 : vector<16x128xf32> to vector<16x128xbf16>
    %c2_94 = arith.constant 2 : index
    %c1_95 = arith.constant 1 : index
    %c0_96 = arith.constant 0 : index
    %c0_97 = arith.constant 0 : index
    %181 = vector.load %arg3[%c2_94, %c1_95, %c0_96, %c0_97] : memref<3x3x128x128xbf16, #tpu.memory_space<vmem>>, vector<1x1x128x128xbf16>
    %182 = vector.shape_cast %181 : vector<1x1x128x128xbf16> to vector<128x128xbf16>
    %cst_98 = arith.constant dense<0.000000e+00> : vector<16x128xf32>
    %183 = tpu.matmul %180, %182, %cst_98 {dimension_numbers = #tpu.dot_dimension_numbers<[1], [0], [0], [1], [0, 0, 1, 1], [], []>} : vector<16x128xbf16>, vector<128x128xbf16>, vector<16x128xf32> -> vector<16x128xf32>
    %184 = arith.addf %164, %183 : vector<16x128xf32>
    %c2_i32_99 = arith.constant 2 : i32
    %185 = arith.addi %arg1, %c2_i32_99 : i32
    %c0_100 = arith.constant 0 : index
    %186 = arith.index_cast %185 : i32 to index
    %c2_101 = arith.constant 2 : index
    %c0_102 = arith.constant 0 : index
    %187 = vector.load %arg2[%c0_100, %186, %c2_101, %c0_102] : memref<1x18x18x128xbf16, #tpu.memory_space<vmem>>, vector<1x1x16x128xbf16>
    %188 = vector.shape_cast %187 : vector<1x1x16x128xbf16> to vector<16x128xbf16>
    %189 = arith.extf %188 : vector<16x128xbf16> to vector<16x128xf32>
    %190 = vector.broadcast %0 : vector<1x128xf32> to vector<16x128xf32>
    %191 = arith.mulf %189, %190 : vector<16x128xf32>
    %192 = vector.broadcast %1 : vector<1x128xf32> to vector<16x128xf32>
    %193 = arith.addf %191, %192 : vector<16x128xf32>
    %cst_103 = arith.constant 0.000000e+00 : f32
    %194 = vector.broadcast %cst_103 : f32 to vector<16x128xf32>
    %195 = arith.maximumf %193, %194 : vector<16x128xf32>
    %196 = vector.broadcast %144 : i1 to vector<16x128xi1>
    %197 = arith.andi %8, %196 : vector<16x128xi1>
    %cst_104 = arith.constant 0.000000e+00 : f32
    %198 = vector.broadcast %cst_104 : f32 to vector<16x128xf32>
    %199 = arith.select %197, %195, %198 : vector<16x128xi1>, vector<16x128xf32>
    %200 = arith.truncf %199 : vector<16x128xf32> to vector<16x128xbf16>
    %c2_105 = arith.constant 2 : index
    %c2_106 = arith.constant 2 : index
    %c0_107 = arith.constant 0 : index
    %c0_108 = arith.constant 0 : index
    %201 = vector.load %arg3[%c2_105, %c2_106, %c0_107, %c0_108] : memref<3x3x128x128xbf16, #tpu.memory_space<vmem>>, vector<1x1x128x128xbf16>
    %202 = vector.shape_cast %201 : vector<1x1x128x128xbf16> to vector<128x128xbf16>
    %cst_109 = arith.constant dense<0.000000e+00> : vector<16x128xf32>
    %203 = tpu.matmul %200, %202, %cst_109 {dimension_numbers = #tpu.dot_dimension_numbers<[1], [0], [0], [1], [0, 0, 1, 1], [], []>} : vector<16x128xbf16>, vector<128x128xbf16>, vector<16x128xf32> -> vector<16x128xf32>
    %204 = arith.addf %184, %203 : vector<16x128xf32>
    %205 = arith.truncf %204 : vector<16x128xf32> to vector<16x128xbf16>
    %206 = vector.shape_cast %205 : vector<16x128xbf16> to vector<1x1x16x128xbf16>
    %c0_110 = arith.constant 0 : index
    %c0_111 = arith.constant 0 : index
    %c0_112 = arith.constant 0 : index
    %c0_113 = arith.constant 0 : index
    %207 = vector.load %arg6[%c0_110, %c0_111, %c0_112, %c0_113] : memref<1x1x16x128xbf16, #tpu.memory_space<vmem>>, vector<1x1x16x128xbf16>
    tpu.vector_store %arg6[%c0_110, %c0_111, %c0_112, %c0_113], %206 {strides = array<i32>} : memref<1x1x16x128xbf16, #tpu.memory_space<vmem>>, vector<1x1x16x128xbf16>,
    %cst_114 = arith.constant dense<0.000000e+00> : vector<128xf32>
    %208 = vector.multi_reduction <add>, %204, %cst_114 [0] : vector<16x128xf32> to vector<128xf32>
    %209 = vector.shape_cast %208 : vector<128xf32> to vector<1x1x1x128xf32>
    %c0_115 = arith.constant 0 : index
    %c0_116 = arith.constant 0 : index
    %c0_117 = arith.constant 0 : index
    %c0_118 = arith.constant 0 : index
    %210 = vector.load %arg7[%c0_115, %c0_116, %c0_117, %c0_118] : memref<1x1x1x128xf32, #tpu.memory_space<vmem>>, vector<1x1x1x128xf32>
    tpu.vector_store %arg7[%c0_115, %c0_116, %c0_117, %c0_118], %209 {strides = array<i32>} : memref<1x1x1x128xf32, #tpu.memory_space<vmem>>, vector<1x1x1x128xf32>,
    %211 = arith.mulf %204, %204 : vector<16x128xf32>
    %cst_119 = arith.constant dense<0.000000e+00> : vector<128xf32>
    %212 = vector.multi_reduction <add>, %211, %cst_119 [0] : vector<16x128xf32> to vector<128xf32>
    %213 = vector.shape_cast %212 : vector<128xf32> to vector<1x1x1x128xf32>
    %c0_120 = arith.constant 0 : index
    %c0_121 = arith.constant 0 : index
    %c0_122 = arith.constant 0 : index
    %c0_123 = arith.constant 0 : index
    %214 = vector.load %arg8[%c0_120, %c0_121, %c0_122, %c0_123] : memref<1x1x1x128xf32, #tpu.memory_space<vmem>>, vector<1x1x1x128xf32>
    tpu.vector_store %arg8[%c0_120, %c0_121, %c0_122, %c0_123], %213 {strides = array<i32>} : memref<1x1x1x128xf32, #tpu.memory_space<vmem>>, vector<1x1x1x128xf32>,
    return
  }
  func.func @transform_0(%arg0: i32, %arg1: i32) -> (i32, i32, i32, i32) {
    %c0_i32 = arith.constant 0 : i32
    %c0_i32_0 = arith.constant 0 : i32
    %c0_i32_1 = arith.constant 0 : i32
    %c0_i32_2 = arith.constant 0 : i32
    return %arg0, %c0_i32, %c0_i32_0, %c0_i32_1 : i32, i32, i32, i32
  }
  func.func @transform_1(%arg0: i32, %arg1: i32) -> (i32, i32, i32, i32) {
    %c0_i32 = arith.constant 0 : i32
    %c0_i32_0 = arith.constant 0 : i32
    %c0_i32_1 = arith.constant 0 : i32
    %c0_i32_2 = arith.constant 0 : i32
    %c0_i32_3 = arith.constant 0 : i32
    return %c0_i32, %c0_i32_0, %c0_i32_1, %c0_i32_2 : i32, i32, i32, i32
  }
  func.func @transform_2(%arg0: i32, %arg1: i32) -> (i32, i32) {
    %c0_i32 = arith.constant 0 : i32
    %c0_i32_0 = arith.constant 0 : i32
    %c0_i32_1 = arith.constant 0 : i32
    return %c0_i32, %c0_i32_0 : i32, i32
  }
  func.func @transform_3(%arg0: i32, %arg1: i32) -> (i32, i32) {
    %c0_i32 = arith.constant 0 : i32
    %c0_i32_0 = arith.constant 0 : i32
    %c0_i32_1 = arith.constant 0 : i32
    return %c0_i32, %c0_i32_0 : i32, i32
  }
  func.func @transform_4(%arg0: i32, %arg1: i32) -> (i32, i32, i32, i32) {
    %c0_i32 = arith.constant 0 : i32
    %c0_i32_0 = arith.constant 0 : i32
    %c0_i32_1 = arith.constant 0 : i32
    return %arg0, %arg1, %c0_i32, %c0_i32_0 : i32, i32, i32, i32
  }
  func.func @transform_5(%arg0: i32, %arg1: i32) -> (i32, i32, i32, i32) {
    %c0_i32 = arith.constant 0 : i32
    %c0_i32_0 = arith.constant 0 : i32
    %c0_i32_1 = arith.constant 0 : i32
    return %arg0, %arg1, %c0_i32, %c0_i32_0 : i32, i32, i32, i32
  }
  func.func @transform_6(%arg0: i32, %arg1: i32) -> (i32, i32, i32, i32) {
    %c0_i32 = arith.constant 0 : i32
    %c0_i32_0 = arith.constant 0 : i32
    %c0_i32_1 = arith.constant 0 : i32
    return %arg0, %arg1, %c0_i32, %c0_i32_0 : i32, i32, i32, i32
  }
}

module attributes {stable_mosaic.version = 11 : i64} {
  func.func @_bn_relu_kernel(%arg0: i32, %arg1: memref<512x128xbf16, #tpu.memory_space<vmem>>, %arg2: memref<1x128xf32, #tpu.memory_space<vmem>>, %arg3: memref<1x128xf32, #tpu.memory_space<vmem>>, %arg4: memref<512x128xf32, #tpu.memory_space<vmem>>) attributes {dimension_semantics = [#tpu.dimension_semantics<parallel>], iteration_bounds = array<i64: 1>, scalar_prefetch = 0 : i64, scratch_operands = 0 : i64, tpu.core_type = #tpu.core_type<tc>, window_params = [{transform_indices = @transform_0, window_bounds = array<i64: 512, 128>}, {pipeline_mode = #tpu.pipeline_mode<synchronous>, transform_indices = @transform_1, window_bounds = array<i64: 1, 128>}, {pipeline_mode = #tpu.pipeline_mode<synchronous>, transform_indices = @transform_2, window_bounds = array<i64: 1, 128>}, {transform_indices = @transform_3, window_bounds = array<i64: 512, 128>}]} {
    %c0 = arith.constant 0 : index
    %c0_0 = arith.constant 0 : index
    %0 = vector.load %arg1[%c0, %c0_0] : memref<512x128xbf16, #tpu.memory_space<vmem>>, vector<512x128xbf16>
    %1 = arith.extf %0 : vector<512x128xbf16> to vector<512x128xf32>
    %c0_1 = arith.constant 0 : index
    %c0_2 = arith.constant 0 : index
    %2 = vector.load %arg2[%c0_1, %c0_2] : memref<1x128xf32, #tpu.memory_space<vmem>>, vector<1x128xf32>
    %3 = vector.broadcast %2 : vector<1x128xf32> to vector<512x128xf32>
    %4 = arith.mulf %1, %3 : vector<512x128xf32>
    %c0_3 = arith.constant 0 : index
    %c0_4 = arith.constant 0 : index
    %5 = vector.load %arg3[%c0_3, %c0_4] : memref<1x128xf32, #tpu.memory_space<vmem>>, vector<1x128xf32>
    %6 = vector.broadcast %5 : vector<1x128xf32> to vector<512x128xf32>
    %7 = arith.addf %4, %6 : vector<512x128xf32>
    %cst = arith.constant 0.000000e+00 : f32
    %8 = vector.broadcast %cst : f32 to vector<512x128xf32>
    %9 = arith.maximumf %7, %8 : vector<512x128xf32>
    %c0_5 = arith.constant 0 : index
    %c0_6 = arith.constant 0 : index
    %10 = vector.load %arg4[%c0_5, %c0_6] : memref<512x128xf32, #tpu.memory_space<vmem>>, vector<512x128xf32>
    tpu.vector_store %arg4[%c0_5, %c0_6], %9 {strides = array<i32>} : memref<512x128xf32, #tpu.memory_space<vmem>>, vector<512x128xf32>,
    return
  }
  func.func @transform_0(%arg0: i32) -> (i32, i32) {
    %c0_i32 = arith.constant 0 : i32
    %c0_i32_0 = arith.constant 0 : i32
    return %arg0, %c0_i32 : i32, i32
  }
  func.func @transform_1(%arg0: i32) -> (i32, i32) {
    %c0_i32 = arith.constant 0 : i32
    %c0_i32_0 = arith.constant 0 : i32
    %c0_i32_1 = arith.constant 0 : i32
    return %c0_i32, %c0_i32_0 : i32, i32
  }
  func.func @transform_2(%arg0: i32) -> (i32, i32) {
    %c0_i32 = arith.constant 0 : i32
    %c0_i32_0 = arith.constant 0 : i32
    %c0_i32_1 = arith.constant 0 : i32
    return %c0_i32, %c0_i32_0 : i32, i32
  }
  func.func @transform_3(%arg0: i32) -> (i32, i32) {
    %c0_i32 = arith.constant 0 : i32
    %c0_i32_0 = arith.constant 0 : i32
    return %arg0, %c0_i32 : i32, i32
  }
}

</mosaic_0001>

<llo_original>
// kernel: tile.8
$region0: #{tile.8}
  #allocation0 [shape = 's32[1]{0}', space=sflag, size = 0x4, scoped, tag = 'scoped memory for tile.8']
  %s0 = inlined_call_operand.vmem [shape: f32[2], index: 0, kind: input, shape index: {}]
  %s1 = inlined_call_operand.vmem [shape: f32[4,2], index: 1, kind: output, shape index: {}]
  // Predicated region
  $region2: #{tile.8} parent=0 // pred_check
    _
  $region3: #{tile.8} parent=0 // pred_check_branch
    %3 = sbr.rel (0) target = $region5
  $region4: #{tile.8} parent=0 // pred_region
    _
  $region5: #{tile.8} parent=0 // pred_fallthru
    _
  %v4 = vld [vmem:[%s0] ss:$0 sm:$0xff]
  %5 = vst [vmem:[%s1] sm:$0xf] %v4

// kernel: tile.9
$region0: #{tile.9}
  %s0 = inlined_call_operand.vmem [shape: f32[4,2], index: 0, kind: input, shape index: {}]
  %s1 = inlined_call_operand.vmem [shape: f32[1,8], index: 1, kind: output, shape index: {}]
  $region1: #{tile.9} parent=0
    #allocation0 [shape = 'u8[4096]{0}', space=vmem, size = 0x1000, scoped, tag = 'scoped mem for output reshape']
    #allocation1 [shape = 'u8[4096]{0}', space=vmem, size = 0x1000, scoped, tag = 'scoped mem for input reshape']
    %s3 = ssub.s32 16, 1
    %v4 = vld [vmem:[%s0] sm:%s3]
    %5 = vst [vmem:[#allocation1] sm:%s3] %v4
    %v6 = vld [vmem:[#allocation1] sm:$0x1]
    %vm7 = vcmask 15360
    %8 = vst.msk [vmem:[#allocation0] sm:$0x1] %vm7, %v6
    %s9 = scalar_lea.vmem [#allocation1], 3
    %v10 = vld [vmem:[%s9] sm:$0x1]
    %11 = vrot.lane.b32.xlu0 %v10, 6
    %v12 = vpop.permute.xlu0 %11
    %vm13 = vcmask 64560
    %14 = vst.msk [vmem:[#allocation0] sm:$0x1] %vm13, %v12
    %s15 = scalar_lea.vmem [#allocation1], 2
    %v16 = vld [vmem:[%s15] sm:$0x1]
    %17 = vrot.lane.b32.xlu0 %v16, 4
    %v18 = vpop.permute.xlu0 %17
    %vm19 = vcmask 48160
    %20 = vst.msk [vmem:[#allocation0] sm:$0x1] %vm19, %v18
    %s21 = scalar_lea.vmem [#allocation1], 1
    %v22 = vld [vmem:[%s21] sm:$0x1]
    %23 = vrot.lane.b32.xlu0 %v22, 2
    %v24 = vpop.permute.xlu0 %23
    %vm25 = vcmask 31760
    %26 = vst.msk [vmem:[#allocation0] sm:$0x1] %vm25, %v24
    %s28 = ssub.s32 2, 1
    %v29 = vld [vmem:[#allocation0] sm:%s28]
    %s31 = ssub.s32 2, 1
    %32 = vst [vmem:[%s1] sm:%s31] %v29

// kernel: expanding_block_forward.4
$region0: #{expanding_block_forward.4}
  #allocation0 [shape = 'u32[]', space=smem, size = 0x4, offset = 0x4, fixed_abs, tag = 'smem constant byte address 0x4 - core index']
  #allocation1 [shape = 'u32[72,128]{1,0:T(1,128)}', space=vmem, size = 0x9000, scoped, tag = 'internal scratch']
  %s0 = inlined_call_operand.vmem [shape: bf16[128,4], index: 0, kind: input, shape index: {}]
  %s1 = inlined_call_operand.vmem [shape: bf16[4,128], index: 1, kind: input, shape index: {}]
  %s2 = inlined_call_operand.vmem [shape: f32[1,128], index: 2, kind: input, shape index: {}]
  %s3 = inlined_call_operand.vmem [shape: bf16[128,128], index: 3, kind: output, shape index: {}]
  %s4 = sld [smem:[#allocation0]]
  $region22: #{expanding_block_forward.4} parent=0
    _
  %s6 = ssub.s32 1, %s4
  %s7 = scalar_select 0, %s6, %s4
  // Predicated region
  $region2: #{expanding_block_forward.4} parent=0 // pred_check
    _
  $region3: #{expanding_block_forward.4} parent=0 // pred_check_branch
    %9 = sbr.rel (0) target = $region5
  $region4: #{expanding_block_forward.4} parent=0 // pred_region
    _
  $region5: #{expanding_block_forward.4} parent=0 // pred_fallthru
    _
  // Predicated region
  $region6: #{expanding_block_forward.4} parent=0 // pred_check
    _
  $region7: #{expanding_block_forward.4} parent=0 // pred_check_branch
    %11 = sbr.rel (0) target = $region9
  $region8: #{expanding_block_forward.4} parent=0 // pred_region
    _
  $region9: #{expanding_block_forward.4} parent=0 // pred_fallthru
    _
  // Predicated region
  $region10: #{expanding_block_forward.4} parent=0 // pred_check
    _
  $region11: #{expanding_block_forward.4} parent=0 // pred_check_branch
    %13 = sbr.rel (0) target = $region13
  $region12: #{expanding_block_forward.4} parent=0 // pred_region
    _
  $region13: #{expanding_block_forward.4} parent=0 // pred_fallthru
    _
  %v15 = vld [vmem:[%s0] sm:$0xf]
  %v16 = vld [vmem:[%s0 + $0x4] sm:$0xf]
  %v17 = vld [vmem:[%s0 + $0x8] sm:$0xf]
  %v18 = vld [vmem:[%s0 + $0xc] sm:$0xf]
  %v19 = vld [vmem:[%s0 + $0x10] sm:$0xf]
  %v20 = vld [vmem:[%s0 + $0x14] sm:$0xf]
  %v21 = vld [vmem:[%s0 + $0x18] sm:$0xf]
  %v22 = vld [vmem:[%s0 + $0x1c] sm:$0xf]
  %v23 = vld [vmem:[%s0 + $0x20] sm:$0xf]
  %v24 = vld [vmem:[%s0 + $0x24] sm:$0xf]
  %v25 = vld [vmem:[%s0 + $0x28] sm:$0xf]
  %v26 = vld [vmem:[%s0 + $0x2c] sm:$0xf]
  %v27 = vld [vmem:[%s0 + $0x30] sm:$0xf]
  %v28 = vld [vmem:[%s0 + $0x34] sm:$0xf]
  %v29 = vld [vmem:[%s0 + $0x38] sm:$0xf]
  %v30 = vld [vmem:[%s0 + $0x3c] sm:$0xf]
  %v31 = vld [vmem:[%s1] sm:$0x3]
  %v32 = vld [vmem:[%s2] sm:$0x1]
  %v34 = vperm.slane %v32, 0
  %v52 = vunpack.c.l.b16 %v15
  %v53 = vunpack.c.l.b16 %v16
  %v54 = vunpack.c.l.b16 %v17
  %v55 = vunpack.c.l.b16 %v18
  %v56 = vunpack.c.l.b16 %v19
  %v57 = vunpack.c.l.b16 %v20
  %v58 = vunpack.c.l.b16 %v21
  %v59 = vunpack.c.l.b16 %v22
  %v60 = vunpack.c.l.b16 %v23
  %v61 = vunpack.c.l.b16 %v24
  %v62 = vunpack.c.l.b16 %v25
  %v63 = vunpack.c.l.b16 %v26
  %v64 = vunpack.c.l.b16 %v27
  %v65 = vunpack.c.l.b16 %v28
  %v66 = vunpack.c.l.b16 %v29
  %v67 = vunpack.c.l.b16 %v30
  %v68 = vpack.c.b16 %v53, %v52
  %v69 = vpack.c.b16 %v55, %v54
  %v70 = vpack.c.b16 %v57, %v56
  %v71 = vpack.c.b16 %v59, %v58
  %v72 = vpack.c.b16 %v61, %v60
  %v73 = vpack.c.b16 %v63, %v62
  %v74 = vpack.c.b16 %v65, %v64
  %v75 = vpack.c.b16 %v67, %v66
  %vm76 = vcmask 31744
  %v78 = vsel %vm76, %v68, 0
  %v81 = vsel %vm76, %v69, 0
  %v84 = vsel %vm76, %v70, 0
  %v87 = vsel %vm76, %v71, 0
  %v90 = vsel %vm76, %v72, 0
  %v93 = vsel %vm76, %v73, 0
  %v96 = vsel %vm76, %v74, 0
  %v99 = vsel %vm76, %v75, 0
  %vm101 = vcmask 1041408
  %v103 = vsel %vm101, %v31, 0
  %105 = vmatpush.bf16.msra.mxu0 0
  %106 = vmatpush.bf16.msra.mxu0 0
  %107 = vmatpush.bf16.msra.mxu0 0
  %108 = vmatpush.bf16.msra.mxu0 0
  %109 = vmatpush.bf16.msra.mxu0 0
  %110 = vmatpush.bf16.msra.mxu0 0
  %111 = vmatpush.bf16.msra.mxu0 0
  %112 = vmatpush.bf16.msra.mxu0 %v103
  %113 = vmatmul.bf16.gmra.mxu0 %v78
  %v114 = vpop.f32.mrf.mxu0
  %v115 = vadd.f32 %v34, %v114
  %v116 = vpop.f32.mrf.mxu0
  %v117 = vadd.f32 %v34, %v116
  %118 = vmatmul.bf16.gmra.mxu0 %v81
  %v119 = vpop.f32.mrf.mxu0
  %v120 = vadd.f32 %v34, %v119
  %v121 = vpop.f32.mrf.mxu0
  %v122 = vadd.f32 %v34, %v121
  %123 = vmatmul.bf16.gmra.mxu0 %v84
  %v124 = vpop.f32.mrf.mxu0
  %v125 = vadd.f32 %v34, %v124
  %v126 = vpop.f32.mrf.mxu0
  %v127 = vadd.f32 %v34, %v126
  %128 = vmatmul.bf16.gmra.mxu0 %v87
  %v129 = vpop.f32.mrf.mxu0
  %v130 = vadd.f32 %v34, %v129
  %v131 = vpop.f32.mrf.mxu0
  %v132 = vadd.f32 %v34, %v131
  %133 = vmatmul.bf16.gmra.mxu0 %v90
  %v134 = vpop.f32.mrf.mxu0
  %v135 = vadd.f32 %v34, %v134
  %v136 = vpop.f32.mrf.mxu0
  %v137 = vadd.f32 %v34, %v136
  %138 = vmatmul.bf16.gmra.mxu0 %v93
  %v139 = vpop.f32.mrf.mxu0
  %v140 = vadd.f32 %v34, %v139
  %v141 = vpop.f32.mrf.mxu0
  %v142 = vadd.f32 %v34, %v141
  %143 = vmatmul.bf16.gmra.mxu0 %v96
  %v144 = vpop.f32.mrf.mxu0
  %v145 = vadd.f32 %v34, %v144
  %v146 = vpop.f32.mrf.mxu0
  %v147 = vadd.f32 %v34, %v146
  %148 = vmatmul.bf16.gmra.mxu0 %v99
  %v149 = vpop.f32.mrf.mxu0
  %v150 = vadd.f32 %v34, %v149
  %v151 = vpop.f32.mrf.mxu0
  %v152 = vadd.f32 %v34, %v151
  %153 = vdwg.mxu0
  %v154 = vpack.c.bf16 %v115, %v115
  %v155 = vpack.c.bf16 %v117, %v117
  %v156 = vpack.c.bf16 %v120, %v120
  %v157 = vpack.c.bf16 %v122, %v122
  %v158 = vpack.c.bf16 %v125, %v125
  %v159 = vpack.c.bf16 %v127, %v127
  %v160 = vpack.c.bf16 %v130, %v130
  %v161 = vpack.c.bf16 %v132, %v132
  %v162 = vpack.c.bf16 %v135, %v135
  %v163 = vpack.c.bf16 %v137, %v137
  %v164 = vpack.c.bf16 %v140, %v140
  %v165 = vpack.c.bf16 %v142, %v142
  %v166 = vpack.c.bf16 %v145, %v145
  %v167 = vpack.c.bf16 %v147, %v147
  %v168 = vpack.c.bf16 %v150, %v150
  %v169 = vpack.c.bf16 %v152, %v152
  %170 = vst [vmem:[%s3] sm:$0xf] %v154
  %171 = vst [vmem:[%s3 + $0x4] sm:$0xf] %v155
  %172 = vst [vmem:[%s3 + $0x8] sm:$0xf] %v156
  %173 = vst [vmem:[%s3 + $0xc] sm:$0xf] %v157
  %174 = vst [vmem:[%s3 + $0x10] sm:$0xf] %v158
  %175 = vst [vmem:[%s3 + $0x14] sm:$0xf] %v159
  %176 = vst [vmem:[%s3 + $0x18] sm:$0xf] %v160
  %177 = vst [vmem:[%s3 + $0x1c] sm:$0xf] %v161
  %178 = vst [vmem:[%s3 + $0x20] sm:$0xf] %v162
  %179 = vst [vmem:[%s3 + $0x24] sm:$0xf] %v163
  %180 = vst [vmem:[%s3 + $0x28] sm:$0xf] %v164
  %181 = vst [vmem:[%s3 + $0x2c] sm:$0xf] %v165
  %182 = vst [vmem:[%s3 + $0x30] sm:$0xf] %v166
  %183 = vst [vmem:[%s3 + $0x34] sm:$0xf] %v167
  %184 = vst [vmem:[%s3 + $0x38] sm:$0xf] %v168
  %185 = vst [vmem:[%s3 + $0x3c] sm:$0xf] %v169
  // Predicated region
  $region14: #{expanding_block_forward.4} parent=0 // pred_check
    _
  $region15: #{expanding_block_forward.4} parent=0 // pred_check_branch
    %187 = sbr.rel (0) target = $region17
  $region16: #{expanding_block_forward.4} parent=0 // pred_region
    _
  $region17: #{expanding_block_forward.4} parent=0 // pred_fallthru
    _
  // Predicated region
  $region18: #{expanding_block_forward.4} parent=0 // pred_check
    _
  $region19: #{expanding_block_forward.4} parent=0 // pred_check_branch
    %189 = sbr.rel (0) target = $region21
  $region20: #{expanding_block_forward.4} parent=0 // pred_region
    _
  $region21: #{expanding_block_forward.4} parent=0 // pred_fallthru
    _

// kernel: expanding_block_forward.7
$region0: #{expanding_block_forward.7}
  #allocation0 [shape = 'u32[]', space=smem, size = 0x4, offset = 0x4, fixed_abs, tag = 'smem constant byte address 0x4 - core index']
  #allocation1 [shape = 'u32[72,128]{1,0:T(1,128)}', space=vmem, size = 0x9000, scoped, tag = 'internal scratch']
  %s0 = inlined_call_operand.vmem [shape: bf16[512,128], index: 0, kind: input, shape index: {}]
  %s1 = inlined_call_operand.vmem [shape: f32[1,128], index: 1, kind: input, shape index: {}]
  %s2 = inlined_call_operand.vmem [shape: f32[1,128], index: 2, kind: input, shape index: {}]
  %s3 = inlined_call_operand.vmem [shape: f32[512,128], index: 3, kind: output, shape index: {}]
  %s4 = sld [smem:[#allocation0]]
  $region22: #{expanding_block_forward.7} parent=0
    _
  %s6 = ssub.s32 1, %s4
  %s7 = scalar_select 0, %s6, %s4
  // Predicated region
  $region2: #{expanding_block_forward.7} parent=0 // pred_check
    _
  $region3: #{expanding_block_forward.7} parent=0 // pred_check_branch
    %9 = sbr.rel (0) target = $region5
  $region4: #{expanding_block_forward.7} parent=0 // pred_region
    _
  $region5: #{expanding_block_forward.7} parent=0 // pred_fallthru
    _
  // Predicated region
  $region6: #{expanding_block_forward.7} parent=0 // pred_check
    _
  $region7: #{expanding_block_forward.7} parent=0 // pred_check_branch
    %11 = sbr.rel (0) target = $region9
  $region8: #{expanding_block_forward.7} parent=0 // pred_region
    _
  $region9: #{expanding_block_forward.7} parent=0 // pred_fallthru
    _
  // Predicated region
  $region10: #{expanding_block_forward.7} parent=0 // pred_check
    _
  $region11: #{expanding_block_forward.7} parent=0 // pred_check_branch
    %13 = sbr.rel (0) target = $region13
  $region12: #{expanding_block_forward.7} parent=0 // pred_region
    _
  $region13: #{expanding_block_forward.7} parent=0 // pred_fallthru
    _
  %v14 = vld [vmem:[%s0] sm:$0xf]
  %v15 = vld [vmem:[%s0 + $0x4] sm:$0xf]
  %v16 = vld [vmem:[%s0 + $0x8] sm:$0xf]
  %v17 = vld [vmem:[%s0 + $0xc] sm:$0xf]
  %v18 = vld [vmem:[%s0 + $0x10] sm:$0xf]
  %v19 = vld [vmem:[%s0 + $0x14] sm:$0xf]
  %v20 = vld [vmem:[%s0 + $0x18] sm:$0xf]
  %v21 = vld [vmem:[%s0 + $0x1c] sm:$0xf]
  %v22 = vld [vmem:[%s0 + $0x20] sm:$0xf]
  %v23 = vld [vmem:[%s0 + $0x24] sm:$0xf]
  %v24 = vld [vmem:[%s0 + $0x28] sm:$0xf]
  %v25 = vld [vmem:[%s0 + $0x2c] sm:$0xf]
  %v26 = vld [vmem:[%s0 + $0x30] sm:$0xf]
  %v27 = vld [vmem:[%s0 + $0x34] sm:$0xf]
  %v28 = vld [vmem:[%s0 + $0x38] sm:$0xf]
  %v29 = vld [vmem:[%s0 + $0x3c] sm:$0xf]
  %v30 = vld [vmem:[%s0 + $0x40] sm:$0xf]
  %v31 = vld [vmem:[%s0 + $0x44] sm:$0xf]
  %v32 = vld [vmem:[%s0 + $0x48] sm:$0xf]
  %v33 = vld [vmem:[%s0 + $0x4c] sm:$0xf]
  %v34 = vld [vmem:[%s0 + $0x50] sm:$0xf]
  %v35 = vld [vmem:[%s0 + $0x54] sm:$0xf]
  %v36 = vld [vmem:[%s0 + $0x58] sm:$0xf]
  %v37 = vld [vmem:[%s0 + $0x5c] sm:$0xf]
  %v38 = vld [vmem:[%s0 + $0x60] sm:$0xf]
  %v39 = vld [vmem:[%s0 + $0x64] sm:$0xf]
  %v40 = vld [vmem:[%s0 + $0x68] sm:$0xf]
  %v41 = vld [vmem:[%s0 + $0x6c] sm:$0xf]
  %v42 = vld [vmem:[%s0 + $0x70] sm:$0xf]
  %v43 = vld [vmem:[%s0 + $0x74] sm:$0xf]
  %v44 = vld [vmem:[%s0 + $0x78] sm:$0xf]
  %v45 = vld [vmem:[%s0 + $0x7c] sm:$0xf]
  %v46 = vld [vmem:[%s0 + $0x80] sm:$0xf]
  %v47 = vld [vmem:[%s0 + $0x84] sm:$0xf]
  %v48 = vld [vmem:[%s0 + $0x88] sm:$0xf]
  %v49 = vld [vmem:[%s0 + $0x8c] sm:$0xf]
  %v50 = vld [vmem:[%s0 + $0x90] sm:$0xf]
  %v51 = vld [vmem:[%s0 + $0x94] sm:$0xf]
  %v52 = vld [vmem:[%s0 + $0x98] sm:$0xf]
  %v53 = vld [vmem:[%s0 + $0x9c] sm:$0xf]
  %v54 = vld [vmem:[%s0 + $0xa0] sm:$0xf]
  %v55 = vld [vmem:[%s0 + $0xa4] sm:$0xf]
  %v56 = vld [vmem:[%s0 + $0xa8] sm:$0xf]
  %v57 = vld [vmem:[%s0 + $0xac] sm:$0xf]
  %v58 = vld [vmem:[%s0 + $0xb0] sm:$0xf]
  %v59 = vld [vmem:[%s0 + $0xb4] sm:$0xf]
  %v60 = vld [vmem:[%s0 + $0xb8] sm:$0xf]
  %v61 = vld [vmem:[%s0 + $0xbc] sm:$0xf]
  %v62 = vld [vmem:[%s0 + $0xc0] sm:$0xf]
  %v63 = vld [vmem:[%s0 + $0xc4] sm:$0xf]
  %v64 = vld [vmem:[%s0 + $0xc8] sm:$0xf]
  %v65 = vld [vmem:[%s0 + $0xcc] sm:$0xf]
  %v66 = vld [vmem:[%s0 + $0xd0] sm:$0xf]
  %v67 = vld [vmem:[%s0 + $0xd4] sm:$0xf]
  %v68 = vld [vmem:[%s0 + $0xd8] sm:$0xf]
  %v69 = vld [vmem:[%s0 + $0xdc] sm:$0xf]
  %v70 = vld [vmem:[%s0 + $0xe0] sm:$0xf]
  %v71 = vld [vmem:[%s0 + $0xe4] sm:$0xf]
  %v72 = vld [vmem:[%s0 + $0xe8] sm:$0xf]
  %v73 = vld [vmem:[%s0 + $0xec] sm:$0xf]
  %v74 = vld [vmem:[%s0 + $0xf0] sm:$0xf]
  %v75 = vld [vmem:[%s0 + $0xf4] sm:$0xf]
  %v76 = vld [vmem:[%s0 + $0xf8] sm:$0xf]
  %v77 = vld [vmem:[%s0 + $0xfc] sm:$0xf]
  %v78 = vunpack.c.l.bf16 %v14
  %v79 = vunpack.c.l.bf16 %v15
  %v80 = vunpack.c.l.bf16 %v16
  %v81 = vunpack.c.l.bf16 %v17
  %v82 = vunpack.c.l.bf16 %v18
  %v83 = vunpack.c.l.bf16 %v19
  %v84 = vunpack.c.l.bf16 %v20
  %v85 = vunpack.c.l.bf16 %v21
  %v86 = vunpack.c.l.bf16 %v22
  %v87 = vunpack.c.l.bf16 %v23
  %v88 = vunpack.c.l.bf16 %v24
  %v89 = vunpack.c.l.bf16 %v25
  %v90 = vunpack.c.l.bf16 %v26
  %v91 = vunpack.c.l.bf16 %v27
  %v92 = vunpack.c.l.bf16 %v28
  %v93 = vunpack.c.l.bf16 %v29
  %v94 = vunpack.c.l.bf16 %v30
  %v95 = vunpack.c.l.bf16 %v31
  %v96 = vunpack.c.l.bf16 %v32
  %v97 = vunpack.c.l.bf16 %v33
  %v98 = vunpack.c.l.bf16 %v34
  %v99 = vunpack.c.l.bf16 %v35
  %v100 = vunpack.c.l.bf16 %v36
  %v101 = vunpack.c.l.bf16 %v37
  %v102 = vunpack.c.l.bf16 %v38
  %v103 = vunpack.c.l.bf16 %v39
  %v104 = vunpack.c.l.bf16 %v40
  %v105 = vunpack.c.l.bf16 %v41
  %v106 = vunpack.c.l.bf16 %v42
  %v107 = vunpack.c.l.bf16 %v43
  %v108 = vunpack.c.l.bf16 %v44
  %v109 = vunpack.c.l.bf16 %v45
  %v110 = vunpack.c.l.bf16 %v46
  %v111 = vunpack.c.l.bf16 %v47
  %v112 = vunpack.c.l.bf16 %v48
  %v113 = vunpack.c.l.bf16 %v49
  %v114 = vunpack.c.l.bf16 %v50
  %v115 = vunpack.c.l.bf16 %v51
  %v116 = vunpack.c.l.bf16 %v52
  %v117 = vunpack.c.l.bf16 %v53
  %v118 = vunpack.c.l.bf16 %v54
  %v119 = vunpack.c.l.bf16 %v55
  %v120 = vunpack.c.l.bf16 %v56
  %v121 = vunpack.c.l.bf16 %v57
  %v122 = vunpack.c.l.bf16 %v58
  %v123 = vunpack.c.l.bf16 %v59
  %v124 = vunpack.c.l.bf16 %v60
  %v125 = vunpack.c.l.bf16 %v61
  %v126 = vunpack.c.l.bf16 %v62
  %v127 = vunpack.c.l.bf16 %v63
  %v128 = vunpack.c.l.bf16 %v64
  %v129 = vunpack.c.l.bf16 %v65
  %v130 = vunpack.c.l.bf16 %v66
  %v131 = vunpack.c.l.bf16 %v67
  %v132 = vunpack.c.l.bf16 %v68
  %v133 = vunpack.c.l.bf16 %v69
  %v134 = vunpack.c.l.bf16 %v70
  %v135 = vunpack.c.l.bf16 %v71
  %v136 = vunpack.c.l.bf16 %v72
  %v137 = vunpack.c.l.bf16 %v73
  %v138 = vunpack.c.l.bf16 %v74
  %v139 = vunpack.c.l.bf16 %v75
  %v140 = vunpack.c.l.bf16 %v76
  %v141 = vunpack.c.l.bf16 %v77
  %v142 = vld [vmem:[%s1] sm:$0x1]
  %v144 = vperm.slane %v142, 0
  %v146 = vmul.f32 %v78, %v144
  %v147 = vmul.f32 %v79, %v144
  %v148 = vmul.f32 %v80, %v144
  %v149 = vmul.f32 %v81, %v144
  %v150 = vmul.f32 %v82, %v144
  %v151 = vmul.f32 %v83, %v144
  %v152 = vmul.f32 %v84, %v144
  %v153 = vmul.f32 %v85, %v144
  %v154 = vmul.f32 %v86, %v144
  %v155 = vmul.f32 %v87, %v144
  %v156 = vmul.f32 %v88, %v144
  %v157 = vmul.f32 %v89, %v144
  %v158 = vmul.f32 %v90, %v144
  %v159 = vmul.f32 %v91, %v144
  %v160 = vmul.f32 %v92, %v144
  %v161 = vmul.f32 %v93, %v144
  %v162 = vmul.f32 %v94, %v144
  %v163 = vmul.f32 %v95, %v144
  %v164 = vmul.f32 %v96, %v144
  %v165 = vmul.f32 %v97, %v144
  %v166 = vmul.f32 %v98, %v144
  %v167 = vmul.f32 %v99, %v144
  %v168 = vmul.f32 %v100, %v144
  %v169 = vmul.f32 %v101, %v144
  %v170 = vmul.f32 %v102, %v144
  %v171 = vmul.f32 %v103, %v144
  %v172 = vmul.f32 %v104, %v144
  %v173 = vmul.f32 %v105, %v144
  %v174 = vmul.f32 %v106, %v144
  %v175 = vmul.f32 %v107, %v144
  %v176 = vmul.f32 %v108, %v144
  %v177 = vmul.f32 %v109, %v144
  %v178 = vmul.f32 %v110, %v144
  %v179 = vmul.f32 %v111, %v144
  %v180 = vmul.f32 %v112, %v144
  %v181 = vmul.f32 %v113, %v144
  %v182 = vmul.f32 %v114, %v144
  %v183 = vmul.f32 %v115, %v144
  %v184 = vmul.f32 %v116, %v144
  %v185 = vmul.f32 %v117, %v144
  %v186 = vmul.f32 %v118, %v144
  %v187 = vmul.f32 %v119, %v144
  %v188 = vmul.f32 %v120, %v144
  %v189 = vmul.f32 %v121, %v144
  %v190 = vmul.f32 %v122, %v144
  %v191 = vmul.f32 %v123, %v144
  %v192 = vmul.f32 %v124, %v144
  %v193 = vmul.f32 %v125, %v144
  %v194 = vmul.f32 %v126, %v144
  %v195 = vmul.f32 %v127, %v144
  %v196 = vmul.f32 %v128, %v144
  %v197 = vmul.f32 %v129, %v144
  %v198 = vmul.f32 %v130, %v144
  %v199 = vmul.f32 %v131, %v144
  %v200 = vmul.f32 %v132, %v144
  %v201 = vmul.f32 %v133, %v144
  %v202 = vmul.f32 %v134, %v144
  %v203 = vmul.f32 %v135, %v144
  %v204 = vmul.f32 %v136, %v144
  %v205 = vmul.f32 %v137, %v144
  %v206 = vmul.f32 %v138, %v144
  %v207 = vmul.f32 %v139, %v144
  %v208 = vmul.f32 %v140, %v144
  %v209 = vmul.f32 %v141, %v144
  %v210 = vld [vmem:[%s2] sm:$0x1]
  %v212 = vperm.slane %v210, 0
  %v214 = vadd.f32 %v146, %v212
  %v215 = vadd.f32 %v147, %v212
  %v216 = vadd.f32 %v148, %v212
  %v217 = vadd.f32 %v149, %v212
  %v218 = vadd.f32 %v150, %v212
  %v219 = vadd.f32 %v151, %v212
  %v220 = vadd.f32 %v152, %v212
  %v221 = vadd.f32 %v153, %v212
  %v222 = vadd.f32 %v154, %v212
  %v223 = vadd.f32 %v155, %v212
  %v224 = vadd.f32 %v156, %v212
  %v225 = vadd.f32 %v157, %v212
  %v226 = vadd.f32 %v158, %v212
  %v227 = vadd.f32 %v159, %v212
  %v228 = vadd.f32 %v160, %v212
  %v229 = vadd.f32 %v161, %v212
  %v230 = vadd.f32 %v162, %v212
  %v231 = vadd.f32 %v163, %v212
  %v232 = vadd.f32 %v164, %v212
  %v233 = vadd.f32 %v165, %v212
  %v234 = vadd.f32 %v166, %v212
  %v235 = vadd.f32 %v167, %v212
  %v236 = vadd.f32 %v168, %v212
  %v237 = vadd.f32 %v169, %v212
  %v238 = vadd.f32 %v170, %v212
  %v239 = vadd.f32 %v171, %v212
  %v240 = vadd.f32 %v172, %v212
  %v241 = vadd.f32 %v173, %v212
  %v242 = vadd.f32 %v174, %v212
  %v243 = vadd.f32 %v175, %v212
  %v244 = vadd.f32 %v176, %v212
  %v245 = vadd.f32 %v177, %v212
  %v246 = vadd.f32 %v178, %v212
  %v247 = vadd.f32 %v179, %v212
  %v248 = vadd.f32 %v180, %v212
  %v249 = vadd.f32 %v181, %v212
  %v250 = vadd.f32 %v182, %v212
  %v251 = vadd.f32 %v183, %v212
  %v252 = vadd.f32 %v184, %v212
  %v253 = vadd.f32 %v185, %v212
  %v254 = vadd.f32 %v186, %v212
  %v255 = vadd.f32 %v187, %v212
  %v256 = vadd.f32 %v188, %v212
  %v257 = vadd.f32 %v189, %v212
  %v258 = vadd.f32 %v190, %v212
  %v259 = vadd.f32 %v191, %v212
  %v260 = vadd.f32 %v192, %v212
  %v261 = vadd.f32 %v193, %v212
  %v262 = vadd.f32 %v194, %v212
  %v263 = vadd.f32 %v195, %v212
  %v264 = vadd.f32 %v196, %v212
  %v265 = vadd.f32 %v197, %v212
  %v266 = vadd.f32 %v198, %v212
  %v267 = vadd.f32 %v199, %v212
  %v268 = vadd.f32 %v200, %v212
  %v269 = vadd.f32 %v201, %v212
  %v270 = vadd.f32 %v202, %v212
  %v271 = vadd.f32 %v203, %v212
  %v272 = vadd.f32 %v204, %v212
  %v273 = vadd.f32 %v205, %v212
  %v274 = vadd.f32 %v206, %v212
  %v275 = vadd.f32 %v207, %v212
  %v276 = vadd.f32 %v208, %v212
  %v277 = vadd.f32 %v209, %v212
  %v278 = vmax.f32 %v214, 0.0
  %v279 = vmax.f32 %v215, 0.0
  %v280 = vmax.f32 %v216, 0.0
  %v281 = vmax.f32 %v217, 0.0
  %v282 = vmax.f32 %v218, 0.0
  %v283 = vmax.f32 %v219, 0.0
  %v284 = vmax.f32 %v220, 0.0
  %v285 = vmax.f32 %v221, 0.0
  %v286 = vmax.f32 %v222, 0.0
  %v287 = vmax.f32 %v223, 0.0
  %v288 = vmax.f32 %v224, 0.0
  %v289 = vmax.f32 %v225, 0.0
  %v290 = vmax.f32 %v226, 0.0
  %v291 = vmax.f32 %v227, 0.0
  %v292 = vmax.f32 %v228, 0.0
  %v293 = vmax.f32 %v229, 0.0
  %v294 = vmax.f32 %v230, 0.0
  %v295 = vmax.f32 %v231, 0.0
  %v296 = vmax.f32 %v232, 0.0
  %v297 = vmax.f32 %v233, 0.0
  %v298 = vmax.f32 %v234, 0.0
  %v299 = vmax.f32 %v235, 0.0
  %v300 = vmax.f32 %v236, 0.0
  %v301 = vmax.f32 %v237, 0.0
  %v302 = vmax.f32 %v238, 0.0
  %v303 = vmax.f32 %v239, 0.0
  %v304 = vmax.f32 %v240, 0.0
  %v305 = vmax.f32 %v241, 0.0
  %v306 = vmax.f32 %v242, 0.0
  %v307 = vmax.f32 %v243, 0.0
  %v308 = vmax.f32 %v244, 0.0
  %v309 = vmax.f32 %v245, 0.0
  %v310 = vmax.f32 %v246, 0.0
  %v311 = vmax.f32 %v247, 0.0
  %v312 = vmax.f32 %v248, 0.0
  %v313 = vmax.f32 %v249, 0.0
  %v314 = vmax.f32 %v250, 0.0
  %v315 = vmax.f32 %v251, 0.0
  %v316 = vmax.f32 %v252, 0.0
  %v317 = vmax.f32 %v253, 0.0
  %v318 = vmax.f32 %v254, 0.0
  %v319 = vmax.f32 %v255, 0.0
  %v320 = vmax.f32 %v256, 0.0
  %v321 = vmax.f32 %v257, 0.0
  %v322 = vmax.f32 %v258, 0.0
  %v323 = vmax.f32 %v259, 0.0
  %v324 = vmax.f32 %v260, 0.0
  %v325 = vmax.f32 %v261, 0.0
  %v326 = vmax.f32 %v262, 0.0
  %v327 = vmax.f32 %v263, 0.0
  %v328 = vmax.f32 %v264, 0.0
  %v329 = vmax.f32 %v265, 0.0
  %v330 = vmax.f32 %v266, 0.0
  %v331 = vmax.f32 %v267, 0.0
  %v332 = vmax.f32 %v268, 0.0
  %v333 = vmax.f32 %v269, 0.0
  %v334 = vmax.f32 %v270, 0.0
  %v335 = vmax.f32 %v271, 0.0
  %v336 = vmax.f32 %v272, 0.0
  %v337 = vmax.f32 %v273, 0.0
  %v338 = vmax.f32 %v274, 0.0
  %v339 = vmax.f32 %v275, 0.0
  %v340 = vmax.f32 %v276, 0.0
  %v341 = vmax.f32 %v277, 0.0
  %342 = vst [vmem:[%s3] sm:$0xff] %v278
  %343 = vst [vmem:[%s3 + $0x8] sm:$0xff] %v279
  %344 = vst [vmem:[%s3 + $0x10] sm:$0xff] %v280
  %345 = vst [vmem:[%s3 + $0x18] sm:$0xff] %v281
  %346 = vst [vmem:[%s3 + $0x20] sm:$0xff] %v282
  %347 = vst [vmem:[%s3 + $0x28] sm:$0xff] %v283
  %348 = vst [vmem:[%s3 + $0x30] sm:$0xff] %v284
  %349 = vst [vmem:[%s3 + $0x38] sm:$0xff] %v285
  %350 = vst [vmem:[%s3 + $0x40] sm:$0xff] %v286
  %351 = vst [vmem:[%s3 + $0x48] sm:$0xff] %v287
  %352 = vst [vmem:[%s3 + $0x50] sm:$0xff] %v288
  %353 = vst [vmem:[%s3 + $0x58] sm:$0xff] %v289
  %354 = vst [vmem:[%s3 + $0x60] sm:$0xff] %v290
  %355 = vst [vmem:[%s3 + $0x68] sm:$0xff] %v291
  %356 = vst [vmem:[%s3 + $0x70] sm:$0xff] %v292
  %357 = vst [vmem:[%s3 + $0x78] sm:$0xff] %v293
  %358 = vst [vmem:[%s3 + $0x80] sm:$0xff] %v294
  %359 = vst [vmem:[%s3 + $0x88] sm:$0xff] %v295
  %360 = vst [vmem:[%s3 + $0x90] sm:$0xff] %v296
  %361 = vst [vmem:[%s3 + $0x98] sm:$0xff] %v297
  %362 = vst [vmem:[%s3 + $0xa0] sm:$0xff] %v298
  %363 = vst [vmem:[%s3 + $0xa8] sm:$0xff] %v299
  %364 = vst [vmem:[%s3 + $0xb0] sm:$0xff] %v300
  %365 = vst [vmem:[%s3 + $0xb8] sm:$0xff] %v301
  %366 = vst [vmem:[%s3 + $0xc0] sm:$0xff] %v302
  %367 = vst [vmem:[%s3 + $0xc8] sm:$0xff] %v303
  %368 = vst [vmem:[%s3 + $0xd0] sm:$0xff] %v304
  %369 = vst [vmem:[%s3 + $0xd8] sm:$0xff] %v305
  %370 = vst [vmem:[%s3 + $0xe0] sm:$0xff] %v306
  %371 = vst [vmem:[%s3 + $0xe8] sm:$0xff] %v307
  %372 = vst [vmem:[%s3 + $0xf0] sm:$0xff] %v308
  %373 = vst [vmem:[%s3 + $0xf8] sm:$0xff] %v309
  %374 = vst [vmem:[%s3 + $0x100] sm:$0xff] %v310
  %375 = vst [vmem:[%s3 + $0x108] sm:$0xff] %v311
  %376 = vst [vmem:[%s3 + $0x110] sm:$0xff] %v312
  %377 = vst [vmem:[%s3 + $0x118] sm:$0xff] %v313
  %378 = vst [vmem:[%s3 + $0x120] sm:$0xff] %v314
  %379 = vst [vmem:[%s3 + $0x128] sm:$0xff] %v315
  %380 = vst [vmem:[%s3 + $0x130] sm:$0xff] %v316
  %381 = vst [vmem:[%s3 + $0x138] sm:$0xff] %v317
  %382 = vst [vmem:[%s3 + $0x140] sm:$0xff] %v318
  %383 = vst [vmem:[%s3 + $0x148] sm:$0xff] %v319
  %384 = vst [vmem:[%s3 + $0x150] sm:$0xff] %v320
  %385 = vst [vmem:[%s3 + $0x158] sm:$0xff] %v321
  %386 = vst [vmem:[%s3 + $0x160] sm:$0xff] %v322
  %387 = vst [vmem:[%s3 + $0x168] sm:$0xff] %v323
  %388 = vst [vmem:[%s3 + $0x170] sm:$0xff] %v324
  %389 = vst [vmem:[%s3 + $0x178] sm:$0xff] %v325
  %390 = vst [vmem:[%s3 + $0x180] sm:$0xff] %v326
  %391 = vst [vmem:[%s3 + $0x188] sm:$0xff] %v327
  %392 = vst [vmem:[%s3 + $0x190] sm:$0xff] %v328
  %393 = vst [vmem:[%s3 + $0x198] sm:$0xff] %v329
  %394 = vst [vmem:[%s3 + $0x1a0] sm:$0xff] %v330
  %395 = vst [vmem:[%s3 + $0x1a8] sm:$0xff] %v331
  %396 = vst [vmem:[%s3 + $0x1b0] sm:$0xff] %v332
  %397 = vst [vmem:[%s3 + $0x1b8] sm:$0xff] %v333
  %398 = vst [vmem:[%s3 + $0x1c0] sm:$0xff] %v334
  %399 = vst [vmem:[%s3 + $0x1c8] sm:$0xff] %v335
  %400 = vst [vmem:[%s3 + $0x1d0] sm:$0xff] %v336
  %401 = vst [vmem:[%s3 + $0x1d8] sm:$0xff] %v337
  %402 = vst [vmem:[%s3 + $0x1e0] sm:$0xff] %v338
  %403 = vst [vmem:[%s3 + $0x1e8] sm:$0xff] %v339
  %404 = vst [vmem:[%s3 + $0x1f0] sm:$0xff] %v340
  %405 = vst [vmem:[%s3 + $0x1f8] sm:$0xff] %v341
  // Predicated region
  $region14: #{expanding_block_forward.7} parent=0 // pred_check
    _
  $region15: #{expanding_block_forward.7} parent=0 // pred_check_branch
    %407 = sbr.rel (0) target = $region17
  $region16: #{expanding_block_forward.7} parent=0 // pred_region
    _
  $region17: #{expanding_block_forward.7} parent=0 // pred_fallthru
    _
  // Predicated region
  $region18: #{expanding_block_forward.7} parent=0 // pred_check
    _
  $region19: #{expanding_block_forward.7} parent=0 // pred_check_branch
    %409 = sbr.rel (0) target = $region21
  $region20: #{expanding_block_forward.7} parent=0 // pred_region
    _
  $region21: #{expanding_block_forward.7} parent=0 // pred_fallthru
    _

// kernel: expanding_block_forward.6
$region0: #{expanding_block_forward.6}
  #allocation0 [shape = 'u32[]', space=smem, size = 0x4, offset = 0x4, fixed_abs, tag = 'smem constant byte address 0x4 - core index']
  #allocation1 [shape = 'u32[72,128]{1,0:T(1,128)}', space=vmem, size = 0x9000, scoped, tag = 'internal scratch']
  %s0 = inlined_call_operand.vmem [shape: bf16[2,18,18,128], index: 0, kind: input, shape index: {}]
  %s1 = inlined_call_operand.vmem [shape: bf16[3,3,128,128], index: 1, kind: input, shape index: {}]
  %s2 = inlined_call_operand.vmem [shape: f32[1,128], index: 2, kind: input, shape index: {}]
  %s3 = inlined_call_operand.vmem [shape: f32[1,128], index: 3, kind: input, shape index: {}]
  %s4 = inlined_call_operand.vmem [shape: bf16[2,16,16,128], index: 4, kind: output, shape index: {0}]
  %s5 = inlined_call_operand.vmem [shape: f32[2,16,1,128], index: 5, kind: output, shape index: {1}]
  %s6 = inlined_call_operand.vmem [shape: f32[2,16,1,128], index: 6, kind: output, shape index: {2}]
  %7 = xla_tuple %s4, %s5, %s6
  %s8 = sld [smem:[#allocation0]]
  $region65: #{expanding_block_forward.6} parent=0
    _
  %s10 = ssub.s32 1, %s8
  %s11 = scalar_select 0, %s10, %s8
  loop: start=0, step=1, limit=34
  $region2: #{expanding_block_forward.6} parent=0 // loop_pre_header
    _
  $region3: #{expanding_block_forward.6} parent=0 // loop_header
    %s13 = sphi 0, %s17
    %p14 = scmp.ge.s32.totalorder %s13, 34
    %s20 = sphi 0, %s32
    %s21 = sphi 0, %s28
    %s22 = sphi 0, %s20
    %s23 = sphi 0, %s21
    %s24 = sphi 0, %s22
    %s25 = sphi 0, %s23
    %s35 = sphi 0, %s37
    %s38 = sphi 0, %s35
    %s39 = sphi 0, %s38
    %s55 = sphi 0, %s39
    %s59 = sphi 0, %s59
    %s61 = sphi 0, %s59
    %s62 = sphi 0, %s61
    %s76 = sphi 0, %s62
    %s80 = sphi 0, %s80
    %s82 = sphi 0, %s80
    %s83 = sphi 0, %s82
    %s97 = sphi 0, %s83
    %s101 = sphi 0, %s101
    %s103 = sphi 0, %s101
    %s104 = sphi 0, %s103
    %s118 = sphi 0, %s104
    %s126 = sphi 0, %s128
    %s129 = sphi 0, %s126
    %s130 = sphi 0, %s129
    %s146 = sphi 0, %s130
    %s154 = sphi 0, %s156
    %s157 = sphi 0, %s154
    %s158 = sphi 0, %s157
    %s174 = sphi 0, %s158
    %s182 = sphi 0, %s184
    %s185 = sphi 0, %s182
    %s186 = sphi 0, %s185
    %s202 = sphi 0, %s186
  $region4: #{expanding_block_forward.6} parent=0 // loop_header_branch
    %16 = sbr.rel (%p14) target = $region8
  $region5: #{expanding_block_forward.6} parent=0 // loop_body
    %s18 = ssub.s32 %s13, 1
    %s19 = ssub.s32 %s13, 2
    %s26 = sadd.s32 1, %s21
    %p27 = scmp.ge.s32.totalorder %s26, 16
    %s28 = scalar_select %p27, 0, %s26
    %s29 = sadd.s32 1, %s20
    %s30 = scalar_select %p27, %s29, %s20
    %p31 = scmp.ge.s32.totalorder %s30, 2
    %s32 = scalar_select %p31, 0, %s30
    %s33 = ssub.s32 %s20, %s32
    %p34 = scmp.eq.s32.totalorder %s33, 0
    %s36 = sadd.s32 %s35, 1
    %s37 = scalar_select %p34, %s35, %s36
    %p40 = pneg %p34
    %p41 = scmp.eq.s32.totalorder %s13, 31
    %p42 = por %p40, %p41
    %p43 = scmp.ne.s32.totalorder %s35, %s38
    %p44 = scmp.eq.s32.totalorder %s13, 0
    %p45 = por %p43, %p44
    %p46 = scmp.ne.s32.totalorder %s35, %s38
    %p47 = scmp.eq.s32.totalorder %s18, 31
    %p48 = por %p46, %p47
    %p49 = scmp.ne.s32.totalorder %s38, %s39
    %p50 = scmp.eq.s32.totalorder %s18, 0
    %p51 = por %p49, %p50
    %p52 = scmp.ne.s32.totalorder %s38, %s39
    %p53 = scmp.eq.s32.totalorder %s19, 31
    %p54 = por %p52, %p53
    %p56 = scmp.ne.s32.totalorder %s39, %s55
    %p57 = scmp.eq.s32.totalorder %s19, 0
    %p58 = por %p56, %p57
    %s60 = sadd.s32 %s59, 1
    %p63 = scmp.eq.s32.totalorder %s13, 31
    %p64 = scmp.ne.s32.totalorder %s59, %s61
    %p65 = scmp.eq.s32.totalorder %s13, 0
    %p66 = por %p64, %p65
    %p67 = scmp.ne.s32.totalorder %s59, %s61
    %p68 = scmp.eq.s32.totalorder %s18, 31
    %p69 = por %p67, %p68
    %p70 = scmp.ne.s32.totalorder %s61, %s62
    %p71 = scmp.eq.s32.totalorder %s18, 0
    %p72 = por %p70, %p71
    %p73 = scmp.ne.s32.totalorder %s61, %s62
    %p74 = scmp.eq.s32.totalorder %s19, 31
    %p75 = por %p73, %p74
    %p77 = scmp.ne.s32.totalorder %s62, %s76
    %p78 = scmp.eq.s32.totalorder %s19, 0
    %p79 = por %p77, %p78
    %s81 = sadd.s32 %s80, 1
    %p84 = scmp.eq.s32.totalorder %s13, 31
    %p85 = scmp.ne.s32.totalorder %s80, %s82
    %p86 = scmp.eq.s32.totalorder %s13, 0
    %p87 = por %p85, %p86
    %p88 = scmp.ne.s32.totalorder %s80, %s82
    %p89 = scmp.eq.s32.totalorder %s18, 31
    %p90 = por %p88, %p89
    %p91 = scmp.ne.s32.totalorder %s82, %s83
    %p92 = scmp.eq.s32.totalorder %s18, 0
    %p93 = por %p91, %p92
    %p94 = scmp.ne.s32.totalorder %s82, %s83
    %p95 = scmp.eq.s32.totalorder %s19, 31
    %p96 = por %p94, %p95
    %p98 = scmp.ne.s32.totalorder %s83, %s97
    %p99 = scmp.eq.s32.totalorder %s19, 0
    %p100 = por %p98, %p99
    %s102 = sadd.s32 %s101, 1
    %p105 = scmp.eq.s32.totalorder %s13, 31
    %p106 = scmp.ne.s32.totalorder %s101, %s103
    %p107 = scmp.eq.s32.totalorder %s13, 0
    %p108 = por %p106, %p107
    %p109 = scmp.ne.s32.totalorder %s101, %s103
    %p110 = scmp.eq.s32.totalorder %s18, 31
    %p111 = por %p109, %p110
    %p112 = scmp.ne.s32.totalorder %s103, %s104
    %p113 = scmp.eq.s32.totalorder %s18, 0
    %p114 = por %p112, %p113
    %p115 = scmp.ne.s32.totalorder %s103, %s104
    %p116 = scmp.eq.s32.totalorder %s19, 31
    %p117 = por %p115, %p116
    %p119 = scmp.ne.s32.totalorder %s104, %s118
    %p120 = scmp.eq.s32.totalorder %s19, 0
    %p121 = por %p119, %p120
    %s122 = ssub.s32 %s20, %s32
    %s123 = ssub.s32 %s21, %s28
    %s124 = sor.u32 %s122, %s123
    %p125 = scmp.eq.s32.totalorder %s124, 0
    %s127 = sadd.s32 %s126, 1
    %s128 = scalar_select %p125, %s126, %s127
    %p131 = pneg %p125
    %p132 = scmp.eq.s32.totalorder %s13, 31
    %p133 = por %p131, %p132
    %p134 = scmp.ne.s32.totalorder %s126, %s129
    %p135 = scmp.eq.s32.totalorder %s13, 0
    %p136 = por %p134, %p135
    %p137 = scmp.ne.s32.totalorder %s126, %s129
    %p138 = scmp.eq.s32.totalorder %s18, 31
    %p139 = por %p137, %p138
    %p140 = scmp.ne.s32.totalorder %s129, %s130
    %p141 = scmp.eq.s32.totalorder %s18, 0
    %p142 = por %p140, %p141
    %p143 = scmp.ne.s32.totalorder %s129, %s130
    %p144 = scmp.eq.s32.totalorder %s19, 31
    %p145 = por %p143, %p144
    %p147 = scmp.ne.s32.totalorder %s130, %s146
    %p148 = scmp.eq.s32.totalorder %s19, 0
    %p149 = por %p147, %p148
    %s150 = ssub.s32 %s20, %s32
    %s151 = ssub.s32 %s21, %s28
    %s152 = sor.u32 %s150, %s151
    %p153 = scmp.eq.s32.totalorder %s152, 0
    %s155 = sadd.s32 %s154, 1
    %s156 = scalar_select %p153, %s154, %s155
    %p159 = pneg %p153
    %p160 = scmp.eq.s32.totalorder %s13, 31
    %p161 = por %p159, %p160
    %p162 = scmp.ne.s32.totalorder %s154, %s157
    %p163 = scmp.eq.s32.totalorder %s13, 0
    %p164 = por %p162, %p163
    %p165 = scmp.ne.s32.totalorder %s154, %s157
    %p166 = scmp.eq.s32.totalorder %s18, 31
    %p167 = por %p165, %p166
    %p168 = scmp.ne.s32.totalorder %s157, %s158
    %p169 = scmp.eq.s32.totalorder %s18, 0
    %p170 = por %p168, %p169
    %p171 = scmp.ne.s32.totalorder %s157, %s158
    %p172 = scmp.eq.s32.totalorder %s19, 31
    %p173 = por %p171, %p172
    %p175 = scmp.ne.s32.totalorder %s158, %s174
    %p176 = scmp.eq.s32.totalorder %s19, 0
    %p177 = por %p175, %p176
    %s178 = ssub.s32 %s20, %s32
    %s179 = ssub.s32 %s21, %s28
    %s180 = sor.u32 %s178, %s179
    %p181 = scmp.eq.s32.totalorder %s180, 0
    %s183 = sadd.s32 %s182, 1
    %s184 = scalar_select %p181, %s182, %s183
    %p187 = pneg %p181
    %p188 = scmp.eq.s32.totalorder %s13, 31
    %p189 = por %p187, %p188
    %p190 = scmp.ne.s32.totalorder %s182, %s185
    %p191 = scmp.eq.s32.totalorder %s13, 0
    %p192 = por %p190, %p191
    %p193 = scmp.ne.s32.totalorder %s182, %s185
    %p194 = scmp.eq.s32.totalorder %s18, 31
    %p195 = por %p193, %p194
    %p196 = scmp.ne.s32.totalorder %s185, %s186
    %p197 = scmp.eq.s32.totalorder %s18, 0
    %p198 = por %p196, %p197
    %p199 = scmp.ne.s32.totalorder %s185, %s186
    %p200 = scmp.eq.s32.totalorder %s19, 31
    %p201 = por %p199, %p200
    %p203 = scmp.ne.s32.totalorder %s186, %s202
    %p204 = scmp.eq.s32.totalorder %s19, 0
    %p205 = por %p203, %p204
    %p206 = scmp.le.s32.totalorder 1, %s13
    %p207 = scmp.lt.s32.totalorder %s13, 33
    %p208 = pnand %p206, %p207
    %p209 = pneg %p208
    // Predicated region
    $region9: #{expanding_block_forward.6} parent=5 // pred_check
      _
    $region10: #{expanding_block_forward.6} parent=5 // pred_check_branch
      %211 = sbr.rel (%p208) target = $region12
    $region11: #{expanding_block_forward.6} parent=5 // pred_region
      %s212 = ssub.s32 %s13, 1
      // Predicated region
      $region13: #{expanding_block_forward.6} parent=11 // pred_check
        %p213 = pneg %p72
      $region14: #{expanding_block_forward.6} parent=11 // pred_check_branch
        %215 = sbr.rel (%p213) target = $region16
      $region15: #{expanding_block_forward.6} parent=11 // pred_region
        _
      $region16: #{expanding_block_forward.6} parent=11 // pred_fallthru
        _
      // Predicated region
      $region17: #{expanding_block_forward.6} parent=11 // pred_check
        %p216 = pneg %p93
      $region18: #{expanding_block_forward.6} parent=11 // pred_check_branch
        %218 = sbr.rel (%p216) target = $region20
      $region19: #{expanding_block_forward.6} parent=11 // pred_region
        _
      $region20: #{expanding_block_forward.6} parent=11 // pred_fallthru
        _
      // Predicated region
      $region21: #{expanding_block_forward.6} parent=11 // pred_check
        %p219 = pneg %p114
      $region22: #{expanding_block_forward.6} parent=11 // pred_check_branch
        %221 = sbr.rel (%p219) target = $region24
      $region23: #{expanding_block_forward.6} parent=11 // pred_region
        _
      $region24: #{expanding_block_forward.6} parent=11 // pred_fallthru
        _
    $region12: #{expanding_block_forward.6} parent=5 // pred_fallthru
      _
    %p222 = scmp.lt.s32.totalorder %s13, 32
    // Predicated region
    $region25: #{expanding_block_forward.6} parent=5 // pred_check
      %p223 = pneg %p222
    $region26: #{expanding_block_forward.6} parent=5 // pred_check_branch
      %225 = sbr.rel (%p223) target = $region28
    $region27: #{expanding_block_forward.6} parent=5 // pred_region
      // Predicated region
      $region29: #{expanding_block_forward.6} parent=27 // pred_check
        %p226 = pneg %p45
      $region30: #{expanding_block_forward.6} parent=27 // pred_check_branch
        %228 = sbr.rel (%p226) target = $region32
      $region31: #{expanding_block_forward.6} parent=27 // pred_region
        %p229 = scmp.lt.s32.totalorder %s20, 1
        %s230 = scalar_select %p229, %s20, 1
        %s231 = smul.addr %s230, 54
        %s232 = smul.addr %s231, 4
        %s233 = scalar_lea.vmem %s0, %s232
      $region32: #{expanding_block_forward.6} parent=27 // pred_fallthru
        _
    $region28: #{expanding_block_forward.6} parent=5 // pred_fallthru
      _
    %p234 = scmp.le.s32.totalorder 1, %s13
    %p235 = scmp.lt.s32.totalorder %s13, 33
    %p236 = pnand %p234, %p235
    %p237 = pneg %p236
    // Predicated region
    $region33: #{expanding_block_forward.6} parent=5 // pred_check
      _
    $region34: #{expanding_block_forward.6} parent=5 // pred_check_branch
      %239 = sbr.rel (%p236) target = $region36
    $region35: #{expanding_block_forward.6} parent=5 // pred_region
      %s240 = ssub.s32 %s13, 1
      %p241 = scmp.lt.s32.totalorder %s22, 1
      %s242 = scalar_select %p241, %s22, 1
      %s243 = smul.addr %s242, 54
      %s244 = smul.addr %s243, 4
      %s245 = scalar_lea.vmem %s0, %s244
      %p246 = pneg %p51
      %p247 = pneg %p48
      %p248 = pneg %p72
      %p249 = pneg %p69
      %p250 = pneg %p93
      %p251 = pneg %p90
      %p252 = pneg %p114
      %p253 = pneg %p111
      %p254 = pneg %p142
      %p255 = pneg %p139
      %p256 = scmp.lt.s32.totalorder %s22, 1
      %s257 = scalar_select %p256, %s22, 1
      %p258 = scmp.lt.s32.totalorder %s23, 15
      %s259 = scalar_select %p258, %s23, 15
      %s260 = smul.addr %s259, 2
      %s261 = smul.addr %s257, 32
      %s262 = sadd.s32 %s260, %s261
      %s263 = smul.addr %s262, 4
      %s264 = scalar_lea.vmem %s4, %s263
      %p265 = pneg %p170
      %p266 = pneg %p167
      %p267 = scmp.lt.s32.totalorder %s22, 1
      %s268 = scalar_select %p267, %s22, 1
      %p269 = scmp.lt.s32.totalorder %s23, 15
      %s270 = scalar_select %p269, %s23, 15
      %s271 = smul.addr %s268, 16
      %s272 = sadd.s32 %s270, %s271
      %s273 = scalar_lea.vmem %s5, %s272
      %p274 = pneg %p198
      %p275 = pneg %p195
      %p276 = scmp.lt.s32.totalorder %s22, 1
      %s277 = scalar_select %p276, %s22, 1
      %p278 = scmp.lt.s32.totalorder %s23, 15
      %s279 = scalar_select %p278, %s23, 15
      %s280 = smul.addr %s277, 16
      %s281 = sadd.s32 %s279, %s280
      %s282 = scalar_lea.vmem %s6, %s281
      %p283 = scmp.lt.s32.totalorder %s22, 1
      %s284 = scalar_select %p283, %s22, 1
      %s285 = smul.addr %s284, 54
      %s286 = smul.addr %s285, 4
      %s287 = scalar_lea.vmem %s0, %s286
      %p288 = scmp.lt.s32.totalorder %s22, 1
      %s289 = scalar_select %p288, %s22, 1
      %p290 = scmp.lt.s32.totalorder %s23, 15
      %s291 = scalar_select %p290, %s23, 15
      %s292 = smul.addr %s291, 2
      %s293 = smul.addr %s289, 32
      %s294 = sadd.s32 %s292, %s293
      %s295 = smul.addr %s294, 4
      %s296 = scalar_lea.vmem %s4, %s295
      %p297 = scmp.lt.s32.totalorder %s22, 1
      %s298 = scalar_select %p297, %s22, 1
      %p299 = scmp.lt.s32.totalorder %s23, 15
      %s300 = scalar_select %p299, %s23, 15
      %s301 = smul.addr %s298, 16
      %s302 = sadd.s32 %s300, %s301
      %s303 = scalar_lea.vmem %s5, %s302
      %p304 = scmp.lt.s32.totalorder %s22, 1
      %s305 = scalar_select %p304, %s22, 1
      %p306 = scmp.lt.s32.totalorder %s23, 15
      %s307 = scalar_select %p306, %s23, 15
      %s308 = smul.addr %s305, 16
      %s309 = sadd.s32 %s307, %s308
      %s310 = scalar_lea.vmem %s6, %s309
      %v311 = vld [vmem:[%s2] sm:$0x1]
      %v312 = vld [vmem:[%s3] sm:$0x1]
      %v313 = vlaneseq
      %v314 = vshrl.u32 %v313, 7
      %v315 = vadd.s32 %v314, 8
      %vm316 = vcmp.ge.s32.totalorder %v314, 1
      %vm317 = vcmp.ge.s32.totalorder %v315, 1
      %vm318 = vcmp.ge.s32.totalorder %v314, 0
      %vm319 = vcmp.ge.s32.totalorder %v315, 0
      %vm320 = vcmp.le.s32.totalorder %v314, 14
      %vm321 = vcmp.le.s32.totalorder %v315, 14
      %p322 = scmp.ge.s32.totalorder %s23, 1
      %p323 = scmp.le.s32.totalorder %s23, 16
      %p324 = pnand %p322, %p323
      %p325 = pneg %p324
      %s326 = smul.u32 %s23, 3
      %s327 = smul.addr %s326, 4
      %s328 = scalar_lea.vmem %s287, %s327
      %v329 = vld [vmem:[%s328] sm:$0xf]
      %v330 = vld [vmem:[%s328 + $0x4] sm:$0xf]
      %v331 = vunpack.c.l.bf16 %v329
      %v332 = vunpack.c.l.bf16 %v330
      %v334 = vperm.slane %v311, 0
      %v336 = vmul.f32 %v331, %v334
      %v337 = vmul.f32 %v332, %v334
      %v339 = vperm.slane %v312, 0
      %v341 = vadd.f32 %v336, %v339
      %v342 = vadd.f32 %v337, %v339
      %v343 = vmax.f32 %v341, 0.0
      %v344 = vmax.f32 %v342, 0.0
      %s345 = scalar_select %p325, 1, 0
      %v346 = vstv %s345
      %vm347 = vcmp.eq.s32.totalorder %v346, 1
      %vm348 = vmand %vm316, %vm347
      %vm349 = vmand %vm317, %vm347
      %v350 = vsel %vm348, %v343, 0.0
      %v351 = vsel %vm349, %v344, 0.0
      %v352 = vpack.c.bf16 %v351, %v350
      %v353 = vld [vmem:[%s1] sm:$0xf]
      %v354 = vld [vmem:[%s1 + $0x4] sm:$0xf]
      %v355 = vld [vmem:[%s1 + $0x8] sm:$0xf]
      %v356 = vld [vmem:[%s1 + $0xc] sm:$0xf]
      %v357 = vld [vmem:[%s1 + $0x10] sm:$0xf]
      %v358 = vld [vmem:[%s1 + $0x14] sm:$0xf]
      %v359 = vld [vmem:[%s1 + $0x18] sm:$0xf]
      %v360 = vld [vmem:[%s1 + $0x1c] sm:$0xf]
      %v361 = vld [vmem:[%s1 + $0x20] sm:$0xf]
      %v362 = vld [vmem:[%s1 + $0x24] sm:$0xf]
      %v363 = vld [vmem:[%s1 + $0x28] sm:$0xf]
      %v364 = vld [vmem:[%s1 + $0x2c] sm:$0xf]
      %v365 = vld [vmem:[%s1 + $0x30] sm:$0xf]
      %v366 = vld [vmem:[%s1 + $0x34] sm:$0xf]
      %v367 = vld [vmem:[%s1 + $0x38] sm:$0xf]
      %v368 = vld [vmem:[%s1 + $0x3c] sm:$0xf]
      %v369 = vld [vmem:[%s328 + $0x8] sm:$0x1]
      %v370 = vunpack.c.l.bf16 %v369
      %v371 = vmul.f32 %v370, %v334
      %v372 = vadd.f32 %v371, %v339
      %v373 = vmax.f32 %v372, 0.0
      %vm374 = vmand %vm318, %vm347
      %vm375 = vmand %vm319, %vm347
      %vm379 = vcmask 1046528
      %v380 = vrot.slane %v343, 1
      %v381 = vrot.slane %v344, 1
      %v382 = vsel %vm379, %v380, %v381
      %v383 = vrot.slane %v373, 1
      %v384 = vsel %vm379, %v381, %v383
      %v387 = vsel %vm374, %v382, 0.0
      %v388 = vsel %vm375, %v384, 0.0
      %v389 = vpack.c.bf16 %v388, %v387
      %s390 = scalar_lea.vmem %s1, 64
      %v391 = vld [vmem:[%s390] sm:$0xf]
      %v392 = vld [vmem:[%s390 + $0x4] sm:$0xf]
      %v393 = vld [vmem:[%s390 + $0x8] sm:$0xf]
      %v394 = vld [vmem:[%s390 + $0xc] sm:$0xf]
      %v395 = vld [vmem:[%s390 + $0x10] sm:$0xf]
      %v396 = vld [vmem:[%s390 + $0x14] sm:$0xf]
      %v397 = vld [vmem:[%s390 + $0x18] sm:$0xf]
      %v398 = vld [vmem:[%s390 + $0x1c] sm:$0xf]
      %v399 = vld [vmem:[%s390 + $0x20] sm:$0xf]
      %v400 = vld [vmem:[%s390 + $0x24] sm:$0xf]
      %v401 = vld [vmem:[%s390 + $0x28] sm:$0xf]
      %v402 = vld [vmem:[%s390 + $0x2c] sm:$0xf]
      %v403 = vld [vmem:[%s390 + $0x30] sm:$0xf]
      %v404 = vld [vmem:[%s390 + $0x34] sm:$0xf]
      %v405 = vld [vmem:[%s390 + $0x38] sm:$0xf]
      %v406 = vld [vmem:[%s390 + $0x3c] sm:$0xf]
      %v423 = vunpack.c.l.b16 %v391
      %v424 = vunpack.c.l.b16 %v392
      %v425 = vunpack.c.l.b16 %v393
      %v426 = vunpack.c.l.b16 %v394
      %v427 = vunpack.c.l.b16 %v395
      %v428 = vunpack.c.l.b16 %v396
      %v429 = vunpack.c.l.b16 %v397
      %v430 = vunpack.c.l.b16 %v398
      %v431 = vunpack.c.l.b16 %v399
      %v432 = vunpack.c.l.b16 %v400
      %v433 = vunpack.c.l.b16 %v401
      %v434 = vunpack.c.l.b16 %v402
      %v435 = vunpack.c.l.b16 %v403
      %v436 = vunpack.c.l.b16 %v404
      %v437 = vunpack.c.l.b16 %v405
      %v438 = vunpack.c.l.b16 %v406
      %v439 = vpack.c.b16 %v424, %v423
      %v440 = vpack.c.b16 %v426, %v425
      %v441 = vpack.c.b16 %v428, %v427
      %v442 = vpack.c.b16 %v430, %v429
      %v443 = vpack.c.b16 %v432, %v431
      %v444 = vpack.c.b16 %v434, %v433
      %v445 = vpack.c.b16 %v436, %v435
      %v446 = vpack.c.b16 %v438, %v437
      %455 = vmatpush.bf16.msra.mxu0 %v446
      %456 = vmatpush.bf16.msra.mxu0 %v445
      %457 = vmatpush.bf16.msra.mxu0 %v444
      %458 = vmatpush.bf16.msra.mxu0 %v443
      %459 = vmatpush.bf16.msra.mxu0 %v442
      %460 = vmatpush.bf16.msra.mxu0 %v441
      %461 = vmatpush.bf16.msra.mxu0 %v440
      %462 = vmatpush.bf16.msra.mxu0 %v439
      %463 = vmatmul.bf16.gmra.mxu0 %v389
      %v464 = vpop.f32.mrf.mxu0
      %v465 = vadd.f32 0.0, %v464
      %v466 = vpop.f32.mrf.mxu0
      %v467 = vadd.f32 0.0, %v466
      %468 = vdwg.mxu0
      %v485 = vunpack.c.l.b16 %v353
      %v486 = vunpack.c.l.b16 %v354
      %v487 = vunpack.c.l.b16 %v355
      %v488 = vunpack.c.l.b16 %v356
      %v489 = vunpack.c.l.b16 %v357
      %v490 = vunpack.c.l.b16 %v358
      %v491 = vunpack.c.l.b16 %v359
      %v492 = vunpack.c.l.b16 %v360
      %v493 = vunpack.c.l.b16 %v361
      %v494 = vunpack.c.l.b16 %v362
      %v495 = vunpack.c.l.b16 %v363
      %v496 = vunpack.c.l.b16 %v364
      %v497 = vunpack.c.l.b16 %v365
      %v498 = vunpack.c.l.b16 %v366
      %v499 = vunpack.c.l.b16 %v367
      %v500 = vunpack.c.l.b16 %v368
      %v501 = vpack.c.b16 %v486, %v485
      %v502 = vpack.c.b16 %v488, %v487
      %v503 = vpack.c.b16 %v490, %v489
      %v504 = vpack.c.b16 %v492, %v491
      %v505 = vpack.c.b16 %v494, %v493
      %v506 = vpack.c.b16 %v496, %v495
      %v507 = vpack.c.b16 %v498, %v497
      %v508 = vpack.c.b16 %v500, %v499
      %517 = vmatpush.bf16.msra.mxu0 %v508
      %518 = vmatpush.bf16.msra.mxu0 %v507
      %519 = vmatpush.bf16.msra.mxu0 %v506
      %520 = vmatpush.bf16.msra.mxu0 %v505
      %521 = vmatpush.bf16.msra.mxu0 %v504
      %522 = vmatpush.bf16.msra.mxu0 %v503
      %523 = vmatpush.bf16.msra.mxu0 %v502
      %524 = vmatpush.bf16.msra.mxu0 %v501
      %525 = vmatmul.bf16.gmra.mxu0 %v352
      %v526 = vpop.f32.mrf.mxu0
      %v527 = vadd.f32 %v465, %v526
      %v528 = vpop.f32.mrf.mxu0
      %v529 = vadd.f32 %v467, %v528
      %530 = vdwg.mxu0
      %v531 = vld [vmem:[%s328] sm:$0xe]
      %v532 = vunpack.c.l.bf16 %v531
      %v533 = vmul.f32 %v532, %v334
      %v534 = vadd.f32 %v533, %v339
      %v535 = vmax.f32 %v534, 0.0
      %vm536 = vmand %vm320, %vm347
      %vm537 = vmand %vm321, %vm347
      %vm539 = vcmask 1045504
      %v540 = vrot.slane %v535, 2
      %v541 = vrot.slane %v344, 2
      %v542 = vsel %vm539, %v540, %v541
      %v543 = vrot.slane %v373, 2
      %v544 = vsel %vm539, %v541, %v543
      %v547 = vsel %vm536, %v542, 0.0
      %v548 = vsel %vm537, %v544, 0.0
      %v549 = vpack.c.bf16 %v548, %v547
      %s550 = scalar_lea.vmem %s1, 128
      %v551 = vld [vmem:[%s550] sm:$0xf]
      %v552 = vld [vmem:[%s550 + $0x4] sm:$0xf]
      %v553 = vld [vmem:[%s550 + $0x8] sm:$0xf]
      %v554 = vld [vmem:[%s550 + $0xc] sm:$0xf]
      %v555 = vld [vmem:[%s550 + $0x10] sm:$0xf]
      %v556 = vld [vmem:[%s550 + $0x14] sm:$0xf]
      %v557 = vld [vmem:[%s550 + $0x18] sm:$0xf]
      %v558 = vld [vmem:[%s550 + $0x1c] sm:$0xf]
      %v559 = vld [vmem:[%s550 + $0x20] sm:$0xf]
      %v560 = vld [vmem:[%s550 + $0x24] sm:$0xf]
      %v561 = vld [vmem:[%s550 + $0x28] sm:$0xf]
      %v562 = vld [vmem:[%s550 + $0x2c] sm:$0xf]
      %v563 = vld [vmem:[%s550 + $0x30] sm:$0xf]
      %v564 = vld [vmem:[%s550 + $0x34] sm:$0xf]
      %v565 = vld [vmem:[%s550 + $0x38] sm:$0xf]
      %v566 = vld [vmem:[%s550 + $0x3c] sm:$0xf]
      %v583 = vunpack.c.l.b16 %v551
      %v584 = vunpack.c.l.b16 %v552
      %v585 = vunpack.c.l.b16 %v553
      %v586 = vunpack.c.l.b16 %v554
      %v587 = vunpack.c.l.b16 %v555
      %v588 = vunpack.c.l.b16 %v556
      %v589 = vunpack.c.l.b16 %v557
      %v590 = vunpack.c.l.b16 %v558
      %v591 = vunpack.c.l.b16 %v559
      %v592 = vunpack.c.l.b16 %v560
      %v593 = vunpack.c.l.b16 %v561
      %v594 = vunpack.c.l.b16 %v562
      %v595 = vunpack.c.l.b16 %v563
      %v596 = vunpack.c.l.b16 %v564
      %v597 = vunpack.c.l.b16 %v565
      %v598 = vunpack.c.l.b16 %v566
      %v599 = vpack.c.b16 %v584, %v583
      %v600 = vpack.c.b16 %v586, %v585
      %v601 = vpack.c.b16 %v588, %v587
      %v602 = vpack.c.b16 %v590, %v589
      %v603 = vpack.c.b16 %v592, %v591
      %v604 = vpack.c.b16 %v594, %v593
      %v605 = vpack.c.b16 %v596, %v595
      %v606 = vpack.c.b16 %v598, %v597
      %615 = vmatpush.bf16.msra.mxu0 %v606
      %616 = vmatpush.bf16.msra.mxu0 %v605
      %617 = vmatpush.bf16.msra.mxu0 %v604
      %618 = vmatpush.bf16.msra.mxu0 %v603
      %619 = vmatpush.bf16.msra.mxu0 %v602
      %620 = vmatpush.bf16.msra.mxu0 %v601
      %621 = vmatpush.bf16.msra.mxu0 %v600
      %622 = vmatpush.bf16.msra.mxu0 %v599
      %623 = vmatmul.bf16.gmra.mxu0 %v549
      %v624 = vpop.f32.mrf.mxu0
      %v625 = vadd.f32 0.0, %v624
      %v626 = vpop.f32.mrf.mxu0
      %v627 = vadd.f32 0.0, %v626
      %628 = vdwg.mxu0
      %v629 = vadd.f32 %v527, %v625
      %v630 = vadd.f32 %v529, %v627
      %s631 = sadd.s32 %s23, 1
      %p632 = scmp.ge.s32.totalorder %s631, 1
      %p633 = scmp.le.s32.totalorder %s631, 16
      %p634 = pnand %p632, %p633
      %p635 = pneg %p634
      %s636 = smul.u32 %s631, 3
      %s637 = smul.addr %s636, 4
      %s638 = scalar_lea.vmem %s287, %s637
      %v639 = vld [vmem:[%s638] sm:$0xf]
      %v640 = vld [vmem:[%s638 + $0x4] sm:$0xf]
      %v641 = vunpack.c.l.bf16 %v639
      %v642 = vunpack.c.l.bf16 %v640
      %v643 = vmul.f32 %v641, %v334
      %v644 = vmul.f32 %v642, %v334
      %v645 = vadd.f32 %v643, %v339
      %v646 = vadd.f32 %v644, %v339
      %v647 = vmax.f32 %v645, 0.0
      %v648 = vmax.f32 %v646, 0.0
      %s649 = scalar_select %p635, 1, 0
      %v650 = vstv %s649
      %vm651 = vcmp.eq.s32.totalorder %v650, 1
      %vm652 = vmand %vm316, %vm651
      %vm653 = vmand %vm317, %vm651
      %v654 = vsel %vm652, %v647, 0.0
      %v655 = vsel %vm653, %v648, 0.0
      %v656 = vpack.c.bf16 %v655, %v654
      %s657 = scalar_lea.vmem %s1, 192
      %v658 = vld [vmem:[%s657] sm:$0xf]
      %v659 = vld [vmem:[%s657 + $0x4] sm:$0xf]
      %v660 = vld [vmem:[%s657 + $0x8] sm:$0xf]
      %v661 = vld [vmem:[%s657 + $0xc] sm:$0xf]
      %v662 = vld [vmem:[%s657 + $0x10] sm:$0xf]
      %v663 = vld [vmem:[%s657 + $0x14] sm:$0xf]
      %v664 = vld [vmem:[%s657 + $0x18] sm:$0xf]
      %v665 = vld [vmem:[%s657 + $0x1c] sm:$0xf]
      %v666 = vld [vmem:[%s657 + $0x20] sm:$0xf]
      %v667 = vld [vmem:[%s657 + $0x24] sm:$0xf]
      %v668 = vld [vmem:[%s657 + $0x28] sm:$0xf]
      %v669 = vld [vmem:[%s657 + $0x2c] sm:$0xf]
      %v670 = vld [vmem:[%s657 + $0x30] sm:$0xf]
      %v671 = vld [vmem:[%s657 + $0x34] sm:$0xf]
      %v672 = vld [vmem:[%s657 + $0x38] sm:$0xf]
      %v673 = vld [vmem:[%s657 + $0x3c] sm:$0xf]
      %v690 = vunpack.c.l.b16 %v658
      %v691 = vunpack.c.l.b16 %v659
      %v692 = vunpack.c.l.b16 %v660
      %v693 = vunpack.c.l.b16 %v661
      %v694 = vunpack.c.l.b16 %v662
      %v695 = vunpack.c.l.b16 %v663
      %v696 = vunpack.c.l.b16 %v664
      %v697 = vunpack.c.l.b16 %v665
      %v698 = vunpack.c.l.b16 %v666
      %v699 = vunpack.c.l.b16 %v667
      %v700 = vunpack.c.l.b16 %v668
      %v701 = vunpack.c.l.b16 %v669
      %v702 = vunpack.c.l.b16 %v670
      %v703 = vunpack.c.l.b16 %v671
      %v704 = vunpack.c.l.b16 %v672
      %v705 = vunpack.c.l.b16 %v673
      %v706 = vpack.c.b16 %v691, %v690
      %v707 = vpack.c.b16 %v693, %v692
      %v708 = vpack.c.b16 %v695, %v694
      %v709 = vpack.c.b16 %v697, %v696
      %v710 = vpack.c.b16 %v699, %v698
      %v711 = vpack.c.b16 %v701, %v700
      %v712 = vpack.c.b16 %v703, %v702
      %v713 = vpack.c.b16 %v705, %v704
      %722 = vmatpush.bf16.msra.mxu0 %v713
      %723 = vmatpush.bf16.msra.mxu0 %v712
      %724 = vmatpush.bf16.msra.mxu0 %v711
      %725 = vmatpush.bf16.msra.mxu0 %v710
      %726 = vmatpush.bf16.msra.mxu0 %v709
      %727 = vmatpush.bf16.msra.mxu0 %v708
      %728 = vmatpush.bf16.msra.mxu0 %v707
      %729 = vmatpush.bf16.msra.mxu0 %v706
      %730 = vmatmul.bf16.gmra.mxu0 %v656
      %v731 = vpop.f32.mrf.mxu0
      %v732 = vadd.f32 0.0, %v731
      %v733 = vpop.f32.mrf.mxu0
      %v734 = vadd.f32 0.0, %v733
      %735 = vdwg.mxu0
      %v736 = vadd.f32 %v629, %v732
      %v737 = vadd.f32 %v630, %v734
      %v738 = vld [vmem:[%s638] sm:$0xf]
      %v739 = vld [vmem:[%s638 + $0x4] sm:$0xf]
      %v740 = vld [vmem:[%s638 + $0x8] sm:$0x1]
      %v741 = vunpack.c.l.bf16 %v738
      %v742 = vunpack.c.l.bf16 %v739
      %v743 = vunpack.c.l.bf16 %v740
      %v744 = vmul.f32 %v741, %v334
      %v745 = vmul.f32 %v742, %v334
      %v746 = vmul.f32 %v743, %v334
      %v747 = vadd.f32 %v744, %v339
      %v748 = vadd.f32 %v745, %v339
      %v749 = vadd.f32 %v746, %v339
      %v750 = vmax.f32 %v747, 0.0
      %v751 = vmax.f32 %v748, 0.0
      %v752 = vmax.f32 %v749, 0.0
      %vm753 = vmand %vm318, %vm651
      %vm754 = vmand %vm319, %vm651
      %v758 = vrot.slane %v750, 1
      %v759 = vrot.slane %v751, 1
      %v760 = vsel %vm379, %v758, %v759
      %v761 = vrot.slane %v752, 1
      %v762 = vsel %vm379, %v759, %v761
      %v765 = vsel %vm753, %v760, 0.0
      %v766 = vsel %vm754, %v762, 0.0
      %v767 = vpack.c.bf16 %v766, %v765
      %s768 = scalar_lea.vmem %s1, 256
      %v769 = vld [vmem:[%s768] sm:$0xf]
      %v770 = vld [vmem:[%s768 + $0x4] sm:$0xf]
      %v771 = vld [vmem:[%s768 + $0x8] sm:$0xf]
      %v772 = vld [vmem:[%s768 + $0xc] sm:$0xf]
      %v773 = vld [vmem:[%s768 + $0x10] sm:$0xf]
      %v774 = vld [vmem:[%s768 + $0x14] sm:$0xf]
      %v775 = vld [vmem:[%s768 + $0x18] sm:$0xf]
      %v776 = vld [vmem:[%s768 + $0x1c] sm:$0xf]
      %v777 = vld [vmem:[%s768 + $0x20] sm:$0xf]
      %v778 = vld [vmem:[%s768 + $0x24] sm:$0xf]
      %v779 = vld [vmem:[%s768 + $0x28] sm:$0xf]
      %v780 = vld [vmem:[%s768 + $0x2c] sm:$0xf]
      %v781 = vld [vmem:[%s768 + $0x30] sm:$0xf]
      %v782 = vld [vmem:[%s768 + $0x34] sm:$0xf]
      %v783 = vld [vmem:[%s768 + $0x38] sm:$0xf]
      %v784 = vld [vmem:[%s768 + $0x3c] sm:$0xf]
      %v801 = vunpack.c.l.b16 %v769
      %v802 = vunpack.c.l.b16 %v770
      %v803 = vunpack.c.l.b16 %v771
      %v804 = vunpack.c.l.b16 %v772
      %v805 = vunpack.c.l.b16 %v773
      %v806 = vunpack.c.l.b16 %v774
      %v807 = vunpack.c.l.b16 %v775
      %v808 = vunpack.c.l.b16 %v776
      %v809 = vunpack.c.l.b16 %v777
      %v810 = vunpack.c.l.b16 %v778
      %v811 = vunpack.c.l.b16 %v779
      %v812 = vunpack.c.l.b16 %v780
      %v813 = vunpack.c.l.b16 %v781
      %v814 = vunpack.c.l.b16 %v782
      %v815 = vunpack.c.l.b16 %v783
      %v816 = vunpack.c.l.b16 %v784
      %v817 = vpack.c.b16 %v802, %v801
      %v818 = vpack.c.b16 %v804, %v803
      %v819 = vpack.c.b16 %v806, %v805
      %v820 = vpack.c.b16 %v808, %v807
      %v821 = vpack.c.b16 %v810, %v809
      %v822 = vpack.c.b16 %v812, %v811
      %v823 = vpack.c.b16 %v814, %v813
      %v824 = vpack.c.b16 %v816, %v815
      %833 = vmatpush.bf16.msra.mxu0 %v824
      %834 = vmatpush.bf16.msra.mxu0 %v823
      %835 = vmatpush.bf16.msra.mxu0 %v822
      %836 = vmatpush.bf16.msra.mxu0 %v821
      %837 = vmatpush.bf16.msra.mxu0 %v820
      %838 = vmatpush.bf16.msra.mxu0 %v819
      %839 = vmatpush.bf16.msra.mxu0 %v818
      %840 = vmatpush.bf16.msra.mxu0 %v817
      %841 = vmatmul.bf16.gmra.mxu0 %v767
      %v842 = vpop.f32.mrf.mxu0
      %v843 = vadd.f32 0.0, %v842
      %v844 = vpop.f32.mrf.mxu0
      %v845 = vadd.f32 0.0, %v844
      %846 = vdwg.mxu0
      %v847 = vadd.f32 %v736, %v843
      %v848 = vadd.f32 %v737, %v845
      %v849 = vld [vmem:[%s638] sm:$0xe]
      %v850 = vunpack.c.l.bf16 %v849
      %v851 = vmul.f32 %v850, %v334
      %v852 = vadd.f32 %v851, %v339
      %v853 = vmax.f32 %v852, 0.0
      %vm854 = vmand %vm320, %vm651
      %vm855 = vmand %vm321, %vm651
      %v857 = vrot.slane %v853, 2
      %v858 = vrot.slane %v751, 2
      %v859 = vsel %vm539, %v857, %v858
      %v860 = vrot.slane %v752, 2
      %v861 = vsel %vm539, %v858, %v860
      %v864 = vsel %vm854, %v859, 0.0
      %v865 = vsel %vm855, %v861, 0.0
      %v866 = vpack.c.bf16 %v865, %v864
      %s867 = scalar_lea.vmem %s1, 320
      %v868 = vld [vmem:[%s867] sm:$0xf]
      %v869 = vld [vmem:[%s867 + $0x4] sm:$0xf]
      %v870 = vld [vmem:[%s867 + $0x8] sm:$0xf]
      %v871 = vld [vmem:[%s867 + $0xc] sm:$0xf]
      %v872 = vld [vmem:[%s867 + $0x10] sm:$0xf]
      %v873 = vld [vmem:[%s867 + $0x14] sm:$0xf]
      %v874 = vld [vmem:[%s867 + $0x18] sm:$0xf]
      %v875 = vld [vmem:[%s867 + $0x1c] sm:$0xf]
      %v876 = vld [vmem:[%s867 + $0x20] sm:$0xf]
      %v877 = vld [vmem:[%s867 + $0x24] sm:$0xf]
      %v878 = vld [vmem:[%s867 + $0x28] sm:$0xf]
      %v879 = vld [vmem:[%s867 + $0x2c] sm:$0xf]
      %v880 = vld [vmem:[%s867 + $0x30] sm:$0xf]
      %v881 = vld [vmem:[%s867 + $0x34] sm:$0xf]
      %v882 = vld [vmem:[%s867 + $0x38] sm:$0xf]
      %v883 = vld [vmem:[%s867 + $0x3c] sm:$0xf]
      %v900 = vunpack.c.l.b16 %v868
      %v901 = vunpack.c.l.b16 %v869
      %v902 = vunpack.c.l.b16 %v870
      %v903 = vunpack.c.l.b16 %v871
      %v904 = vunpack.c.l.b16 %v872
      %v905 = vunpack.c.l.b16 %v873
      %v906 = vunpack.c.l.b16 %v874
      %v907 = vunpack.c.l.b16 %v875
      %v908 = vunpack.c.l.b16 %v876
      %v909 = vunpack.c.l.b16 %v877
      %v910 = vunpack.c.l.b16 %v878
      %v911 = vunpack.c.l.b16 %v879
      %v912 = vunpack.c.l.b16 %v880
      %v913 = vunpack.c.l.b16 %v881
      %v914 = vunpack.c.l.b16 %v882
      %v915 = vunpack.c.l.b16 %v883
      %v916 = vpack.c.b16 %v901, %v900
      %v917 = vpack.c.b16 %v903, %v902
      %v918 = vpack.c.b16 %v905, %v904
      %v919 = vpack.c.b16 %v907, %v906
      %v920 = vpack.c.b16 %v909, %v908
      %v921 = vpack.c.b16 %v911, %v910
      %v922 = vpack.c.b16 %v913, %v912
      %v923 = vpack.c.b16 %v915, %v914
      %932 = vmatpush.bf16.msra.mxu0 %v923
      %933 = vmatpush.bf16.msra.mxu0 %v922
      %934 = vmatpush.bf16.msra.mxu0 %v921
      %935 = vmatpush.bf16.msra.mxu0 %v920
      %936 = vmatpush.bf16.msra.mxu0 %v919
      %937 = vmatpush.bf16.msra.mxu0 %v918
      %938 = vmatpush.bf16.msra.mxu0 %v917
      %939 = vmatpush.bf16.msra.mxu0 %v916
      %940 = vmatmul.bf16.gmra.mxu0 %v866
      %v941 = vpop.f32.mrf.mxu0
      %v942 = vadd.f32 0.0, %v941
      %v943 = vpop.f32.mrf.mxu0
      %v944 = vadd.f32 0.0, %v943
      %945 = vdwg.mxu0
      %v946 = vadd.f32 %v847, %v942
      %v947 = vadd.f32 %v848, %v944
      %s948 = sadd.s32 %s23, 2
      %p949 = scmp.ge.s32.totalorder %s948, 1
      %p950 = scmp.le.s32.totalorder %s948, 16
      %p951 = pnand %p949, %p950
      %p952 = pneg %p951
      %s953 = smul.u32 %s948, 3
      %s954 = smul.addr %s953, 4
      %s955 = scalar_lea.vmem %s287, %s954
      %v956 = vld [vmem:[%s955] sm:$0xf]
      %v957 = vld [vmem:[%s955 + $0x4] sm:$0xf]
      %v958 = vunpack.c.l.bf16 %v956
      %v959 = vunpack.c.l.bf16 %v957
      %v960 = vmul.f32 %v958, %v334
      %v961 = vmul.f32 %v959, %v334
      %v962 = vadd.f32 %v960, %v339
      %v963 = vadd.f32 %v961, %v339
      %v964 = vmax.f32 %v962, 0.0
      %v965 = vmax.f32 %v963, 0.0
      %s966 = scalar_select %p952, 1, 0
      %v967 = vstv %s966
      %vm968 = vcmp.eq.s32.totalorder %v967, 1
      %vm969 = vmand %vm316, %vm968
      %vm970 = vmand %vm317, %vm968
      %v971 = vsel %vm969, %v964, 0.0
      %v972 = vsel %vm970, %v965, 0.0
      %v973 = vpack.c.bf16 %v972, %v971
      %s974 = scalar_lea.vmem %s1, 384
      %v975 = vld [vmem:[%s974] sm:$0xf]
      %v976 = vld [vmem:[%s974 + $0x4] sm:$0xf]
      %v977 = vld [vmem:[%s974 + $0x8] sm:$0xf]
      %v978 = vld [vmem:[%s974 + $0xc] sm:$0xf]
      %v979 = vld [vmem:[%s974 + $0x10] sm:$0xf]
      %v980 = vld [vmem:[%s974 + $0x14] sm:$0xf]
      %v981 = vld [vmem:[%s974 + $0x18] sm:$0xf]
      %v982 = vld [vmem:[%s974 + $0x1c] sm:$0xf]
      %v983 = vld [vmem:[%s974 + $0x20] sm:$0xf]
      %v984 = vld [vmem:[%s974 + $0x24] sm:$0xf]
      %v985 = vld [vmem:[%s974 + $0x28] sm:$0xf]
      %v986 = vld [vmem:[%s974 + $0x2c] sm:$0xf]
      %v987 = vld [vmem:[%s974 + $0x30] sm:$0xf]
      %v988 = vld [vmem:[%s974 + $0x34] sm:$0xf]
      %v989 = vld [vmem:[%s974 + $0x38] sm:$0xf]
      %v990 = vld [vmem:[%s974 + $0x3c] sm:$0xf]
      %v1007 = vunpack.c.l.b16 %v975
      %v1008 = vunpack.c.l.b16 %v976
      %v1009 = vunpack.c.l.b16 %v977
      %v1010 = vunpack.c.l.b16 %v978
      %v1011 = vunpack.c.l.b16 %v979
      %v1012 = vunpack.c.l.b16 %v980
      %v1013 = vunpack.c.l.b16 %v981
      %v1014 = vunpack.c.l.b16 %v982
      %v1015 = vunpack.c.l.b16 %v983
      %v1016 = vunpack.c.l.b16 %v984
      %v1017 = vunpack.c.l.b16 %v985
      %v1018 = vunpack.c.l.b16 %v986
      %v1019 = vunpack.c.l.b16 %v987
      %v1020 = vunpack.c.l.b16 %v988
      %v1021 = vunpack.c.l.b16 %v989
      %v1022 = vunpack.c.l.b16 %v990
      %v1023 = vpack.c.b16 %v1008, %v1007
      %v1024 = vpack.c.b16 %v1010, %v1009
      %v1025 = vpack.c.b16 %v1012, %v1011
      %v1026 = vpack.c.b16 %v1014, %v1013
      %v1027 = vpack.c.b16 %v1016, %v1015
      %v1028 = vpack.c.b16 %v1018, %v1017
      %v1029 = vpack.c.b16 %v1020, %v1019
      %v1030 = vpack.c.b16 %v1022, %v1021
      %1039 = vmatpush.bf16.msra.mxu0 %v1030
      %1040 = vmatpush.bf16.msra.mxu0 %v1029
      %1041 = vmatpush.bf16.msra.mxu0 %v1028
      %1042 = vmatpush.bf16.msra.mxu0 %v1027
      %1043 = vmatpush.bf16.msra.mxu0 %v1026
      %1044 = vmatpush.bf16.msra.mxu0 %v1025
      %1045 = vmatpush.bf16.msra.mxu0 %v1024
      %1046 = vmatpush.bf16.msra.mxu0 %v1023
      %1047 = vmatmul.bf16.gmra.mxu0 %v973
      %v1048 = vpop.f32.mrf.mxu0
      %v1049 = vadd.f32 0.0, %v1048
      %v1050 = vpop.f32.mrf.mxu0
      %v1051 = vadd.f32 0.0, %v1050
      %1052 = vdwg.mxu0
      %v1053 = vadd.f32 %v946, %v1049
      %v1054 = vadd.f32 %v947, %v1051
      %v1055 = vld [vmem:[%s955] sm:$0xf]
      %v1056 = vld [vmem:[%s955 + $0x4] sm:$0xf]
      %v1057 = vld [vmem:[%s955 + $0x8] sm:$0x1]
      %v1058 = vunpack.c.l.bf16 %v1055
      %v1059 = vunpack.c.l.bf16 %v1056
      %v1060 = vunpack.c.l.bf16 %v1057
      %v1061 = vmul.f32 %v1058, %v334
      %v1062 = vmul.f32 %v1059, %v334
      %v1063 = vmul.f32 %v1060, %v334
      %v1064 = vadd.f32 %v1061, %v339
      %v1065 = vadd.f32 %v1062, %v339
      %v1066 = vadd.f32 %v1063, %v339
      %v1067 = vmax.f32 %v1064, 0.0
      %v1068 = vmax.f32 %v1065, 0.0
      %v1069 = vmax.f32 %v1066, 0.0
      %vm1070 = vmand %vm318, %vm968
      %vm1071 = vmand %vm319, %vm968
      %v1075 = vrot.slane %v1067, 1
      %v1076 = vrot.slane %v1068, 1
      %v1077 = vsel %vm379, %v1075, %v1076
      %v1078 = vrot.slane %v1069, 1
      %v1079 = vsel %vm379, %v1076, %v1078
      %v1082 = vsel %vm1070, %v1077, 0.0
      %v1083 = vsel %vm1071, %v1079, 0.0
      %v1084 = vpack.c.bf16 %v1083, %v1082
      %s1085 = scalar_lea.vmem %s1, 448
      %v1086 = vld [vmem:[%s1085] sm:$0xf]
      %v1087 = vld [vmem:[%s1085 + $0x4] sm:$0xf]
      %v1088 = vld [vmem:[%s1085 + $0x8] sm:$0xf]
      %v1089 = vld [vmem:[%s1085 + $0xc] sm:$0xf]
      %v1090 = vld [vmem:[%s1085 + $0x10] sm:$0xf]
      %v1091 = vld [vmem:[%s1085 + $0x14] sm:$0xf]
      %v1092 = vld [vmem:[%s1085 + $0x18] sm:$0xf]
      %v1093 = vld [vmem:[%s1085 + $0x1c] sm:$0xf]
      %v1094 = vld [vmem:[%s1085 + $0x20] sm:$0xf]
      %v1095 = vld [vmem:[%s1085 + $0x24] sm:$0xf]
      %v1096 = vld [vmem:[%s1085 + $0x28] sm:$0xf]
      %v1097 = vld [vmem:[%s1085 + $0x2c] sm:$0xf]
      %v1098 = vld [vmem:[%s1085 + $0x30] sm:$0xf]
      %v1099 = vld [vmem:[%s1085 + $0x34] sm:$0xf]
      %v1100 = vld [vmem:[%s1085 + $0x38] sm:$0xf]
      %v1101 = vld [vmem:[%s1085 + $0x3c] sm:$0xf]
      %v1118 = vunpack.c.l.b16 %v1086
      %v1119 = vunpack.c.l.b16 %v1087
      %v1120 = vunpack.c.l.b16 %v1088
      %v1121 = vunpack.c.l.b16 %v1089
      %v1122 = vunpack.c.l.b16 %v1090
      %v1123 = vunpack.c.l.b16 %v1091
      %v1124 = vunpack.c.l.b16 %v1092
      %v1125 = vunpack.c.l.b16 %v1093
      %v1126 = vunpack.c.l.b16 %v1094
      %v1127 = vunpack.c.l.b16 %v1095
      %v1128 = vunpack.c.l.b16 %v1096
      %v1129 = vunpack.c.l.b16 %v1097
      %v1130 = vunpack.c.l.b16 %v1098
      %v1131 = vunpack.c.l.b16 %v1099
      %v1132 = vunpack.c.l.b16 %v1100
      %v1133 = vunpack.c.l.b16 %v1101
      %v1134 = vpack.c.b16 %v1119, %v1118
      %v1135 = vpack.c.b16 %v1121, %v1120
      %v1136 = vpack.c.b16 %v1123, %v1122
      %v1137 = vpack.c.b16 %v1125, %v1124
      %v1138 = vpack.c.b16 %v1127, %v1126
      %v1139 = vpack.c.b16 %v1129, %v1128
      %v1140 = vpack.c.b16 %v1131, %v1130
      %v1141 = vpack.c.b16 %v1133, %v1132
      %1150 = vmatpush.bf16.msra.mxu0 %v1141
      %1151 = vmatpush.bf16.msra.mxu0 %v1140
      %1152 = vmatpush.bf16.msra.mxu0 %v1139
      %1153 = vmatpush.bf16.msra.mxu0 %v1138
      %1154 = vmatpush.bf16.msra.mxu0 %v1137
      %1155 = vmatpush.bf16.msra.mxu0 %v1136
      %1156 = vmatpush.bf16.msra.mxu0 %v1135
      %1157 = vmatpush.bf16.msra.mxu0 %v1134
      %1158 = vmatmul.bf16.gmra.mxu0 %v1084
      %v1159 = vpop.f32.mrf.mxu0
      %v1160 = vadd.f32 0.0, %v1159
      %v1161 = vpop.f32.mrf.mxu0
      %v1162 = vadd.f32 0.0, %v1161
      %1163 = vdwg.mxu0
      %v1164 = vadd.f32 %v1053, %v1160
      %v1165 = vadd.f32 %v1054, %v1162
      %v1166 = vld [vmem:[%s955] sm:$0xe]
      %v1167 = vunpack.c.l.bf16 %v1166
      %v1168 = vmul.f32 %v1167, %v334
      %v1169 = vadd.f32 %v1168, %v339
      %v1170 = vmax.f32 %v1169, 0.0
      %vm1171 = vmand %vm320, %vm968
      %vm1172 = vmand %vm321, %vm968
      %v1174 = vrot.slane %v1170, 2
      %v1175 = vrot.slane %v1068, 2
      %v1176 = vsel %vm539, %v1174, %v1175
      %v1177 = vrot.slane %v1069, 2
      %v1178 = vsel %vm539, %v1175, %v1177
      %v1181 = vsel %vm1171, %v1176, 0.0
      %v1182 = vsel %vm1172, %v1178, 0.0
      %v1183 = vpack.c.bf16 %v1182, %v1181
      %s1184 = scalar_lea.vmem %s1, 512
      %v1185 = vld [vmem:[%s1184] sm:$0xf]
      %v1186 = vld [vmem:[%s1184 + $0x4] sm:$0xf]
      %v1187 = vld [vmem:[%s1184 + $0x8] sm:$0xf]
      %v1188 = vld [vmem:[%s1184 + $0xc] sm:$0xf]
      %v1189 = vld [vmem:[%s1184 + $0x10] sm:$0xf]
      %v1190 = vld [vmem:[%s1184 + $0x14] sm:$0xf]
      %v1191 = vld [vmem:[%s1184 + $0x18] sm:$0xf]
      %v1192 = vld [vmem:[%s1184 + $0x1c] sm:$0xf]
      %v1193 = vld [vmem:[%s1184 + $0x20] sm:$0xf]
      %v1194 = vld [vmem:[%s1184 + $0x24] sm:$0xf]
      %v1195 = vld [vmem:[%s1184 + $0x28] sm:$0xf]
      %v1196 = vld [vmem:[%s1184 + $0x2c] sm:$0xf]
      %v1197 = vld [vmem:[%s1184 + $0x30] sm:$0xf]
      %v1198 = vld [vmem:[%s1184 + $0x34] sm:$0xf]
      %v1199 = vld [vmem:[%s1184 + $0x38] sm:$0xf]
      %v1200 = vld [vmem:[%s1184 + $0x3c] sm:$0xf]
      %v1217 = vunpack.c.l.b16 %v1185
      %v1218 = vunpack.c.l.b16 %v1186
      %v1219 = vunpack.c.l.b16 %v1187
      %v1220 = vunpack.c.l.b16 %v1188
      %v1221 = vunpack.c.l.b16 %v1189
      %v1222 = vunpack.c.l.b16 %v1190
      %v1223 = vunpack.c.l.b16 %v1191
      %v1224 = vunpack.c.l.b16 %v1192
      %v1225 = vunpack.c.l.b16 %v1193
      %v1226 = vunpack.c.l.b16 %v1194
      %v1227 = vunpack.c.l.b16 %v1195
      %v1228 = vunpack.c.l.b16 %v1196
      %v1229 = vunpack.c.l.b16 %v1197
      %v1230 = vunpack.c.l.b16 %v1198
      %v1231 = vunpack.c.l.b16 %v1199
      %v1232 = vunpack.c.l.b16 %v1200
      %v1233 = vpack.c.b16 %v1218, %v1217
      %v1234 = vpack.c.b16 %v1220, %v1219
      %v1235 = vpack.c.b16 %v1222, %v1221
      %v1236 = vpack.c.b16 %v1224, %v1223
      %v1237 = vpack.c.b16 %v1226, %v1225
      %v1238 = vpack.c.b16 %v1228, %v1227
      %v1239 = vpack.c.b16 %v1230, %v1229
      %v1240 = vpack.c.b16 %v1232, %v1231
      %1249 = vmatpush.bf16.msra.mxu0 %v1240
      %1250 = vmatpush.bf16.msra.mxu0 %v1239
      %1251 = vmatpush.bf16.msra.mxu0 %v1238
      %1252 = vmatpush.bf16.msra.mxu0 %v1237
      %1253 = vmatpush.bf16.msra.mxu0 %v1236
      %1254 = vmatpush.bf16.msra.mxu0 %v1235
      %1255 = vmatpush.bf16.msra.mxu0 %v1234
      %1256 = vmatpush.bf16.msra.mxu0 %v1233
      %1257 = vmatmul.bf16.gmra.mxu0 %v1183
      %v1258 = vpop.f32.mrf.mxu0
      %v1259 = vadd.f32 0.0, %v1258
      %v1260 = vpop.f32.mrf.mxu0
      %v1261 = vadd.f32 0.0, %v1260
      %1262 = vdwg.mxu0
      %v1263 = vadd.f32 %v1164, %v1259
      %v1264 = vadd.f32 %v1165, %v1261
      %v1265 = vpack.c.bf16 %v1263, %v1263
      %v1266 = vpack.c.bf16 %v1264, %v1264
      %1267 = vst [vmem:[%s296] sm:$0xf] %v1265
      %1268 = vst [vmem:[%s296 + $0x4] sm:$0xf] %v1266
      %v1269 = vadd.f32 %v1263, %v1264
      %v1270 = vrot.slane %v1269, 4
      %v1271 = vadd.f32 %v1269, %v1270
      %v1272 = vrot.slane %v1271, 2
      %v1273 = vadd.f32 %v1271, %v1272
      %v1274 = vrot.slane %v1273, 1
      %v1275 = vadd.f32 %v1273, %v1274
      %1276 = vst [vmem:[%s303] sm:$0x1] %v1275
      %v1277 = vmul.f32 %v1263, %v1263
      %v1278 = vmul.f32 %v1264, %v1264
      %v1279 = vadd.f32 %v1277, %v1278
      %v1280 = vrot.slane %v1279, 4
      %v1281 = vadd.f32 %v1279, %v1280
      %v1282 = vrot.slane %v1281, 2
      %v1283 = vadd.f32 %v1281, %v1282
      %v1284 = vrot.slane %v1283, 1
      %v1285 = vadd.f32 %v1283, %v1284
      %1286 = vst [vmem:[%s310] sm:$0x1] %v1285
      %p1287 = scmp.lt.s32.totalorder %s22, 1
      %s1288 = scalar_select %p1287, %s22, 1
      %p1289 = scmp.lt.s32.totalorder %s23, 15
      %s1290 = scalar_select %p1289, %s23, 15
      %s1291 = smul.addr %s1290, 2
      %s1292 = smul.addr %s1288, 32
      %s1293 = sadd.s32 %s1291, %s1292
      %s1294 = smul.addr %s1293, 4
      %s1295 = scalar_lea.vmem %s4, %s1294
      %p1296 = scmp.lt.s32.totalorder %s22, 1
      %s1297 = scalar_select %p1296, %s22, 1
      %p1298 = scmp.lt.s32.totalorder %s23, 15
      %s1299 = scalar_select %p1298, %s23, 15
      %s1300 = smul.addr %s1297, 16
      %s1301 = sadd.s32 %s1299, %s1300
      %s1302 = scalar_lea.vmem %s5, %s1301
      %p1303 = scmp.lt.s32.totalorder %s22, 1
      %s1304 = scalar_select %p1303, %s22, 1
      %p1305 = scmp.lt.s32.totalorder %s23, 15
      %s1306 = scalar_select %p1305, %s23, 15
      %s1307 = smul.addr %s1304, 16
      %s1308 = sadd.s32 %s1306, %s1307
      %s1309 = scalar_lea.vmem %s6, %s1308
      // Predicated region
      $region37: #{expanding_block_forward.6} parent=35 // pred_check
        %p1310 = pneg %p139
      $region38: #{expanding_block_forward.6} parent=35 // pred_check_branch
        %1312 = sbr.rel (%p1310) target = $region40
      $region39: #{expanding_block_forward.6} parent=35 // pred_region
        _
      $region40: #{expanding_block_forward.6} parent=35 // pred_fallthru
        _
      // Predicated region
      $region41: #{expanding_block_forward.6} parent=35 // pred_check
        %p1313 = pneg %p167
      $region42: #{expanding_block_forward.6} parent=35 // pred_check_branch
        %1315 = sbr.rel (%p1313) target = $region44
      $region43: #{expanding_block_forward.6} parent=35 // pred_region
        _
      $region44: #{expanding_block_forward.6} parent=35 // pred_fallthru
        _
      // Predicated region
      $region45: #{expanding_block_forward.6} parent=35 // pred_check
        %p1316 = pneg %p195
      $region46: #{expanding_block_forward.6} parent=35 // pred_check_branch
        %1318 = sbr.rel (%p1316) target = $region48
      $region47: #{expanding_block_forward.6} parent=35 // pred_region
        _
      $region48: #{expanding_block_forward.6} parent=35 // pred_fallthru
        _
    $region36: #{expanding_block_forward.6} parent=5 // pred_fallthru
      _
    %p1319 = scmp.le.s32.totalorder 2, %s13
    // Predicated region
    $region49: #{expanding_block_forward.6} parent=5 // pred_check
      %p1320 = pneg %p1319
    $region50: #{expanding_block_forward.6} parent=5 // pred_check_branch
      %1322 = sbr.rel (%p1320) target = $region52
    $region51: #{expanding_block_forward.6} parent=5 // pred_region
      %s1323 = ssub.s32 %s13, 2
      // Predicated region
      $region53: #{expanding_block_forward.6} parent=51 // pred_check
        %p1324 = pneg %p145
      $region54: #{expanding_block_forward.6} parent=51 // pred_check_branch
        %1326 = sbr.rel (%p1324) target = $region56
      $region55: #{expanding_block_forward.6} parent=51 // pred_region
        %p1327 = scmp.lt.s32.totalorder %s24, 1
        %s1328 = scalar_select %p1327, %s24, 1
        %p1329 = scmp.lt.s32.totalorder %s25, 15
        %s1330 = scalar_select %p1329, %s25, 15
        %s1331 = smul.addr %s1330, 2
        %s1332 = smul.addr %s1328, 32
        %s1333 = sadd.s32 %s1331, %s1332
        %s1334 = smul.addr %s1333, 4
        %s1335 = scalar_lea.vmem %s4, %s1334
      $region56: #{expanding_block_forward.6} parent=51 // pred_fallthru
        _
      // Predicated region
      $region57: #{expanding_block_forward.6} parent=51 // pred_check
        %p1336 = pneg %p173
      $region58: #{expanding_block_forward.6} parent=51 // pred_check_branch
        %1338 = sbr.rel (%p1336) target = $region60
      $region59: #{expanding_block_forward.6} parent=51 // pred_region
        %p1339 = scmp.lt.s32.totalorder %s24, 1
        %s1340 = scalar_select %p1339, %s24, 1
        %p1341 = scmp.lt.s32.totalorder %s25, 15
        %s1342 = scalar_select %p1341, %s25, 15
        %s1343 = smul.addr %s1340, 16
        %s1344 = sadd.s32 %s1342, %s1343
        %s1345 = scalar_lea.vmem %s5, %s1344
      $region60: #{expanding_block_forward.6} parent=51 // pred_fallthru
        _
      // Predicated region
      $region61: #{expanding_block_forward.6} parent=51 // pred_check
        %p1346 = pneg %p201
      $region62: #{expanding_block_forward.6} parent=51 // pred_check_branch
        %1348 = sbr.rel (%p1346) target = $region64
      $region63: #{expanding_block_forward.6} parent=51 // pred_region
        %p1349 = scmp.lt.s32.totalorder %s24, 1
        %s1350 = scalar_select %p1349, %s24, 1
        %p1351 = scmp.lt.s32.totalorder %s25, 15
        %s1352 = scalar_select %p1351, %s25, 15
        %s1353 = smul.addr %s1350, 16
        %s1354 = sadd.s32 %s1352, %s1353
        %s1355 = scalar_lea.vmem %s6, %s1354
      $region64: #{expanding_block_forward.6} parent=51 // pred_fallthru
        _
    $region52: #{expanding_block_forward.6} parent=5 // pred_fallthru
      _
  $region6: #{expanding_block_forward.6} parent=0 // loop_footer
    %s17 = sadd.s32 1, %s13
  $region7: #{expanding_block_forward.6} parent=0 // loop_footer_branch
    %12 = sbr.rel target = $region3
  $region8: #{expanding_block_forward.6} parent=0 // loop_exit
    _

// kernel: expanding_block_forward.5
$region0: #{expanding_block_forward.5}
  #allocation0 [shape = 'u32[]', space=smem, size = 0x4, offset = 0x4, fixed_abs, tag = 'smem constant byte address 0x4 - core index']
  #allocation1 [shape = 'u32[72,128]{1,0:T(1,128)}', space=vmem, size = 0x9000, scoped, tag = 'internal scratch']
  %s0 = inlined_call_operand.vmem [shape: bf16[2,18,18,128], index: 0, kind: input, shape index: {}]
  %s1 = inlined_call_operand.vmem [shape: bf16[2,18,18,128], index: 1, kind: input, shape index: {}]
  %s2 = inlined_call_operand.vmem [shape: bf16[3,3,128,128], index: 2, kind: input, shape index: {}]
  %s3 = inlined_call_operand.vmem [shape: bf16[3,3,128,128], index: 3, kind: input, shape index: {}]
  %s4 = inlined_call_operand.vmem [shape: bf16[2,16,16,128], index: 4, kind: output, shape index: {0}]
  %s5 = inlined_call_operand.vmem [shape: f32[2,16,1,128], index: 5, kind: output, shape index: {1}]
  %s6 = inlined_call_operand.vmem [shape: f32[2,16,1,128], index: 6, kind: output, shape index: {2}]
  %7 = xla_tuple %s4, %s5, %s6
  %s8 = sld [smem:[#allocation0]]
  $region65: #{expanding_block_forward.5} parent=0
    _
  %s10 = ssub.s32 1, %s8
  %s11 = scalar_select 0, %s10, %s8
  loop: start=0, step=1, limit=34
  $region2: #{expanding_block_forward.5} parent=0 // loop_pre_header
    _
  $region3: #{expanding_block_forward.5} parent=0 // loop_header
    %s13 = sphi 0, %s17
    %p14 = scmp.ge.s32.totalorder %s13, 34
    %s20 = sphi 0, %s32
    %s21 = sphi 0, %s28
    %s22 = sphi 0, %s20
    %s23 = sphi 0, %s21
    %s24 = sphi 0, %s22
    %s25 = sphi 0, %s23
    %s35 = sphi 0, %s37
    %s38 = sphi 0, %s35
    %s39 = sphi 0, %s38
    %s55 = sphi 0, %s39
    %s61 = sphi 0, %s63
    %s64 = sphi 0, %s61
    %s65 = sphi 0, %s64
    %s81 = sphi 0, %s65
    %s85 = sphi 0, %s85
    %s87 = sphi 0, %s85
    %s88 = sphi 0, %s87
    %s102 = sphi 0, %s88
    %s106 = sphi 0, %s106
    %s108 = sphi 0, %s106
    %s109 = sphi 0, %s108
    %s123 = sphi 0, %s109
    %s131 = sphi 0, %s133
    %s134 = sphi 0, %s131
    %s135 = sphi 0, %s134
    %s151 = sphi 0, %s135
    %s159 = sphi 0, %s161
    %s162 = sphi 0, %s159
    %s163 = sphi 0, %s162
    %s179 = sphi 0, %s163
    %s187 = sphi 0, %s189
    %s190 = sphi 0, %s187
    %s191 = sphi 0, %s190
    %s207 = sphi 0, %s191
  $region4: #{expanding_block_forward.5} parent=0 // loop_header_branch
    %16 = sbr.rel (%p14) target = $region8
  $region5: #{expanding_block_forward.5} parent=0 // loop_body
    %s18 = ssub.s32 %s13, 1
    %s19 = ssub.s32 %s13, 2
    %s26 = sadd.s32 1, %s21
    %p27 = scmp.ge.s32.totalorder %s26, 16
    %s28 = scalar_select %p27, 0, %s26
    %s29 = sadd.s32 1, %s20
    %s30 = scalar_select %p27, %s29, %s20
    %p31 = scmp.ge.s32.totalorder %s30, 2
    %s32 = scalar_select %p31, 0, %s30
    %s33 = ssub.s32 %s20, %s32
    %p34 = scmp.eq.s32.totalorder %s33, 0
    %s36 = sadd.s32 %s35, 1
    %s37 = scalar_select %p34, %s35, %s36
    %p40 = pneg %p34
    %p41 = scmp.eq.s32.totalorder %s13, 31
    %p42 = por %p40, %p41
    %p43 = scmp.ne.s32.totalorder %s35, %s38
    %p44 = scmp.eq.s32.totalorder %s13, 0
    %p45 = por %p43, %p44
    %p46 = scmp.ne.s32.totalorder %s35, %s38
    %p47 = scmp.eq.s32.totalorder %s18, 31
    %p48 = por %p46, %p47
    %p49 = scmp.ne.s32.totalorder %s38, %s39
    %p50 = scmp.eq.s32.totalorder %s18, 0
    %p51 = por %p49, %p50
    %p52 = scmp.ne.s32.totalorder %s38, %s39
    %p53 = scmp.eq.s32.totalorder %s19, 31
    %p54 = por %p52, %p53
    %p56 = scmp.ne.s32.totalorder %s39, %s55
    %p57 = scmp.eq.s32.totalorder %s19, 0
    %p58 = por %p56, %p57
    %s59 = ssub.s32 %s20, %s32
    %p60 = scmp.eq.s32.totalorder %s59, 0
    %s62 = sadd.s32 %s61, 1
    %s63 = scalar_select %p60, %s61, %s62
    %p66 = pneg %p60
    %p67 = scmp.eq.s32.totalorder %s13, 31
    %p68 = por %p66, %p67
    %p69 = scmp.ne.s32.totalorder %s61, %s64
    %p70 = scmp.eq.s32.totalorder %s13, 0
    %p71 = por %p69, %p70
    %p72 = scmp.ne.s32.totalorder %s61, %s64
    %p73 = scmp.eq.s32.totalorder %s18, 31
    %p74 = por %p72, %p73
    %p75 = scmp.ne.s32.totalorder %s64, %s65
    %p76 = scmp.eq.s32.totalorder %s18, 0
    %p77 = por %p75, %p76
    %p78 = scmp.ne.s32.totalorder %s64, %s65
    %p79 = scmp.eq.s32.totalorder %s19, 31
    %p80 = por %p78, %p79
    %p82 = scmp.ne.s32.totalorder %s65, %s81
    %p83 = scmp.eq.s32.totalorder %s19, 0
    %p84 = por %p82, %p83
    %s86 = sadd.s32 %s85, 1
    %p89 = scmp.eq.s32.totalorder %s13, 31
    %p90 = scmp.ne.s32.totalorder %s85, %s87
    %p91 = scmp.eq.s32.totalorder %s13, 0
    %p92 = por %p90, %p91
    %p93 = scmp.ne.s32.totalorder %s85, %s87
    %p94 = scmp.eq.s32.totalorder %s18, 31
    %p95 = por %p93, %p94
    %p96 = scmp.ne.s32.totalorder %s87, %s88
    %p97 = scmp.eq.s32.totalorder %s18, 0
    %p98 = por %p96, %p97
    %p99 = scmp.ne.s32.totalorder %s87, %s88
    %p100 = scmp.eq.s32.totalorder %s19, 31
    %p101 = por %p99, %p100
    %p103 = scmp.ne.s32.totalorder %s88, %s102
    %p104 = scmp.eq.s32.totalorder %s19, 0
    %p105 = por %p103, %p104
    %s107 = sadd.s32 %s106, 1
    %p110 = scmp.eq.s32.totalorder %s13, 31
    %p111 = scmp.ne.s32.totalorder %s106, %s108
    %p112 = scmp.eq.s32.totalorder %s13, 0
    %p113 = por %p111, %p112
    %p114 = scmp.ne.s32.totalorder %s106, %s108
    %p115 = scmp.eq.s32.totalorder %s18, 31
    %p116 = por %p114, %p115
    %p117 = scmp.ne.s32.totalorder %s108, %s109
    %p118 = scmp.eq.s32.totalorder %s18, 0
    %p119 = por %p117, %p118
    %p120 = scmp.ne.s32.totalorder %s108, %s109
    %p121 = scmp.eq.s32.totalorder %s19, 31
    %p122 = por %p120, %p121
    %p124 = scmp.ne.s32.totalorder %s109, %s123
    %p125 = scmp.eq.s32.totalorder %s19, 0
    %p126 = por %p124, %p125
    %s127 = ssub.s32 %s20, %s32
    %s128 = ssub.s32 %s21, %s28
    %s129 = sor.u32 %s127, %s128
    %p130 = scmp.eq.s32.totalorder %s129, 0
    %s132 = sadd.s32 %s131, 1
    %s133 = scalar_select %p130, %s131, %s132
    %p136 = pneg %p130
    %p137 = scmp.eq.s32.totalorder %s13, 31
    %p138 = por %p136, %p137
    %p139 = scmp.ne.s32.totalorder %s131, %s134
    %p140 = scmp.eq.s32.totalorder %s13, 0
    %p141 = por %p139, %p140
    %p142 = scmp.ne.s32.totalorder %s131, %s134
    %p143 = scmp.eq.s32.totalorder %s18, 31
    %p144 = por %p142, %p143
    %p145 = scmp.ne.s32.totalorder %s134, %s135
    %p146 = scmp.eq.s32.totalorder %s18, 0
    %p147 = por %p145, %p146
    %p148 = scmp.ne.s32.totalorder %s134, %s135
    %p149 = scmp.eq.s32.totalorder %s19, 31
    %p150 = por %p148, %p149
    %p152 = scmp.ne.s32.totalorder %s135, %s151
    %p153 = scmp.eq.s32.totalorder %s19, 0
    %p154 = por %p152, %p153
    %s155 = ssub.s32 %s20, %s32
    %s156 = ssub.s32 %s21, %s28
    %s157 = sor.u32 %s155, %s156
    %p158 = scmp.eq.s32.totalorder %s157, 0
    %s160 = sadd.s32 %s159, 1
    %s161 = scalar_select %p158, %s159, %s160
    %p164 = pneg %p158
    %p165 = scmp.eq.s32.totalorder %s13, 31
    %p166 = por %p164, %p165
    %p167 = scmp.ne.s32.totalorder %s159, %s162
    %p168 = scmp.eq.s32.totalorder %s13, 0
    %p169 = por %p167, %p168
    %p170 = scmp.ne.s32.totalorder %s159, %s162
    %p171 = scmp.eq.s32.totalorder %s18, 31
    %p172 = por %p170, %p171
    %p173 = scmp.ne.s32.totalorder %s162, %s163
    %p174 = scmp.eq.s32.totalorder %s18, 0
    %p175 = por %p173, %p174
    %p176 = scmp.ne.s32.totalorder %s162, %s163
    %p177 = scmp.eq.s32.totalorder %s19, 31
    %p178 = por %p176, %p177
    %p180 = scmp.ne.s32.totalorder %s163, %s179
    %p181 = scmp.eq.s32.totalorder %s19, 0
    %p182 = por %p180, %p181
    %s183 = ssub.s32 %s20, %s32
    %s184 = ssub.s32 %s21, %s28
    %s185 = sor.u32 %s183, %s184
    %p186 = scmp.eq.s32.totalorder %s185, 0
    %s188 = sadd.s32 %s187, 1
    %s189 = scalar_select %p186, %s187, %s188
    %p192 = pneg %p186
    %p193 = scmp.eq.s32.totalorder %s13, 31
    %p194 = por %p192, %p193
    %p195 = scmp.ne.s32.totalorder %s187, %s190
    %p196 = scmp.eq.s32.totalorder %s13, 0
    %p197 = por %p195, %p196
    %p198 = scmp.ne.s32.totalorder %s187, %s190
    %p199 = scmp.eq.s32.totalorder %s18, 31
    %p200 = por %p198, %p199
    %p201 = scmp.ne.s32.totalorder %s190, %s191
    %p202 = scmp.eq.s32.totalorder %s18, 0
    %p203 = por %p201, %p202
    %p204 = scmp.ne.s32.totalorder %s190, %s191
    %p205 = scmp.eq.s32.totalorder %s19, 31
    %p206 = por %p204, %p205
    %p208 = scmp.ne.s32.totalorder %s191, %s207
    %p209 = scmp.eq.s32.totalorder %s19, 0
    %p210 = por %p208, %p209
    %p211 = scmp.le.s32.totalorder 1, %s13
    %p212 = scmp.lt.s32.totalorder %s13, 33
    %p213 = pnand %p211, %p212
    %p214 = pneg %p213
    // Predicated region
    $region9: #{expanding_block_forward.5} parent=5 // pred_check
      _
    $region10: #{expanding_block_forward.5} parent=5 // pred_check_branch
      %216 = sbr.rel (%p213) target = $region12
    $region11: #{expanding_block_forward.5} parent=5 // pred_region
      %s217 = ssub.s32 %s13, 1
      // Predicated region
      $region13: #{expanding_block_forward.5} parent=11 // pred_check
        %p218 = pneg %p98
      $region14: #{expanding_block_forward.5} parent=11 // pred_check_branch
        %220 = sbr.rel (%p218) target = $region16
      $region15: #{expanding_block_forward.5} parent=11 // pred_region
        _
      $region16: #{expanding_block_forward.5} parent=11 // pred_fallthru
        _
      // Predicated region
      $region17: #{expanding_block_forward.5} parent=11 // pred_check
        %p221 = pneg %p119
      $region18: #{expanding_block_forward.5} parent=11 // pred_check_branch
        %223 = sbr.rel (%p221) target = $region20
      $region19: #{expanding_block_forward.5} parent=11 // pred_region
        _
      $region20: #{expanding_block_forward.5} parent=11 // pred_fallthru
        _
    $region12: #{expanding_block_forward.5} parent=5 // pred_fallthru
      _
    %p224 = scmp.lt.s32.totalorder %s13, 32
    // Predicated region
    $region21: #{expanding_block_forward.5} parent=5 // pred_check
      %p225 = pneg %p224
    $region22: #{expanding_block_forward.5} parent=5 // pred_check_branch
      %227 = sbr.rel (%p225) target = $region24
    $region23: #{expanding_block_forward.5} parent=5 // pred_region
      // Predicated region
      $region25: #{expanding_block_forward.5} parent=23 // pred_check
        %p228 = pneg %p45
      $region26: #{expanding_block_forward.5} parent=23 // pred_check_branch
        %230 = sbr.rel (%p228) target = $region28
      $region27: #{expanding_block_forward.5} parent=23 // pred_region
        %p231 = scmp.lt.s32.totalorder %s20, 1
        %s232 = scalar_select %p231, %s20, 1
        %s233 = smul.addr %s232, 54
        %s234 = smul.addr %s233, 4
        %s235 = scalar_lea.vmem %s0, %s234
      $region28: #{expanding_block_forward.5} parent=23 // pred_fallthru
        _
      // Predicated region
      $region29: #{expanding_block_forward.5} parent=23 // pred_check
        %p236 = pneg %p71
      $region30: #{expanding_block_forward.5} parent=23 // pred_check_branch
        %238 = sbr.rel (%p236) target = $region32
      $region31: #{expanding_block_forward.5} parent=23 // pred_region
        %p239 = scmp.lt.s32.totalorder %s20, 1
        %s240 = scalar_select %p239, %s20, 1
        %s241 = smul.addr %s240, 54
        %s242 = smul.addr %s241, 4
        %s243 = scalar_lea.vmem %s1, %s242
      $region32: #{expanding_block_forward.5} parent=23 // pred_fallthru
        _
    $region24: #{expanding_block_forward.5} parent=5 // pred_fallthru
      _
    %p244 = scmp.le.s32.totalorder 1, %s13
    %p245 = scmp.lt.s32.totalorder %s13, 33
    %p246 = pnand %p244, %p245
    %p247 = pneg %p246
    // Predicated region
    $region33: #{expanding_block_forward.5} parent=5 // pred_check
      _
    $region34: #{expanding_block_forward.5} parent=5 // pred_check_branch
      %249 = sbr.rel (%p246) target = $region36
    $region35: #{expanding_block_forward.5} parent=5 // pred_region
      %s250 = ssub.s32 %s13, 1
      %p251 = scmp.lt.s32.totalorder %s22, 1
      %s252 = scalar_select %p251, %s22, 1
      %s253 = smul.addr %s252, 54
      %s254 = smul.addr %s253, 4
      %s255 = scalar_lea.vmem %s0, %s254
      %p256 = pneg %p51
      %p257 = pneg %p48
      %p258 = scmp.lt.s32.totalorder %s22, 1
      %s259 = scalar_select %p258, %s22, 1
      %s260 = smul.addr %s259, 54
      %s261 = smul.addr %s260, 4
      %s262 = scalar_lea.vmem %s1, %s261
      %p263 = pneg %p77
      %p264 = pneg %p74
      %p265 = pneg %p98
      %p266 = pneg %p95
      %p267 = pneg %p119
      %p268 = pneg %p116
      %p269 = pneg %p147
      %p270 = pneg %p144
      %p271 = scmp.lt.s32.totalorder %s22, 1
      %s272 = scalar_select %p271, %s22, 1
      %p273 = scmp.lt.s32.totalorder %s23, 15
      %s274 = scalar_select %p273, %s23, 15
      %s275 = smul.addr %s274, 2
      %s276 = smul.addr %s272, 32
      %s277 = sadd.s32 %s275, %s276
      %s278 = smul.addr %s277, 4
      %s279 = scalar_lea.vmem %s4, %s278
      %p280 = pneg %p175
      %p281 = pneg %p172
      %p282 = scmp.lt.s32.totalorder %s22, 1
      %s283 = scalar_select %p282, %s22, 1
      %p284 = scmp.lt.s32.totalorder %s23, 15
      %s285 = scalar_select %p284, %s23, 15
      %s286 = smul.addr %s283, 16
      %s287 = sadd.s32 %s285, %s286
      %s288 = scalar_lea.vmem %s5, %s287
      %p289 = pneg %p203
      %p290 = pneg %p200
      %p291 = scmp.lt.s32.totalorder %s22, 1
      %s292 = scalar_select %p291, %s22, 1
      %p293 = scmp.lt.s32.totalorder %s23, 15
      %s294 = scalar_select %p293, %s23, 15
      %s295 = smul.addr %s292, 16
      %s296 = sadd.s32 %s294, %s295
      %s297 = scalar_lea.vmem %s6, %s296
      %p298 = scmp.lt.s32.totalorder %s22, 1
      %s299 = scalar_select %p298, %s22, 1
      %s300 = smul.addr %s299, 54
      %s301 = smul.addr %s300, 4
      %s302 = scalar_lea.vmem %s0, %s301
      %p303 = scmp.lt.s32.totalorder %s22, 1
      %s304 = scalar_select %p303, %s22, 1
      %s305 = smul.addr %s304, 54
      %s306 = smul.addr %s305, 4
      %s307 = scalar_lea.vmem %s1, %s306
      %p308 = scmp.lt.s32.totalorder %s22, 1
      %s309 = scalar_select %p308, %s22, 1
      %p310 = scmp.lt.s32.totalorder %s23, 15
      %s311 = scalar_select %p310, %s23, 15
      %s312 = smul.addr %s311, 2
      %s313 = smul.addr %s309, 32
      %s314 = sadd.s32 %s312, %s313
      %s315 = smul.addr %s314, 4
      %s316 = scalar_lea.vmem %s4, %s315
      %p317 = scmp.lt.s32.totalorder %s22, 1
      %s318 = scalar_select %p317, %s22, 1
      %p319 = scmp.lt.s32.totalorder %s23, 15
      %s320 = scalar_select %p319, %s23, 15
      %s321 = smul.addr %s318, 16
      %s322 = sadd.s32 %s320, %s321
      %s323 = scalar_lea.vmem %s5, %s322
      %p324 = scmp.lt.s32.totalorder %s22, 1
      %s325 = scalar_select %p324, %s22, 1
      %p326 = scmp.lt.s32.totalorder %s23, 15
      %s327 = scalar_select %p326, %s23, 15
      %s328 = smul.addr %s325, 16
      %s329 = sadd.s32 %s327, %s328
      %s330 = scalar_lea.vmem %s6, %s329
      %s331 = smul.u32 %s23, 3
      %s332 = smul.addr %s331, 4
      %s333 = scalar_lea.vmem %s302, %s332
      %v334 = vld [vmem:[%s333] sm:$0xf]
      %v335 = vld [vmem:[%s333 + $0x4] sm:$0xf]
      %s336 = smul.addr %s331, 4
      %s337 = scalar_lea.vmem %s307, %s336
      %v338 = vld [vmem:[%s337] sm:$0xf]
      %v339 = vld [vmem:[%s337 + $0x4] sm:$0xf]
      %v340 = vld [vmem:[%s2] sm:$0xf]
      %v341 = vld [vmem:[%s2 + $0x4] sm:$0xf]
      %v342 = vld [vmem:[%s2 + $0x8] sm:$0xf]
      %v343 = vld [vmem:[%s2 + $0xc] sm:$0xf]
      %v344 = vld [vmem:[%s2 + $0x10] sm:$0xf]
      %v345 = vld [vmem:[%s2 + $0x14] sm:$0xf]
      %v346 = vld [vmem:[%s2 + $0x18] sm:$0xf]
      %v347 = vld [vmem:[%s2 + $0x1c] sm:$0xf]
      %v348 = vld [vmem:[%s2 + $0x20] sm:$0xf]
      %v349 = vld [vmem:[%s2 + $0x24] sm:$0xf]
      %v350 = vld [vmem:[%s2 + $0x28] sm:$0xf]
      %v351 = vld [vmem:[%s2 + $0x2c] sm:$0xf]
      %v352 = vld [vmem:[%s2 + $0x30] sm:$0xf]
      %v353 = vld [vmem:[%s2 + $0x34] sm:$0xf]
      %v354 = vld [vmem:[%s2 + $0x38] sm:$0xf]
      %v355 = vld [vmem:[%s2 + $0x3c] sm:$0xf]
      %v356 = vld [vmem:[%s3] sm:$0xf]
      %v357 = vld [vmem:[%s3 + $0x4] sm:$0xf]
      %v358 = vld [vmem:[%s3 + $0x8] sm:$0xf]
      %v359 = vld [vmem:[%s3 + $0xc] sm:$0xf]
      %v360 = vld [vmem:[%s3 + $0x10] sm:$0xf]
      %v361 = vld [vmem:[%s3 + $0x14] sm:$0xf]
      %v362 = vld [vmem:[%s3 + $0x18] sm:$0xf]
      %v363 = vld [vmem:[%s3 + $0x1c] sm:$0xf]
      %v364 = vld [vmem:[%s3 + $0x20] sm:$0xf]
      %v365 = vld [vmem:[%s3 + $0x24] sm:$0xf]
      %v366 = vld [vmem:[%s3 + $0x28] sm:$0xf]
      %v367 = vld [vmem:[%s3 + $0x2c] sm:$0xf]
      %v368 = vld [vmem:[%s3 + $0x30] sm:$0xf]
      %v369 = vld [vmem:[%s3 + $0x34] sm:$0xf]
      %v370 = vld [vmem:[%s3 + $0x38] sm:$0xf]
      %v371 = vld [vmem:[%s3 + $0x3c] sm:$0xf]
      %v374 = vunpack.c.l.b16 %v338
      %v375 = vunpack.c.l.b16 %v339
      %v376 = vpack.c.b16 %v375, %v374
      %v394 = vunpack.c.l.b16 %v356
      %v395 = vunpack.c.l.b16 %v357
      %v396 = vunpack.c.l.b16 %v358
      %v397 = vunpack.c.l.b16 %v359
      %v398 = vunpack.c.l.b16 %v360
      %v399 = vunpack.c.l.b16 %v361
      %v400 = vunpack.c.l.b16 %v362
      %v401 = vunpack.c.l.b16 %v363
      %v402 = vunpack.c.l.b16 %v364
      %v403 = vunpack.c.l.b16 %v365
      %v404 = vunpack.c.l.b16 %v366
      %v405 = vunpack.c.l.b16 %v367
      %v406 = vunpack.c.l.b16 %v368
      %v407 = vunpack.c.l.b16 %v369
      %v408 = vunpack.c.l.b16 %v370
      %v409 = vunpack.c.l.b16 %v371
      %v410 = vpack.c.b16 %v395, %v394
      %v411 = vpack.c.b16 %v397, %v396
      %v412 = vpack.c.b16 %v399, %v398
      %v413 = vpack.c.b16 %v401, %v400
      %v414 = vpack.c.b16 %v403, %v402
      %v415 = vpack.c.b16 %v405, %v404
      %v416 = vpack.c.b16 %v407, %v406
      %v417 = vpack.c.b16 %v409, %v408
      %426 = vmatpush.bf16.msra.mxu0 %v417
      %427 = vmatpush.bf16.msra.mxu0 %v416
      %428 = vmatpush.bf16.msra.mxu0 %v415
      %429 = vmatpush.bf16.msra.mxu0 %v414
      %430 = vmatpush.bf16.msra.mxu0 %v413
      %431 = vmatpush.bf16.msra.mxu0 %v412
      %432 = vmatpush.bf16.msra.mxu0 %v411
      %433 = vmatpush.bf16.msra.mxu0 %v410
      %434 = vmatmul.bf16.gmra.mxu0 %v376
      %v435 = vpop.f32.mrf.mxu0
      %v436 = vadd.f32 0.0, %v435
      %v437 = vpop.f32.mrf.mxu0
      %v438 = vadd.f32 0.0, %v437
      %439 = vdwg.mxu0
      %v442 = vunpack.c.l.b16 %v334
      %v443 = vunpack.c.l.b16 %v335
      %v444 = vpack.c.b16 %v443, %v442
      %v462 = vunpack.c.l.b16 %v340
      %v463 = vunpack.c.l.b16 %v341
      %v464 = vunpack.c.l.b16 %v342
      %v465 = vunpack.c.l.b16 %v343
      %v466 = vunpack.c.l.b16 %v344
      %v467 = vunpack.c.l.b16 %v345
      %v468 = vunpack.c.l.b16 %v346
      %v469 = vunpack.c.l.b16 %v347
      %v470 = vunpack.c.l.b16 %v348
      %v471 = vunpack.c.l.b16 %v349
      %v472 = vunpack.c.l.b16 %v350
      %v473 = vunpack.c.l.b16 %v351
      %v474 = vunpack.c.l.b16 %v352
      %v475 = vunpack.c.l.b16 %v353
      %v476 = vunpack.c.l.b16 %v354
      %v477 = vunpack.c.l.b16 %v355
      %v478 = vpack.c.b16 %v463, %v462
      %v479 = vpack.c.b16 %v465, %v464
      %v480 = vpack.c.b16 %v467, %v466
      %v481 = vpack.c.b16 %v469, %v468
      %v482 = vpack.c.b16 %v471, %v470
      %v483 = vpack.c.b16 %v473, %v472
      %v484 = vpack.c.b16 %v475, %v474
      %v485 = vpack.c.b16 %v477, %v476
      %494 = vmatpush.bf16.msra.mxu0 %v485
      %495 = vmatpush.bf16.msra.mxu0 %v484
      %496 = vmatpush.bf16.msra.mxu0 %v483
      %497 = vmatpush.bf16.msra.mxu0 %v482
      %498 = vmatpush.bf16.msra.mxu0 %v481
      %499 = vmatpush.bf16.msra.mxu0 %v480
      %500 = vmatpush.bf16.msra.mxu0 %v479
      %501 = vmatpush.bf16.msra.mxu0 %v478
      %502 = vmatmul.bf16.gmra.mxu0 %v444
      %v503 = vpop.f32.mrf.mxu0
      %v504 = vadd.f32 %v436, %v503
      %v505 = vpop.f32.mrf.mxu0
      %v506 = vadd.f32 %v438, %v505
      %507 = vdwg.mxu0
      %v508 = vld [vmem:[%s333] sm:$0xf]
      %v509 = vld [vmem:[%s333 + $0x4] sm:$0xf]
      %v510 = vld [vmem:[%s333 + $0x8] sm:$0x1]
      %v511 = vld [vmem:[%s337] sm:$0xf]
      %v512 = vld [vmem:[%s337 + $0x4] sm:$0xf]
      %v513 = vld [vmem:[%s337 + $0x8] sm:$0x1]
      %s514 = scalar_lea.vmem %s2, 64
      %v515 = vld [vmem:[%s514] sm:$0xf]
      %v516 = vld [vmem:[%s514 + $0x4] sm:$0xf]
      %v517 = vld [vmem:[%s514 + $0x8] sm:$0xf]
      %v518 = vld [vmem:[%s514 + $0xc] sm:$0xf]
      %v519 = vld [vmem:[%s514 + $0x10] sm:$0xf]
      %v520 = vld [vmem:[%s514 + $0x14] sm:$0xf]
      %v521 = vld [vmem:[%s514 + $0x18] sm:$0xf]
      %v522 = vld [vmem:[%s514 + $0x1c] sm:$0xf]
      %v523 = vld [vmem:[%s514 + $0x20] sm:$0xf]
      %v524 = vld [vmem:[%s514 + $0x24] sm:$0xf]
      %v525 = vld [vmem:[%s514 + $0x28] sm:$0xf]
      %v526 = vld [vmem:[%s514 + $0x2c] sm:$0xf]
      %v527 = vld [vmem:[%s514 + $0x30] sm:$0xf]
      %v528 = vld [vmem:[%s514 + $0x34] sm:$0xf]
      %v529 = vld [vmem:[%s514 + $0x38] sm:$0xf]
      %v530 = vld [vmem:[%s514 + $0x3c] sm:$0xf]
      %v534 = vunpack.c.l.b16 %v508
      %v535 = vunpack.c.l.b16 %v509
      %v536 = vunpack.c.l.b16 %v510
      %v537 = vpack.c.b16 %v535, %v534
      %v538 = vpack.c.b16 %v536, %v536
      %vm539 = vsmask.f32 7424
      %v541 = vshrl.u32 %v537, 16
      %v543 = vshll.u32 %v537, 16
      %v545 = vrot.slane %v543, 1
      %v546 = vor.u32 %v541, %v545
      %v548 = vshll.u32 %v538, 16
      %v550 = vrot.slane %v548, 1
      %v551 = vsel %vm539, %v546, %v550
      %v569 = vunpack.c.l.b16 %v515
      %v570 = vunpack.c.l.b16 %v516
      %v571 = vunpack.c.l.b16 %v517
      %v572 = vunpack.c.l.b16 %v518
      %v573 = vunpack.c.l.b16 %v519
      %v574 = vunpack.c.l.b16 %v520
      %v575 = vunpack.c.l.b16 %v521
      %v576 = vunpack.c.l.b16 %v522
      %v577 = vunpack.c.l.b16 %v523
      %v578 = vunpack.c.l.b16 %v524
      %v579 = vunpack.c.l.b16 %v525
      %v580 = vunpack.c.l.b16 %v526
      %v581 = vunpack.c.l.b16 %v527
      %v582 = vunpack.c.l.b16 %v528
      %v583 = vunpack.c.l.b16 %v529
      %v584 = vunpack.c.l.b16 %v530
      %v585 = vpack.c.b16 %v570, %v569
      %v586 = vpack.c.b16 %v572, %v571
      %v587 = vpack.c.b16 %v574, %v573
      %v588 = vpack.c.b16 %v576, %v575
      %v589 = vpack.c.b16 %v578, %v577
      %v590 = vpack.c.b16 %v580, %v579
      %v591 = vpack.c.b16 %v582, %v581
      %v592 = vpack.c.b16 %v584, %v583
      %601 = vmatpush.bf16.msra.mxu0 %v592
      %602 = vmatpush.bf16.msra.mxu0 %v591
      %603 = vmatpush.bf16.msra.mxu0 %v590
      %604 = vmatpush.bf16.msra.mxu0 %v589
      %605 = vmatpush.bf16.msra.mxu0 %v588
      %606 = vmatpush.bf16.msra.mxu0 %v587
      %607 = vmatpush.bf16.msra.mxu0 %v586
      %608 = vmatpush.bf16.msra.mxu0 %v585
      %609 = vmatmul.bf16.gmra.mxu0 %v551
      %v610 = vpop.f32.mrf.mxu0
      %v611 = vadd.f32 0.0, %v610
      %v612 = vpop.f32.mrf.mxu0
      %v613 = vadd.f32 0.0, %v612
      %614 = vdwg.mxu0
      %v615 = vadd.f32 %v504, %v611
      %v616 = vadd.f32 %v506, %v613
      %s617 = scalar_lea.vmem %s3, 64
      %v618 = vld [vmem:[%s617] sm:$0xf]
      %v619 = vld [vmem:[%s617 + $0x4] sm:$0xf]
      %v620 = vld [vmem:[%s617 + $0x8] sm:$0xf]
      %v621 = vld [vmem:[%s617 + $0xc] sm:$0xf]
      %v622 = vld [vmem:[%s617 + $0x10] sm:$0xf]
      %v623 = vld [vmem:[%s617 + $0x14] sm:$0xf]
      %v624 = vld [vmem:[%s617 + $0x18] sm:$0xf]
      %v625 = vld [vmem:[%s617 + $0x1c] sm:$0xf]
      %v626 = vld [vmem:[%s617 + $0x20] sm:$0xf]
      %v627 = vld [vmem:[%s617 + $0x24] sm:$0xf]
      %v628 = vld [vmem:[%s617 + $0x28] sm:$0xf]
      %v629 = vld [vmem:[%s617 + $0x2c] sm:$0xf]
      %v630 = vld [vmem:[%s617 + $0x30] sm:$0xf]
      %v631 = vld [vmem:[%s617 + $0x34] sm:$0xf]
      %v632 = vld [vmem:[%s617 + $0x38] sm:$0xf]
      %v633 = vld [vmem:[%s617 + $0x3c] sm:$0xf]
      %v637 = vunpack.c.l.b16 %v511
      %v638 = vunpack.c.l.b16 %v512
      %v639 = vunpack.c.l.b16 %v513
      %v640 = vpack.c.b16 %v638, %v637
      %v641 = vpack.c.b16 %v639, %v639
      %v643 = vshrl.u32 %v640, 16
      %v645 = vshll.u32 %v640, 16
      %v647 = vrot.slane %v645, 1
      %v648 = vor.u32 %v643, %v647
      %v650 = vshll.u32 %v641, 16
      %v652 = vrot.slane %v650, 1
      %v653 = vsel %vm539, %v648, %v652
      %v671 = vunpack.c.l.b16 %v618
      %v672 = vunpack.c.l.b16 %v619
      %v673 = vunpack.c.l.b16 %v620
      %v674 = vunpack.c.l.b16 %v621
      %v675 = vunpack.c.l.b16 %v622
      %v676 = vunpack.c.l.b16 %v623
      %v677 = vunpack.c.l.b16 %v624
      %v678 = vunpack.c.l.b16 %v625
      %v679 = vunpack.c.l.b16 %v626
      %v680 = vunpack.c.l.b16 %v627
      %v681 = vunpack.c.l.b16 %v628
      %v682 = vunpack.c.l.b16 %v629
      %v683 = vunpack.c.l.b16 %v630
      %v684 = vunpack.c.l.b16 %v631
      %v685 = vunpack.c.l.b16 %v632
      %v686 = vunpack.c.l.b16 %v633
      %v687 = vpack.c.b16 %v672, %v671
      %v688 = vpack.c.b16 %v674, %v673
      %v689 = vpack.c.b16 %v676, %v675
      %v690 = vpack.c.b16 %v678, %v677
      %v691 = vpack.c.b16 %v680, %v679
      %v692 = vpack.c.b16 %v682, %v681
      %v693 = vpack.c.b16 %v684, %v683
      %v694 = vpack.c.b16 %v686, %v685
      %703 = vmatpush.bf16.msra.mxu0 %v694
      %704 = vmatpush.bf16.msra.mxu0 %v693
      %705 = vmatpush.bf16.msra.mxu0 %v692
      %706 = vmatpush.bf16.msra.mxu0 %v691
      %707 = vmatpush.bf16.msra.mxu0 %v690
      %708 = vmatpush.bf16.msra.mxu0 %v689
      %709 = vmatpush.bf16.msra.mxu0 %v688
      %710 = vmatpush.bf16.msra.mxu0 %v687
      %711 = vmatmul.bf16.gmra.mxu0 %v653
      %v712 = vpop.f32.mrf.mxu0
      %v713 = vadd.f32 0.0, %v712
      %v714 = vpop.f32.mrf.mxu0
      %v715 = vadd.f32 0.0, %v714
      %716 = vdwg.mxu0
      %v717 = vadd.f32 %v615, %v713
      %v718 = vadd.f32 %v616, %v715
      %v719 = vld [vmem:[%s333] sm:$0xe]
      %v720 = vld [vmem:[%s337] sm:$0xe]
      %s721 = scalar_lea.vmem %s2, 128
      %v722 = vld [vmem:[%s721] sm:$0xf]
      %v723 = vld [vmem:[%s721 + $0x4] sm:$0xf]
      %v724 = vld [vmem:[%s721 + $0x8] sm:$0xf]
      %v725 = vld [vmem:[%s721 + $0xc] sm:$0xf]
      %v726 = vld [vmem:[%s721 + $0x10] sm:$0xf]
      %v727 = vld [vmem:[%s721 + $0x14] sm:$0xf]
      %v728 = vld [vmem:[%s721 + $0x18] sm:$0xf]
      %v729 = vld [vmem:[%s721 + $0x1c] sm:$0xf]
      %v730 = vld [vmem:[%s721 + $0x20] sm:$0xf]
      %v731 = vld [vmem:[%s721 + $0x24] sm:$0xf]
      %v732 = vld [vmem:[%s721 + $0x28] sm:$0xf]
      %v733 = vld [vmem:[%s721 + $0x2c] sm:$0xf]
      %v734 = vld [vmem:[%s721 + $0x30] sm:$0xf]
      %v735 = vld [vmem:[%s721 + $0x34] sm:$0xf]
      %v736 = vld [vmem:[%s721 + $0x38] sm:$0xf]
      %v737 = vld [vmem:[%s721 + $0x3c] sm:$0xf]
      %v739 = vunpack.c.l.b16 %v719
      %v740 = vpack.c.b16 %v535, %v739
      %vm741 = vcmask 1046528
      %v742 = vrot.slane %v740, 1
      %v743 = vrot.slane %v538, 1
      %v744 = vsel %vm741, %v742, %v743
      %v762 = vunpack.c.l.b16 %v722
      %v763 = vunpack.c.l.b16 %v723
      %v764 = vunpack.c.l.b16 %v724
      %v765 = vunpack.c.l.b16 %v725
      %v766 = vunpack.c.l.b16 %v726
      %v767 = vunpack.c.l.b16 %v727
      %v768 = vunpack.c.l.b16 %v728
      %v769 = vunpack.c.l.b16 %v729
      %v770 = vunpack.c.l.b16 %v730
      %v771 = vunpack.c.l.b16 %v731
      %v772 = vunpack.c.l.b16 %v732
      %v773 = vunpack.c.l.b16 %v733
      %v774 = vunpack.c.l.b16 %v734
      %v775 = vunpack.c.l.b16 %v735
      %v776 = vunpack.c.l.b16 %v736
      %v777 = vunpack.c.l.b16 %v737
      %v778 = vpack.c.b16 %v763, %v762
      %v779 = vpack.c.b16 %v765, %v764
      %v780 = vpack.c.b16 %v767, %v766
      %v781 = vpack.c.b16 %v769, %v768
      %v782 = vpack.c.b16 %v771, %v770
      %v783 = vpack.c.b16 %v773, %v772
      %v784 = vpack.c.b16 %v775, %v774
      %v785 = vpack.c.b16 %v777, %v776
      %794 = vmatpush.bf16.msra.mxu0 %v785
      %795 = vmatpush.bf16.msra.mxu0 %v784
      %796 = vmatpush.bf16.msra.mxu0 %v783
      %797 = vmatpush.bf16.msra.mxu0 %v782
      %798 = vmatpush.bf16.msra.mxu0 %v781
      %799 = vmatpush.bf16.msra.mxu0 %v780
      %800 = vmatpush.bf16.msra.mxu0 %v779
      %801 = vmatpush.bf16.msra.mxu0 %v778
      %802 = vmatmul.bf16.gmra.mxu0 %v744
      %v803 = vpop.f32.mrf.mxu0
      %v804 = vadd.f32 0.0, %v803
      %v805 = vpop.f32.mrf.mxu0
      %v806 = vadd.f32 0.0, %v805
      %807 = vdwg.mxu0
      %v808 = vadd.f32 %v717, %v804
      %v809 = vadd.f32 %v718, %v806
      %s810 = scalar_lea.vmem %s3, 128
      %v811 = vld [vmem:[%s810] sm:$0xf]
      %v812 = vld [vmem:[%s810 + $0x4] sm:$0xf]
      %v813 = vld [vmem:[%s810 + $0x8] sm:$0xf]
      %v814 = vld [vmem:[%s810 + $0xc] sm:$0xf]
      %v815 = vld [vmem:[%s810 + $0x10] sm:$0xf]
      %v816 = vld [vmem:[%s810 + $0x14] sm:$0xf]
      %v817 = vld [vmem:[%s810 + $0x18] sm:$0xf]
      %v818 = vld [vmem:[%s810 + $0x1c] sm:$0xf]
      %v819 = vld [vmem:[%s810 + $0x20] sm:$0xf]
      %v820 = vld [vmem:[%s810 + $0x24] sm:$0xf]
      %v821 = vld [vmem:[%s810 + $0x28] sm:$0xf]
      %v822 = vld [vmem:[%s810 + $0x2c] sm:$0xf]
      %v823 = vld [vmem:[%s810 + $0x30] sm:$0xf]
      %v824 = vld [vmem:[%s810 + $0x34] sm:$0xf]
      %v825 = vld [vmem:[%s810 + $0x38] sm:$0xf]
      %v826 = vld [vmem:[%s810 + $0x3c] sm:$0xf]
      %v828 = vunpack.c.l.b16 %v720
      %v829 = vpack.c.b16 %v638, %v828
      %v830 = vrot.slane %v829, 1
      %v831 = vrot.slane %v641, 1
      %v832 = vsel %vm741, %v830, %v831
      %v850 = vunpack.c.l.b16 %v811
      %v851 = vunpack.c.l.b16 %v812
      %v852 = vunpack.c.l.b16 %v813
      %v853 = vunpack.c.l.b16 %v814
      %v854 = vunpack.c.l.b16 %v815
      %v855 = vunpack.c.l.b16 %v816
      %v856 = vunpack.c.l.b16 %v817
      %v857 = vunpack.c.l.b16 %v818
      %v858 = vunpack.c.l.b16 %v819
      %v859 = vunpack.c.l.b16 %v820
      %v860 = vunpack.c.l.b16 %v821
      %v861 = vunpack.c.l.b16 %v822
      %v862 = vunpack.c.l.b16 %v823
      %v863 = vunpack.c.l.b16 %v824
      %v864 = vunpack.c.l.b16 %v825
      %v865 = vunpack.c.l.b16 %v826
      %v866 = vpack.c.b16 %v851, %v850
      %v867 = vpack.c.b16 %v853, %v852
      %v868 = vpack.c.b16 %v855, %v854
      %v869 = vpack.c.b16 %v857, %v856
      %v870 = vpack.c.b16 %v859, %v858
      %v871 = vpack.c.b16 %v861, %v860
      %v872 = vpack.c.b16 %v863, %v862
      %v873 = vpack.c.b16 %v865, %v864
      %882 = vmatpush.bf16.msra.mxu0 %v873
      %883 = vmatpush.bf16.msra.mxu0 %v872
      %884 = vmatpush.bf16.msra.mxu0 %v871
      %885 = vmatpush.bf16.msra.mxu0 %v870
      %886 = vmatpush.bf16.msra.mxu0 %v869
      %887 = vmatpush.bf16.msra.mxu0 %v868
      %888 = vmatpush.bf16.msra.mxu0 %v867
      %889 = vmatpush.bf16.msra.mxu0 %v866
      %890 = vmatmul.bf16.gmra.mxu0 %v832
      %v891 = vpop.f32.mrf.mxu0
      %v892 = vadd.f32 0.0, %v891
      %v893 = vpop.f32.mrf.mxu0
      %v894 = vadd.f32 0.0, %v893
      %895 = vdwg.mxu0
      %v896 = vadd.f32 %v808, %v892
      %v897 = vadd.f32 %v809, %v894
      %s898 = sadd.s32 %s23, 1
      %s899 = smul.u32 %s898, 3
      %s900 = smul.addr %s899, 4
      %s901 = scalar_lea.vmem %s302, %s900
      %v902 = vld [vmem:[%s901] sm:$0xf]
      %v903 = vld [vmem:[%s901 + $0x4] sm:$0xf]
      %s904 = smul.addr %s899, 4
      %s905 = scalar_lea.vmem %s307, %s904
      %v906 = vld [vmem:[%s905] sm:$0xf]
      %v907 = vld [vmem:[%s905 + $0x4] sm:$0xf]
      %s908 = scalar_lea.vmem %s2, 192
      %v909 = vld [vmem:[%s908] sm:$0xf]
      %v910 = vld [vmem:[%s908 + $0x4] sm:$0xf]
      %v911 = vld [vmem:[%s908 + $0x8] sm:$0xf]
      %v912 = vld [vmem:[%s908 + $0xc] sm:$0xf]
      %v913 = vld [vmem:[%s908 + $0x10] sm:$0xf]
      %v914 = vld [vmem:[%s908 + $0x14] sm:$0xf]
      %v915 = vld [vmem:[%s908 + $0x18] sm:$0xf]
      %v916 = vld [vmem:[%s908 + $0x1c] sm:$0xf]
      %v917 = vld [vmem:[%s908 + $0x20] sm:$0xf]
      %v918 = vld [vmem:[%s908 + $0x24] sm:$0xf]
      %v919 = vld [vmem:[%s908 + $0x28] sm:$0xf]
      %v920 = vld [vmem:[%s908 + $0x2c] sm:$0xf]
      %v921 = vld [vmem:[%s908 + $0x30] sm:$0xf]
      %v922 = vld [vmem:[%s908 + $0x34] sm:$0xf]
      %v923 = vld [vmem:[%s908 + $0x38] sm:$0xf]
      %v924 = vld [vmem:[%s908 + $0x3c] sm:$0xf]
      %v927 = vunpack.c.l.b16 %v902
      %v928 = vunpack.c.l.b16 %v903
      %v929 = vpack.c.b16 %v928, %v927
      %v947 = vunpack.c.l.b16 %v909
      %v948 = vunpack.c.l.b16 %v910
      %v949 = vunpack.c.l.b16 %v911
      %v950 = vunpack.c.l.b16 %v912
      %v951 = vunpack.c.l.b16 %v913
      %v952 = vunpack.c.l.b16 %v914
      %v953 = vunpack.c.l.b16 %v915
      %v954 = vunpack.c.l.b16 %v916
      %v955 = vunpack.c.l.b16 %v917
      %v956 = vunpack.c.l.b16 %v918
      %v957 = vunpack.c.l.b16 %v919
      %v958 = vunpack.c.l.b16 %v920
      %v959 = vunpack.c.l.b16 %v921
      %v960 = vunpack.c.l.b16 %v922
      %v961 = vunpack.c.l.b16 %v923
      %v962 = vunpack.c.l.b16 %v924
      %v963 = vpack.c.b16 %v948, %v947
      %v964 = vpack.c.b16 %v950, %v949
      %v965 = vpack.c.b16 %v952, %v951
      %v966 = vpack.c.b16 %v954, %v953
      %v967 = vpack.c.b16 %v956, %v955
      %v968 = vpack.c.b16 %v958, %v957
      %v969 = vpack.c.b16 %v960, %v959
      %v970 = vpack.c.b16 %v962, %v961
      %979 = vmatpush.bf16.msra.mxu0 %v970
      %980 = vmatpush.bf16.msra.mxu0 %v969
      %981 = vmatpush.bf16.msra.mxu0 %v968
      %982 = vmatpush.bf16.msra.mxu0 %v967
      %983 = vmatpush.bf16.msra.mxu0 %v966
      %984 = vmatpush.bf16.msra.mxu0 %v965
      %985 = vmatpush.bf16.msra.mxu0 %v964
      %986 = vmatpush.bf16.msra.mxu0 %v963
      %987 = vmatmul.bf16.gmra.mxu0 %v929
      %v988 = vpop.f32.mrf.mxu0
      %v989 = vadd.f32 0.0, %v988
      %v990 = vpop.f32.mrf.mxu0
      %v991 = vadd.f32 0.0, %v990
      %992 = vdwg.mxu0
      %v993 = vadd.f32 %v896, %v989
      %v994 = vadd.f32 %v897, %v991
      %s995 = scalar_lea.vmem %s3, 192
      %v996 = vld [vmem:[%s995] sm:$0xf]
      %v997 = vld [vmem:[%s995 + $0x4] sm:$0xf]
      %v998 = vld [vmem:[%s995 + $0x8] sm:$0xf]
      %v999 = vld [vmem:[%s995 + $0xc] sm:$0xf]
      %v1000 = vld [vmem:[%s995 + $0x10] sm:$0xf]
      %v1001 = vld [vmem:[%s995 + $0x14] sm:$0xf]
      %v1002 = vld [vmem:[%s995 + $0x18] sm:$0xf]
      %v1003 = vld [vmem:[%s995 + $0x1c] sm:$0xf]
      %v1004 = vld [vmem:[%s995 + $0x20] sm:$0xf]
      %v1005 = vld [vmem:[%s995 + $0x24] sm:$0xf]
      %v1006 = vld [vmem:[%s995 + $0x28] sm:$0xf]
      %v1007 = vld [vmem:[%s995 + $0x2c] sm:$0xf]
      %v1008 = vld [vmem:[%s995 + $0x30] sm:$0xf]
      %v1009 = vld [vmem:[%s995 + $0x34] sm:$0xf]
      %v1010 = vld [vmem:[%s995 + $0x38] sm:$0xf]
      %v1011 = vld [vmem:[%s995 + $0x3c] sm:$0xf]
      %v1014 = vunpack.c.l.b16 %v906
      %v1015 = vunpack.c.l.b16 %v907
      %v1016 = vpack.c.b16 %v1015, %v1014
      %v1034 = vunpack.c.l.b16 %v996
      %v1035 = vunpack.c.l.b16 %v997
      %v1036 = vunpack.c.l.b16 %v998
      %v1037 = vunpack.c.l.b16 %v999
      %v1038 = vunpack.c.l.b16 %v1000
      %v1039 = vunpack.c.l.b16 %v1001
      %v1040 = vunpack.c.l.b16 %v1002
      %v1041 = vunpack.c.l.b16 %v1003
      %v1042 = vunpack.c.l.b16 %v1004
      %v1043 = vunpack.c.l.b16 %v1005
      %v1044 = vunpack.c.l.b16 %v1006
      %v1045 = vunpack.c.l.b16 %v1007
      %v1046 = vunpack.c.l.b16 %v1008
      %v1047 = vunpack.c.l.b16 %v1009
      %v1048 = vunpack.c.l.b16 %v1010
      %v1049 = vunpack.c.l.b16 %v1011
      %v1050 = vpack.c.b16 %v1035, %v1034
      %v1051 = vpack.c.b16 %v1037, %v1036
      %v1052 = vpack.c.b16 %v1039, %v1038
      %v1053 = vpack.c.b16 %v1041, %v1040
      %v1054 = vpack.c.b16 %v1043, %v1042
      %v1055 = vpack.c.b16 %v1045, %v1044
      %v1056 = vpack.c.b16 %v1047, %v1046
      %v1057 = vpack.c.b16 %v1049, %v1048
      %1066 = vmatpush.bf16.msra.mxu0 %v1057
      %1067 = vmatpush.bf16.msra.mxu0 %v1056
      %1068 = vmatpush.bf16.msra.mxu0 %v1055
      %1069 = vmatpush.bf16.msra.mxu0 %v1054
      %1070 = vmatpush.bf16.msra.mxu0 %v1053
      %1071 = vmatpush.bf16.msra.mxu0 %v1052
      %1072 = vmatpush.bf16.msra.mxu0 %v1051
      %1073 = vmatpush.bf16.msra.mxu0 %v1050
      %1074 = vmatmul.bf16.gmra.mxu0 %v1016
      %v1075 = vpop.f32.mrf.mxu0
      %v1076 = vadd.f32 0.0, %v1075
      %v1077 = vpop.f32.mrf.mxu0
      %v1078 = vadd.f32 0.0, %v1077
      %1079 = vdwg.mxu0
      %v1080 = vadd.f32 %v993, %v1076
      %v1081 = vadd.f32 %v994, %v1078
      %v1082 = vld [vmem:[%s901] sm:$0xf]
      %v1083 = vld [vmem:[%s901 + $0x4] sm:$0xf]
      %v1084 = vld [vmem:[%s901 + $0x8] sm:$0x1]
      %v1085 = vld [vmem:[%s905] sm:$0xf]
      %v1086 = vld [vmem:[%s905 + $0x4] sm:$0xf]
      %v1087 = vld [vmem:[%s905 + $0x8] sm:$0x1]
      %s1088 = scalar_lea.vmem %s2, 256
      %v1089 = vld [vmem:[%s1088] sm:$0xf]
      %v1090 = vld [vmem:[%s1088 + $0x4] sm:$0xf]
      %v1091 = vld [vmem:[%s1088 + $0x8] sm:$0xf]
      %v1092 = vld [vmem:[%s1088 + $0xc] sm:$0xf]
      %v1093 = vld [vmem:[%s1088 + $0x10] sm:$0xf]
      %v1094 = vld [vmem:[%s1088 + $0x14] sm:$0xf]
      %v1095 = vld [vmem:[%s1088 + $0x18] sm:$0xf]
      %v1096 = vld [vmem:[%s1088 + $0x1c] sm:$0xf]
      %v1097 = vld [vmem:[%s1088 + $0x20] sm:$0xf]
      %v1098 = vld [vmem:[%s1088 + $0x24] sm:$0xf]
      %v1099 = vld [vmem:[%s1088 + $0x28] sm:$0xf]
      %v1100 = vld [vmem:[%s1088 + $0x2c] sm:$0xf]
      %v1101 = vld [vmem:[%s1088 + $0x30] sm:$0xf]
      %v1102 = vld [vmem:[%s1088 + $0x34] sm:$0xf]
      %v1103 = vld [vmem:[%s1088 + $0x38] sm:$0xf]
      %v1104 = vld [vmem:[%s1088 + $0x3c] sm:$0xf]
      %v1108 = vunpack.c.l.b16 %v1082
      %v1109 = vunpack.c.l.b16 %v1083
      %v1110 = vunpack.c.l.b16 %v1084
      %v1111 = vpack.c.b16 %v1109, %v1108
      %v1112 = vpack.c.b16 %v1110, %v1110
      %v1114 = vshrl.u32 %v1111, 16
      %v1116 = vshll.u32 %v1111, 16
      %v1118 = vrot.slane %v1116, 1
      %v1119 = vor.u32 %v1114, %v1118
      %v1121 = vshll.u32 %v1112, 16
      %v1123 = vrot.slane %v1121, 1
      %v1124 = vsel %vm539, %v1119, %v1123
      %v1142 = vunpack.c.l.b16 %v1089
      %v1143 = vunpack.c.l.b16 %v1090
      %v1144 = vunpack.c.l.b16 %v1091
      %v1145 = vunpack.c.l.b16 %v1092
      %v1146 = vunpack.c.l.b16 %v1093
      %v1147 = vunpack.c.l.b16 %v1094
      %v1148 = vunpack.c.l.b16 %v1095
      %v1149 = vunpack.c.l.b16 %v1096
      %v1150 = vunpack.c.l.b16 %v1097
      %v1151 = vunpack.c.l.b16 %v1098
      %v1152 = vunpack.c.l.b16 %v1099
      %v1153 = vunpack.c.l.b16 %v1100
      %v1154 = vunpack.c.l.b16 %v1101
      %v1155 = vunpack.c.l.b16 %v1102
      %v1156 = vunpack.c.l.b16 %v1103
      %v1157 = vunpack.c.l.b16 %v1104
      %v1158 = vpack.c.b16 %v1143, %v1142
      %v1159 = vpack.c.b16 %v1145, %v1144
      %v1160 = vpack.c.b16 %v1147, %v1146
      %v1161 = vpack.c.b16 %v1149, %v1148
      %v1162 = vpack.c.b16 %v1151, %v1150
      %v1163 = vpack.c.b16 %v1153, %v1152
      %v1164 = vpack.c.b16 %v1155, %v1154
      %v1165 = vpack.c.b16 %v1157, %v1156
      %1174 = vmatpush.bf16.msra.mxu0 %v1165
      %1175 = vmatpush.bf16.msra.mxu0 %v1164
      %1176 = vmatpush.bf16.msra.mxu0 %v1163
      %1177 = vmatpush.bf16.msra.mxu0 %v1162
      %1178 = vmatpush.bf16.msra.mxu0 %v1161
      %1179 = vmatpush.bf16.msra.mxu0 %v1160
      %1180 = vmatpush.bf16.msra.mxu0 %v1159
      %1181 = vmatpush.bf16.msra.mxu0 %v1158
      %1182 = vmatmul.bf16.gmra.mxu0 %v1124
      %v1183 = vpop.f32.mrf.mxu0
      %v1184 = vadd.f32 0.0, %v1183
      %v1185 = vpop.f32.mrf.mxu0
      %v1186 = vadd.f32 0.0, %v1185
      %1187 = vdwg.mxu0
      %v1188 = vadd.f32 %v1080, %v1184
      %v1189 = vadd.f32 %v1081, %v1186
      %s1190 = scalar_lea.vmem %s3, 256
      %v1191 = vld [vmem:[%s1190] sm:$0xf]
      %v1192 = vld [vmem:[%s1190 + $0x4] sm:$0xf]
      %v1193 = vld [vmem:[%s1190 + $0x8] sm:$0xf]
      %v1194 = vld [vmem:[%s1190 + $0xc] sm:$0xf]
      %v1195 = vld [vmem:[%s1190 + $0x10] sm:$0xf]
      %v1196 = vld [vmem:[%s1190 + $0x14] sm:$0xf]
      %v1197 = vld [vmem:[%s1190 + $0x18] sm:$0xf]
      %v1198 = vld [vmem:[%s1190 + $0x1c] sm:$0xf]
      %v1199 = vld [vmem:[%s1190 + $0x20] sm:$0xf]
      %v1200 = vld [vmem:[%s1190 + $0x24] sm:$0xf]
      %v1201 = vld [vmem:[%s1190 + $0x28] sm:$0xf]
      %v1202 = vld [vmem:[%s1190 + $0x2c] sm:$0xf]
      %v1203 = vld [vmem:[%s1190 + $0x30] sm:$0xf]
      %v1204 = vld [vmem:[%s1190 + $0x34] sm:$0xf]
      %v1205 = vld [vmem:[%s1190 + $0x38] sm:$0xf]
      %v1206 = vld [vmem:[%s1190 + $0x3c] sm:$0xf]
      %v1210 = vunpack.c.l.b16 %v1085
      %v1211 = vunpack.c.l.b16 %v1086
      %v1212 = vunpack.c.l.b16 %v1087
      %v1213 = vpack.c.b16 %v1211, %v1210
      %v1214 = vpack.c.b16 %v1212, %v1212
      %v1216 = vshrl.u32 %v1213, 16
      %v1218 = vshll.u32 %v1213, 16
      %v1220 = vrot.slane %v1218, 1
      %v1221 = vor.u32 %v1216, %v1220
      %v1223 = vshll.u32 %v1214, 16
      %v1225 = vrot.slane %v1223, 1
      %v1226 = vsel %vm539, %v1221, %v1225
      %v1244 = vunpack.c.l.b16 %v1191
      %v1245 = vunpack.c.l.b16 %v1192
      %v1246 = vunpack.c.l.b16 %v1193
      %v1247 = vunpack.c.l.b16 %v1194
      %v1248 = vunpack.c.l.b16 %v1195
      %v1249 = vunpack.c.l.b16 %v1196
      %v1250 = vunpack.c.l.b16 %v1197
      %v1251 = vunpack.c.l.b16 %v1198
      %v1252 = vunpack.c.l.b16 %v1199
      %v1253 = vunpack.c.l.b16 %v1200
      %v1254 = vunpack.c.l.b16 %v1201
      %v1255 = vunpack.c.l.b16 %v1202
      %v1256 = vunpack.c.l.b16 %v1203
      %v1257 = vunpack.c.l.b16 %v1204
      %v1258 = vunpack.c.l.b16 %v1205
      %v1259 = vunpack.c.l.b16 %v1206
      %v1260 = vpack.c.b16 %v1245, %v1244
      %v1261 = vpack.c.b16 %v1247, %v1246
      %v1262 = vpack.c.b16 %v1249, %v1248
      %v1263 = vpack.c.b16 %v1251, %v1250
      %v1264 = vpack.c.b16 %v1253, %v1252
      %v1265 = vpack.c.b16 %v1255, %v1254
      %v1266 = vpack.c.b16 %v1257, %v1256
      %v1267 = vpack.c.b16 %v1259, %v1258
      %1276 = vmatpush.bf16.msra.mxu0 %v1267
      %1277 = vmatpush.bf16.msra.mxu0 %v1266
      %1278 = vmatpush.bf16.msra.mxu0 %v1265
      %1279 = vmatpush.bf16.msra.mxu0 %v1264
      %1280 = vmatpush.bf16.msra.mxu0 %v1263
      %1281 = vmatpush.bf16.msra.mxu0 %v1262
      %1282 = vmatpush.bf16.msra.mxu0 %v1261
      %1283 = vmatpush.bf16.msra.mxu0 %v1260
      %1284 = vmatmul.bf16.gmra.mxu0 %v1226
      %v1285 = vpop.f32.mrf.mxu0
      %v1286 = vadd.f32 0.0, %v1285
      %v1287 = vpop.f32.mrf.mxu0
      %v1288 = vadd.f32 0.0, %v1287
      %1289 = vdwg.mxu0
      %v1290 = vadd.f32 %v1188, %v1286
      %v1291 = vadd.f32 %v1189, %v1288
      %v1292 = vld [vmem:[%s901] sm:$0xe]
      %v1293 = vld [vmem:[%s905] sm:$0xe]
      %s1294 = scalar_lea.vmem %s2, 320
      %v1295 = vld [vmem:[%s1294] sm:$0xf]
      %v1296 = vld [vmem:[%s1294 + $0x4] sm:$0xf]
      %v1297 = vld [vmem:[%s1294 + $0x8] sm:$0xf]
      %v1298 = vld [vmem:[%s1294 + $0xc] sm:$0xf]
      %v1299 = vld [vmem:[%s1294 + $0x10] sm:$0xf]
      %v1300 = vld [vmem:[%s1294 + $0x14] sm:$0xf]
      %v1301 = vld [vmem:[%s1294 + $0x18] sm:$0xf]
      %v1302 = vld [vmem:[%s1294 + $0x1c] sm:$0xf]
      %v1303 = vld [vmem:[%s1294 + $0x20] sm:$0xf]
      %v1304 = vld [vmem:[%s1294 + $0x24] sm:$0xf]
      %v1305 = vld [vmem:[%s1294 + $0x28] sm:$0xf]
      %v1306 = vld [vmem:[%s1294 + $0x2c] sm:$0xf]
      %v1307 = vld [vmem:[%s1294 + $0x30] sm:$0xf]
      %v1308 = vld [vmem:[%s1294 + $0x34] sm:$0xf]
      %v1309 = vld [vmem:[%s1294 + $0x38] sm:$0xf]
      %v1310 = vld [vmem:[%s1294 + $0x3c] sm:$0xf]
      %v1312 = vunpack.c.l.b16 %v1292
      %v1313 = vpack.c.b16 %v1109, %v1312
      %v1314 = vrot.slane %v1313, 1
      %v1315 = vrot.slane %v1112, 1
      %v1316 = vsel %vm741, %v1314, %v1315
      %v1334 = vunpack.c.l.b16 %v1295
      %v1335 = vunpack.c.l.b16 %v1296
      %v1336 = vunpack.c.l.b16 %v1297
      %v1337 = vunpack.c.l.b16 %v1298
      %v1338 = vunpack.c.l.b16 %v1299
      %v1339 = vunpack.c.l.b16 %v1300
      %v1340 = vunpack.c.l.b16 %v1301
      %v1341 = vunpack.c.l.b16 %v1302
      %v1342 = vunpack.c.l.b16 %v1303
      %v1343 = vunpack.c.l.b16 %v1304
      %v1344 = vunpack.c.l.b16 %v1305
      %v1345 = vunpack.c.l.b16 %v1306
      %v1346 = vunpack.c.l.b16 %v1307
      %v1347 = vunpack.c.l.b16 %v1308
      %v1348 = vunpack.c.l.b16 %v1309
      %v1349 = vunpack.c.l.b16 %v1310
      %v1350 = vpack.c.b16 %v1335, %v1334
      %v1351 = vpack.c.b16 %v1337, %v1336
      %v1352 = vpack.c.b16 %v1339, %v1338
      %v1353 = vpack.c.b16 %v1341, %v1340
      %v1354 = vpack.c.b16 %v1343, %v1342
      %v1355 = vpack.c.b16 %v1345, %v1344
      %v1356 = vpack.c.b16 %v1347, %v1346
      %v1357 = vpack.c.b16 %v1349, %v1348
      %1366 = vmatpush.bf16.msra.mxu0 %v1357
      %1367 = vmatpush.bf16.msra.mxu0 %v1356
      %1368 = vmatpush.bf16.msra.mxu0 %v1355
      %1369 = vmatpush.bf16.msra.mxu0 %v1354
      %1370 = vmatpush.bf16.msra.mxu0 %v1353
      %1371 = vmatpush.bf16.msra.mxu0 %v1352
      %1372 = vmatpush.bf16.msra.mxu0 %v1351
      %1373 = vmatpush.bf16.msra.mxu0 %v1350
      %1374 = vmatmul.bf16.gmra.mxu0 %v1316
      %v1375 = vpop.f32.mrf.mxu0
      %v1376 = vadd.f32 0.0, %v1375
      %v1377 = vpop.f32.mrf.mxu0
      %v1378 = vadd.f32 0.0, %v1377
      %1379 = vdwg.mxu0
      %v1380 = vadd.f32 %v1290, %v1376
      %v1381 = vadd.f32 %v1291, %v1378
      %s1382 = scalar_lea.vmem %s3, 320
      %v1383 = vld [vmem:[%s1382] sm:$0xf]
      %v1384 = vld [vmem:[%s1382 + $0x4] sm:$0xf]
      %v1385 = vld [vmem:[%s1382 + $0x8] sm:$0xf]
      %v1386 = vld [vmem:[%s1382 + $0xc] sm:$0xf]
      %v1387 = vld [vmem:[%s1382 + $0x10] sm:$0xf]
      %v1388 = vld [vmem:[%s1382 + $0x14] sm:$0xf]
      %v1389 = vld [vmem:[%s1382 + $0x18] sm:$0xf]
      %v1390 = vld [vmem:[%s1382 + $0x1c] sm:$0xf]
      %v1391 = vld [vmem:[%s1382 + $0x20] sm:$0xf]
      %v1392 = vld [vmem:[%s1382 + $0x24] sm:$0xf]
      %v1393 = vld [vmem:[%s1382 + $0x28] sm:$0xf]
      %v1394 = vld [vmem:[%s1382 + $0x2c] sm:$0xf]
      %v1395 = vld [vmem:[%s1382 + $0x30] sm:$0xf]
      %v1396 = vld [vmem:[%s1382 + $0x34] sm:$0xf]
      %v1397 = vld [vmem:[%s1382 + $0x38] sm:$0xf]
      %v1398 = vld [vmem:[%s1382 + $0x3c] sm:$0xf]
      %v1400 = vunpack.c.l.b16 %v1293
      %v1401 = vpack.c.b16 %v1211, %v1400
      %v1402 = vrot.slane %v1401, 1
      %v1403 = vrot.slane %v1214, 1
      %v1404 = vsel %vm741, %v1402, %v1403
      %v1422 = vunpack.c.l.b16 %v1383
      %v1423 = vunpack.c.l.b16 %v1384
      %v1424 = vunpack.c.l.b16 %v1385
      %v1425 = vunpack.c.l.b16 %v1386
      %v1426 = vunpack.c.l.b16 %v1387
      %v1427 = vunpack.c.l.b16 %v1388
      %v1428 = vunpack.c.l.b16 %v1389
      %v1429 = vunpack.c.l.b16 %v1390
      %v1430 = vunpack.c.l.b16 %v1391
      %v1431 = vunpack.c.l.b16 %v1392
      %v1432 = vunpack.c.l.b16 %v1393
      %v1433 = vunpack.c.l.b16 %v1394
      %v1434 = vunpack.c.l.b16 %v1395
      %v1435 = vunpack.c.l.b16 %v1396
      %v1436 = vunpack.c.l.b16 %v1397
      %v1437 = vunpack.c.l.b16 %v1398
      %v1438 = vpack.c.b16 %v1423, %v1422
      %v1439 = vpack.c.b16 %v1425, %v1424
      %v1440 = vpack.c.b16 %v1427, %v1426
      %v1441 = vpack.c.b16 %v1429, %v1428
      %v1442 = vpack.c.b16 %v1431, %v1430
      %v1443 = vpack.c.b16 %v1433, %v1432
      %v1444 = vpack.c.b16 %v1435, %v1434
      %v1445 = vpack.c.b16 %v1437, %v1436
      %1454 = vmatpush.bf16.msra.mxu0 %v1445
      %1455 = vmatpush.bf16.msra.mxu0 %v1444
      %1456 = vmatpush.bf16.msra.mxu0 %v1443
      %1457 = vmatpush.bf16.msra.mxu0 %v1442
      %1458 = vmatpush.bf16.msra.mxu0 %v1441
      %1459 = vmatpush.bf16.msra.mxu0 %v1440
      %1460 = vmatpush.bf16.msra.mxu0 %v1439
      %1461 = vmatpush.bf16.msra.mxu0 %v1438
      %1462 = vmatmul.bf16.gmra.mxu0 %v1404
      %v1463 = vpop.f32.mrf.mxu0
      %v1464 = vadd.f32 0.0, %v1463
      %v1465 = vpop.f32.mrf.mxu0
      %v1466 = vadd.f32 0.0, %v1465
      %1467 = vdwg.mxu0
      %v1468 = vadd.f32 %v1380, %v1464
      %v1469 = vadd.f32 %v1381, %v1466
      %s1470 = sadd.s32 %s23, 2
      %s1471 = smul.u32 %s1470, 3
      %s1472 = smul.addr %s1471, 4
      %s1473 = scalar_lea.vmem %s302, %s1472
      %v1474 = vld [vmem:[%s1473] sm:$0xf]
      %v1475 = vld [vmem:[%s1473 + $0x4] sm:$0xf]
      %s1476 = smul.addr %s1471, 4
      %s1477 = scalar_lea.vmem %s307, %s1476
      %v1478 = vld [vmem:[%s1477] sm:$0xf]
      %v1479 = vld [vmem:[%s1477 + $0x4] sm:$0xf]
      %s1480 = scalar_lea.vmem %s2, 384
      %v1481 = vld [vmem:[%s1480] sm:$0xf]
      %v1482 = vld [vmem:[%s1480 + $0x4] sm:$0xf]
      %v1483 = vld [vmem:[%s1480 + $0x8] sm:$0xf]
      %v1484 = vld [vmem:[%s1480 + $0xc] sm:$0xf]
      %v1485 = vld [vmem:[%s1480 + $0x10] sm:$0xf]
      %v1486 = vld [vmem:[%s1480 + $0x14] sm:$0xf]
      %v1487 = vld [vmem:[%s1480 + $0x18] sm:$0xf]
      %v1488 = vld [vmem:[%s1480 + $0x1c] sm:$0xf]
      %v1489 = vld [vmem:[%s1480 + $0x20] sm:$0xf]
      %v1490 = vld [vmem:[%s1480 + $0x24] sm:$0xf]
      %v1491 = vld [vmem:[%s1480 + $0x28] sm:$0xf]
      %v1492 = vld [vmem:[%s1480 + $0x2c] sm:$0xf]
      %v1493 = vld [vmem:[%s1480 + $0x30] sm:$0xf]
      %v1494 = vld [vmem:[%s1480 + $0x34] sm:$0xf]
      %v1495 = vld [vmem:[%s1480 + $0x38] sm:$0xf]
      %v1496 = vld [vmem:[%s1480 + $0x3c] sm:$0xf]
      %v1499 = vunpack.c.l.b16 %v1474
      %v1500 = vunpack.c.l.b16 %v1475
      %v1501 = vpack.c.b16 %v1500, %v1499
      %v1519 = vunpack.c.l.b16 %v1481
      %v1520 = vunpack.c.l.b16 %v1482
      %v1521 = vunpack.c.l.b16 %v1483
      %v1522 = vunpack.c.l.b16 %v1484
      %v1523 = vunpack.c.l.b16 %v1485
      %v1524 = vunpack.c.l.b16 %v1486
      %v1525 = vunpack.c.l.b16 %v1487
      %v1526 = vunpack.c.l.b16 %v1488
      %v1527 = vunpack.c.l.b16 %v1489
      %v1528 = vunpack.c.l.b16 %v1490
      %v1529 = vunpack.c.l.b16 %v1491
      %v1530 = vunpack.c.l.b16 %v1492
      %v1531 = vunpack.c.l.b16 %v1493
      %v1532 = vunpack.c.l.b16 %v1494
      %v1533 = vunpack.c.l.b16 %v1495
      %v1534 = vunpack.c.l.b16 %v1496
      %v1535 = vpack.c.b16 %v1520, %v1519
      %v1536 = vpack.c.b16 %v1522, %v1521
      %v1537 = vpack.c.b16 %v1524, %v1523
      %v1538 = vpack.c.b16 %v1526, %v1525
      %v1539 = vpack.c.b16 %v1528, %v1527
      %v1540 = vpack.c.b16 %v1530, %v1529
      %v1541 = vpack.c.b16 %v1532, %v1531
      %v1542 = vpack.c.b16 %v1534, %v1533
      %1551 = vmatpush.bf16.msra.mxu0 %v1542
      %1552 = vmatpush.bf16.msra.mxu0 %v1541
      %1553 = vmatpush.bf16.msra.mxu0 %v1540
      %1554 = vmatpush.bf16.msra.mxu0 %v1539
      %1555 = vmatpush.bf16.msra.mxu0 %v1538
      %1556 = vmatpush.bf16.msra.mxu0 %v1537
      %1557 = vmatpush.bf16.msra.mxu0 %v1536
      %1558 = vmatpush.bf16.msra.mxu0 %v1535
      %1559 = vmatmul.bf16.gmra.mxu0 %v1501
      %v1560 = vpop.f32.mrf.mxu0
      %v1561 = vadd.f32 0.0, %v1560
      %v1562 = vpop.f32.mrf.mxu0
      %v1563 = vadd.f32 0.0, %v1562
      %1564 = vdwg.mxu0
      %v1565 = vadd.f32 %v1468, %v1561
      %v1566 = vadd.f32 %v1469, %v1563
      %s1567 = scalar_lea.vmem %s3, 384
      %v1568 = vld [vmem:[%s1567] sm:$0xf]
      %v1569 = vld [vmem:[%s1567 + $0x4] sm:$0xf]
      %v1570 = vld [vmem:[%s1567 + $0x8] sm:$0xf]
      %v1571 = vld [vmem:[%s1567 + $0xc] sm:$0xf]
      %v1572 = vld [vmem:[%s1567 + $0x10] sm:$0xf]
      %v1573 = vld [vmem:[%s1567 + $0x14] sm:$0xf]
      %v1574 = vld [vmem:[%s1567 + $0x18] sm:$0xf]
      %v1575 = vld [vmem:[%s1567 + $0x1c] sm:$0xf]
      %v1576 = vld [vmem:[%s1567 + $0x20] sm:$0xf]
      %v1577 = vld [vmem:[%s1567 + $0x24] sm:$0xf]
      %v1578 = vld [vmem:[%s1567 + $0x28] sm:$0xf]
      %v1579 = vld [vmem:[%s1567 + $0x2c] sm:$0xf]
      %v1580 = vld [vmem:[%s1567 + $0x30] sm:$0xf]
      %v1581 = vld [vmem:[%s1567 + $0x34] sm:$0xf]
      %v1582 = vld [vmem:[%s1567 + $0x38] sm:$0xf]
      %v1583 = vld [vmem:[%s1567 + $0x3c] sm:$0xf]
      %v1586 = vunpack.c.l.b16 %v1478
      %v1587 = vunpack.c.l.b16 %v1479
      %v1588 = vpack.c.b16 %v1587, %v1586
      %v1606 = vunpack.c.l.b16 %v1568
      %v1607 = vunpack.c.l.b16 %v1569
      %v1608 = vunpack.c.l.b16 %v1570
      %v1609 = vunpack.c.l.b16 %v1571
      %v1610 = vunpack.c.l.b16 %v1572
      %v1611 = vunpack.c.l.b16 %v1573
      %v1612 = vunpack.c.l.b16 %v1574
      %v1613 = vunpack.c.l.b16 %v1575
      %v1614 = vunpack.c.l.b16 %v1576
      %v1615 = vunpack.c.l.b16 %v1577
      %v1616 = vunpack.c.l.b16 %v1578
      %v1617 = vunpack.c.l.b16 %v1579
      %v1618 = vunpack.c.l.b16 %v1580
      %v1619 = vunpack.c.l.b16 %v1581
      %v1620 = vunpack.c.l.b16 %v1582
      %v1621 = vunpack.c.l.b16 %v1583
      %v1622 = vpack.c.b16 %v1607, %v1606
      %v1623 = vpack.c.b16 %v1609, %v1608
      %v1624 = vpack.c.b16 %v1611, %v1610
      %v1625 = vpack.c.b16 %v1613, %v1612
      %v1626 = vpack.c.b16 %v1615, %v1614
      %v1627 = vpack.c.b16 %v1617, %v1616
      %v1628 = vpack.c.b16 %v1619, %v1618
      %v1629 = vpack.c.b16 %v1621, %v1620
      %1638 = vmatpush.bf16.msra.mxu0 %v1629
      %1639 = vmatpush.bf16.msra.mxu0 %v1628
      %1640 = vmatpush.bf16.msra.mxu0 %v1627
      %1641 = vmatpush.bf16.msra.mxu0 %v1626
      %1642 = vmatpush.bf16.msra.mxu0 %v1625
      %1643 = vmatpush.bf16.msra.mxu0 %v1624
      %1644 = vmatpush.bf16.msra.mxu0 %v1623
      %1645 = vmatpush.bf16.msra.mxu0 %v1622
      %1646 = vmatmul.bf16.gmra.mxu0 %v1588
      %v1647 = vpop.f32.mrf.mxu0
      %v1648 = vadd.f32 0.0, %v1647
      %v1649 = vpop.f32.mrf.mxu0
      %v1650 = vadd.f32 0.0, %v1649
      %1651 = vdwg.mxu0
      %v1652 = vadd.f32 %v1565, %v1648
      %v1653 = vadd.f32 %v1566, %v1650
      %v1654 = vld [vmem:[%s1473] sm:$0xf]
      %v1655 = vld [vmem:[%s1473 + $0x4] sm:$0xf]
      %v1656 = vld [vmem:[%s1473 + $0x8] sm:$0x1]
      %v1657 = vld [vmem:[%s1477] sm:$0xf]
      %v1658 = vld [vmem:[%s1477 + $0x4] sm:$0xf]
      %v1659 = vld [vmem:[%s1477 + $0x8] sm:$0x1]
      %s1660 = scalar_lea.vmem %s2, 448
      %v1661 = vld [vmem:[%s1660] sm:$0xf]
      %v1662 = vld [vmem:[%s1660 + $0x4] sm:$0xf]
      %v1663 = vld [vmem:[%s1660 + $0x8] sm:$0xf]
      %v1664 = vld [vmem:[%s1660 + $0xc] sm:$0xf]
      %v1665 = vld [vmem:[%s1660 + $0x10] sm:$0xf]
      %v1666 = vld [vmem:[%s1660 + $0x14] sm:$0xf]
      %v1667 = vld [vmem:[%s1660 + $0x18] sm:$0xf]
      %v1668 = vld [vmem:[%s1660 + $0x1c] sm:$0xf]
      %v1669 = vld [vmem:[%s1660 + $0x20] sm:$0xf]
      %v1670 = vld [vmem:[%s1660 + $0x24] sm:$0xf]
      %v1671 = vld [vmem:[%s1660 + $0x28] sm:$0xf]
      %v1672 = vld [vmem:[%s1660 + $0x2c] sm:$0xf]
      %v1673 = vld [vmem:[%s1660 + $0x30] sm:$0xf]
      %v1674 = vld [vmem:[%s1660 + $0x34] sm:$0xf]
      %v1675 = vld [vmem:[%s1660 + $0x38] sm:$0xf]
      %v1676 = vld [vmem:[%s1660 + $0x3c] sm:$0xf]
      %v1680 = vunpack.c.l.b16 %v1654
      %v1681 = vunpack.c.l.b16 %v1655
      %v1682 = vunpack.c.l.b16 %v1656
      %v1683 = vpack.c.b16 %v1681, %v1680
      %v1684 = vpack.c.b16 %v1682, %v1682
      %v1686 = vshrl.u32 %v1683, 16
      %v1688 = vshll.u32 %v1683, 16
      %v1690 = vrot.slane %v1688, 1
      %v1691 = vor.u32 %v1686, %v1690
      %v1693 = vshll.u32 %v1684, 16
      %v1695 = vrot.slane %v1693, 1
      %v1696 = vsel %vm539, %v1691, %v1695
      %v1714 = vunpack.c.l.b16 %v1661
      %v1715 = vunpack.c.l.b16 %v1662
      %v1716 = vunpack.c.l.b16 %v1663
      %v1717 = vunpack.c.l.b16 %v1664
      %v1718 = vunpack.c.l.b16 %v1665
      %v1719 = vunpack.c.l.b16 %v1666
      %v1720 = vunpack.c.l.b16 %v1667
      %v1721 = vunpack.c.l.b16 %v1668
      %v1722 = vunpack.c.l.b16 %v1669
      %v1723 = vunpack.c.l.b16 %v1670
      %v1724 = vunpack.c.l.b16 %v1671
      %v1725 = vunpack.c.l.b16 %v1672
      %v1726 = vunpack.c.l.b16 %v1673
      %v1727 = vunpack.c.l.b16 %v1674
      %v1728 = vunpack.c.l.b16 %v1675
      %v1729 = vunpack.c.l.b16 %v1676
      %v1730 = vpack.c.b16 %v1715, %v1714
      %v1731 = vpack.c.b16 %v1717, %v1716
      %v1732 = vpack.c.b16 %v1719, %v1718
      %v1733 = vpack.c.b16 %v1721, %v1720
      %v1734 = vpack.c.b16 %v1723, %v1722
      %v1735 = vpack.c.b16 %v1725, %v1724
      %v1736 = vpack.c.b16 %v1727, %v1726
      %v1737 = vpack.c.b16 %v1729, %v1728
      %1746 = vmatpush.bf16.msra.mxu0 %v1737
      %1747 = vmatpush.bf16.msra.mxu0 %v1736
      %1748 = vmatpush.bf16.msra.mxu0 %v1735
      %1749 = vmatpush.bf16.msra.mxu0 %v1734
      %1750 = vmatpush.bf16.msra.mxu0 %v1733
      %1751 = vmatpush.bf16.msra.mxu0 %v1732
      %1752 = vmatpush.bf16.msra.mxu0 %v1731
      %1753 = vmatpush.bf16.msra.mxu0 %v1730
      %1754 = vmatmul.bf16.gmra.mxu0 %v1696
      %v1755 = vpop.f32.mrf.mxu0
      %v1756 = vadd.f32 0.0, %v1755
      %v1757 = vpop.f32.mrf.mxu0
      %v1758 = vadd.f32 0.0, %v1757
      %1759 = vdwg.mxu0
      %v1760 = vadd.f32 %v1652, %v1756
      %v1761 = vadd.f32 %v1653, %v1758
      %s1762 = scalar_lea.vmem %s3, 448
      %v1763 = vld [vmem:[%s1762] sm:$0xf]
      %v1764 = vld [vmem:[%s1762 + $0x4] sm:$0xf]
      %v1765 = vld [vmem:[%s1762 + $0x8] sm:$0xf]
      %v1766 = vld [vmem:[%s1762 + $0xc] sm:$0xf]
      %v1767 = vld [vmem:[%s1762 + $0x10] sm:$0xf]
      %v1768 = vld [vmem:[%s1762 + $0x14] sm:$0xf]
      %v1769 = vld [vmem:[%s1762 + $0x18] sm:$0xf]
      %v1770 = vld [vmem:[%s1762 + $0x1c] sm:$0xf]
      %v1771 = vld [vmem:[%s1762 + $0x20] sm:$0xf]
      %v1772 = vld [vmem:[%s1762 + $0x24] sm:$0xf]
      %v1773 = vld [vmem:[%s1762 + $0x28] sm:$0xf]
      %v1774 = vld [vmem:[%s1762 + $0x2c] sm:$0xf]
      %v1775 = vld [vmem:[%s1762 + $0x30] sm:$0xf]
      %v1776 = vld [vmem:[%s1762 + $0x34] sm:$0xf]
      %v1777 = vld [vmem:[%s1762 + $0x38] sm:$0xf]
      %v1778 = vld [vmem:[%s1762 + $0x3c] sm:$0xf]
      %v1782 = vunpack.c.l.b16 %v1657
      %v1783 = vunpack.c.l.b16 %v1658
      %v1784 = vunpack.c.l.b16 %v1659
      %v1785 = vpack.c.b16 %v1783, %v1782
      %v1786 = vpack.c.b16 %v1784, %v1784
      %v1788 = vshrl.u32 %v1785, 16
      %v1790 = vshll.u32 %v1785, 16
      %v1792 = vrot.slane %v1790, 1
      %v1793 = vor.u32 %v1788, %v1792
      %v1795 = vshll.u32 %v1786, 16
      %v1797 = vrot.slane %v1795, 1
      %v1798 = vsel %vm539, %v1793, %v1797
      %v1816 = vunpack.c.l.b16 %v1763
      %v1817 = vunpack.c.l.b16 %v1764
      %v1818 = vunpack.c.l.b16 %v1765
      %v1819 = vunpack.c.l.b16 %v1766
      %v1820 = vunpack.c.l.b16 %v1767
      %v1821 = vunpack.c.l.b16 %v1768
      %v1822 = vunpack.c.l.b16 %v1769
      %v1823 = vunpack.c.l.b16 %v1770
      %v1824 = vunpack.c.l.b16 %v1771
      %v1825 = vunpack.c.l.b16 %v1772
      %v1826 = vunpack.c.l.b16 %v1773
      %v1827 = vunpack.c.l.b16 %v1774
      %v1828 = vunpack.c.l.b16 %v1775
      %v1829 = vunpack.c.l.b16 %v1776
      %v1830 = vunpack.c.l.b16 %v1777
      %v1831 = vunpack.c.l.b16 %v1778
      %v1832 = vpack.c.b16 %v1817, %v1816
      %v1833 = vpack.c.b16 %v1819, %v1818
      %v1834 = vpack.c.b16 %v1821, %v1820
      %v1835 = vpack.c.b16 %v1823, %v1822
      %v1836 = vpack.c.b16 %v1825, %v1824
      %v1837 = vpack.c.b16 %v1827, %v1826
      %v1838 = vpack.c.b16 %v1829, %v1828
      %v1839 = vpack.c.b16 %v1831, %v1830
      %1848 = vmatpush.bf16.msra.mxu0 %v1839
      %1849 = vmatpush.bf16.msra.mxu0 %v1838
      %1850 = vmatpush.bf16.msra.mxu0 %v1837
      %1851 = vmatpush.bf16.msra.mxu0 %v1836
      %1852 = vmatpush.bf16.msra.mxu0 %v1835
      %1853 = vmatpush.bf16.msra.mxu0 %v1834
      %1854 = vmatpush.bf16.msra.mxu0 %v1833
      %1855 = vmatpush.bf16.msra.mxu0 %v1832
      %1856 = vmatmul.bf16.gmra.mxu0 %v1798
      %v1857 = vpop.f32.mrf.mxu0
      %v1858 = vadd.f32 0.0, %v1857
      %v1859 = vpop.f32.mrf.mxu0
      %v1860 = vadd.f32 0.0, %v1859
      %1861 = vdwg.mxu0
      %v1862 = vadd.f32 %v1760, %v1858
      %v1863 = vadd.f32 %v1761, %v1860
      %v1864 = vld [vmem:[%s1473] sm:$0xe]
      %v1865 = vld [vmem:[%s1477] sm:$0xe]
      %s1866 = scalar_lea.vmem %s2, 512
      %v1867 = vld [vmem:[%s1866] sm:$0xf]
      %v1868 = vld [vmem:[%s1866 + $0x4] sm:$0xf]
      %v1869 = vld [vmem:[%s1866 + $0x8] sm:$0xf]
      %v1870 = vld [vmem:[%s1866 + $0xc] sm:$0xf]
      %v1871 = vld [vmem:[%s1866 + $0x10] sm:$0xf]
      %v1872 = vld [vmem:[%s1866 + $0x14] sm:$0xf]
      %v1873 = vld [vmem:[%s1866 + $0x18] sm:$0xf]
      %v1874 = vld [vmem:[%s1866 + $0x1c] sm:$0xf]
      %v1875 = vld [vmem:[%s1866 + $0x20] sm:$0xf]
      %v1876 = vld [vmem:[%s1866 + $0x24] sm:$0xf]
      %v1877 = vld [vmem:[%s1866 + $0x28] sm:$0xf]
      %v1878 = vld [vmem:[%s1866 + $0x2c] sm:$0xf]
      %v1879 = vld [vmem:[%s1866 + $0x30] sm:$0xf]
      %v1880 = vld [vmem:[%s1866 + $0x34] sm:$0xf]
      %v1881 = vld [vmem:[%s1866 + $0x38] sm:$0xf]
      %v1882 = vld [vmem:[%s1866 + $0x3c] sm:$0xf]
      %v1884 = vunpack.c.l.b16 %v1864
      %v1885 = vpack.c.b16 %v1681, %v1884
      %v1886 = vrot.slane %v1885, 1
      %v1887 = vrot.slane %v1684, 1
      %v1888 = vsel %vm741, %v1886, %v1887
      %v1906 = vunpack.c.l.b16 %v1867
      %v1907 = vunpack.c.l.b16 %v1868
      %v1908 = vunpack.c.l.b16 %v1869
      %v1909 = vunpack.c.l.b16 %v1870
      %v1910 = vunpack.c.l.b16 %v1871
      %v1911 = vunpack.c.l.b16 %v1872
      %v1912 = vunpack.c.l.b16 %v1873
      %v1913 = vunpack.c.l.b16 %v1874
      %v1914 = vunpack.c.l.b16 %v1875
      %v1915 = vunpack.c.l.b16 %v1876
      %v1916 = vunpack.c.l.b16 %v1877
      %v1917 = vunpack.c.l.b16 %v1878
      %v1918 = vunpack.c.l.b16 %v1879
      %v1919 = vunpack.c.l.b16 %v1880
      %v1920 = vunpack.c.l.b16 %v1881
      %v1921 = vunpack.c.l.b16 %v1882
      %v1922 = vpack.c.b16 %v1907, %v1906
      %v1923 = vpack.c.b16 %v1909, %v1908
      %v1924 = vpack.c.b16 %v1911, %v1910
      %v1925 = vpack.c.b16 %v1913, %v1912
      %v1926 = vpack.c.b16 %v1915, %v1914
      %v1927 = vpack.c.b16 %v1917, %v1916
      %v1928 = vpack.c.b16 %v1919, %v1918
      %v1929 = vpack.c.b16 %v1921, %v1920
      %1938 = vmatpush.bf16.msra.mxu0 %v1929
      %1939 = vmatpush.bf16.msra.mxu0 %v1928
      %1940 = vmatpush.bf16.msra.mxu0 %v1927
      %1941 = vmatpush.bf16.msra.mxu0 %v1926
      %1942 = vmatpush.bf16.msra.mxu0 %v1925
      %1943 = vmatpush.bf16.msra.mxu0 %v1924
      %1944 = vmatpush.bf16.msra.mxu0 %v1923
      %1945 = vmatpush.bf16.msra.mxu0 %v1922
      %1946 = vmatmul.bf16.gmra.mxu0 %v1888
      %v1947 = vpop.f32.mrf.mxu0
      %v1948 = vadd.f32 0.0, %v1947
      %v1949 = vpop.f32.mrf.mxu0
      %v1950 = vadd.f32 0.0, %v1949
      %1951 = vdwg.mxu0
      %v1952 = vadd.f32 %v1862, %v1948
      %v1953 = vadd.f32 %v1863, %v1950
      %s1954 = scalar_lea.vmem %s3, 512
      %v1955 = vld [vmem:[%s1954] sm:$0xf]
      %v1956 = vld [vmem:[%s1954 + $0x4] sm:$0xf]
      %v1957 = vld [vmem:[%s1954 + $0x8] sm:$0xf]
      %v1958 = vld [vmem:[%s1954 + $0xc] sm:$0xf]
      %v1959 = vld [vmem:[%s1954 + $0x10] sm:$0xf]
      %v1960 = vld [vmem:[%s1954 + $0x14] sm:$0xf]
      %v1961 = vld [vmem:[%s1954 + $0x18] sm:$0xf]
      %v1962 = vld [vmem:[%s1954 + $0x1c] sm:$0xf]
      %v1963 = vld [vmem:[%s1954 + $0x20] sm:$0xf]
      %v1964 = vld [vmem:[%s1954 + $0x24] sm:$0xf]
      %v1965 = vld [vmem:[%s1954 + $0x28] sm:$0xf]
      %v1966 = vld [vmem:[%s1954 + $0x2c] sm:$0xf]
      %v1967 = vld [vmem:[%s1954 + $0x30] sm:$0xf]
      %v1968 = vld [vmem:[%s1954 + $0x34] sm:$0xf]
      %v1969 = vld [vmem:[%s1954 + $0x38] sm:$0xf]
      %v1970 = vld [vmem:[%s1954 + $0x3c] sm:$0xf]
      %v1972 = vunpack.c.l.b16 %v1865
      %v1973 = vpack.c.b16 %v1783, %v1972
      %v1974 = vrot.slane %v1973, 1
      %v1975 = vrot.slane %v1786, 1
      %v1976 = vsel %vm741, %v1974, %v1975
      %v1994 = vunpack.c.l.b16 %v1955
      %v1995 = vunpack.c.l.b16 %v1956
      %v1996 = vunpack.c.l.b16 %v1957
      %v1997 = vunpack.c.l.b16 %v1958
      %v1998 = vunpack.c.l.b16 %v1959
      %v1999 = vunpack.c.l.b16 %v1960
      %v2000 = vunpack.c.l.b16 %v1961
      %v2001 = vunpack.c.l.b16 %v1962
      %v2002 = vunpack.c.l.b16 %v1963
      %v2003 = vunpack.c.l.b16 %v1964
      %v2004 = vunpack.c.l.b16 %v1965
      %v2005 = vunpack.c.l.b16 %v1966
      %v2006 = vunpack.c.l.b16 %v1967
      %v2007 = vunpack.c.l.b16 %v1968
      %v2008 = vunpack.c.l.b16 %v1969
      %v2009 = vunpack.c.l.b16 %v1970
      %v2010 = vpack.c.b16 %v1995, %v1994
      %v2011 = vpack.c.b16 %v1997, %v1996
      %v2012 = vpack.c.b16 %v1999, %v1998
      %v2013 = vpack.c.b16 %v2001, %v2000
      %v2014 = vpack.c.b16 %v2003, %v2002
      %v2015 = vpack.c.b16 %v2005, %v2004
      %v2016 = vpack.c.b16 %v2007, %v2006
      %v2017 = vpack.c.b16 %v2009, %v2008
      %2026 = vmatpush.bf16.msra.mxu0 %v2017
      %2027 = vmatpush.bf16.msra.mxu0 %v2016
      %2028 = vmatpush.bf16.msra.mxu0 %v2015
      %2029 = vmatpush.bf16.msra.mxu0 %v2014
      %2030 = vmatpush.bf16.msra.mxu0 %v2013
      %2031 = vmatpush.bf16.msra.mxu0 %v2012
      %2032 = vmatpush.bf16.msra.mxu0 %v2011
      %2033 = vmatpush.bf16.msra.mxu0 %v2010
      %2034 = vmatmul.bf16.gmra.mxu0 %v1976
      %v2035 = vpop.f32.mrf.mxu0
      %v2036 = vadd.f32 0.0, %v2035
      %v2037 = vpop.f32.mrf.mxu0
      %v2038 = vadd.f32 0.0, %v2037
      %2039 = vdwg.mxu0
      %v2040 = vadd.f32 %v1952, %v2036
      %v2041 = vadd.f32 %v1953, %v2038
      %v2042 = vpack.c.bf16 %v2040, %v2040
      %v2043 = vpack.c.bf16 %v2041, %v2041
      %2044 = vst [vmem:[%s316] sm:$0xf] %v2042
      %2045 = vst [vmem:[%s316 + $0x4] sm:$0xf] %v2043
      %v2046 = vadd.f32 %v2040, %v2041
      %v2047 = vrot.slane %v2046, 4
      %v2048 = vadd.f32 %v2046, %v2047
      %v2049 = vrot.slane %v2048, 2
      %v2050 = vadd.f32 %v2048, %v2049
      %v2051 = vrot.slane %v2050, 1
      %v2052 = vadd.f32 %v2050, %v2051
      %2053 = vst [vmem:[%s323] sm:$0x1] %v2052
      %v2054 = vmul.f32 %v2040, %v2040
      %v2055 = vmul.f32 %v2041, %v2041
      %v2056 = vadd.f32 %v2054, %v2055
      %v2057 = vrot.slane %v2056, 4
      %v2058 = vadd.f32 %v2056, %v2057
      %v2059 = vrot.slane %v2058, 2
      %v2060 = vadd.f32 %v2058, %v2059
      %v2061 = vrot.slane %v2060, 1
      %v2062 = vadd.f32 %v2060, %v2061
      %2063 = vst [vmem:[%s330] sm:$0x1] %v2062
      %p2064 = scmp.lt.s32.totalorder %s22, 1
      %s2065 = scalar_select %p2064, %s22, 1
      %p2066 = scmp.lt.s32.totalorder %s23, 15
      %s2067 = scalar_select %p2066, %s23, 15
      %s2068 = smul.addr %s2067, 2
      %s2069 = smul.addr %s2065, 32
      %s2070 = sadd.s32 %s2068, %s2069
      %s2071 = smul.addr %s2070, 4
      %s2072 = scalar_lea.vmem %s4, %s2071
      %p2073 = scmp.lt.s32.totalorder %s22, 1
      %s2074 = scalar_select %p2073, %s22, 1
      %p2075 = scmp.lt.s32.totalorder %s23, 15
      %s2076 = scalar_select %p2075, %s23, 15
      %s2077 = smul.addr %s2074, 16
      %s2078 = sadd.s32 %s2076, %s2077
      %s2079 = scalar_lea.vmem %s5, %s2078
      %p2080 = scmp.lt.s32.totalorder %s22, 1
      %s2081 = scalar_select %p2080, %s22, 1
      %p2082 = scmp.lt.s32.totalorder %s23, 15
      %s2083 = scalar_select %p2082, %s23, 15
      %s2084 = smul.addr %s2081, 16
      %s2085 = sadd.s32 %s2083, %s2084
      %s2086 = scalar_lea.vmem %s6, %s2085
      // Predicated region
      $region37: #{expanding_block_forward.5} parent=35 // pred_check
        %p2087 = pneg %p144
      $region38: #{expanding_block_forward.5} parent=35 // pred_check_branch
        %2089 = sbr.rel (%p2087) target = $region40
      $region39: #{expanding_block_forward.5} parent=35 // pred_region
        _
      $region40: #{expanding_block_forward.5} parent=35 // pred_fallthru
        _
      // Predicated region
      $region41: #{expanding_block_forward.5} parent=35 // pred_check
        %p2090 = pneg %p172
      $region42: #{expanding_block_forward.5} parent=35 // pred_check_branch
        %2092 = sbr.rel (%p2090) target = $region44
      $region43: #{expanding_block_forward.5} parent=35 // pred_region
        _
      $region44: #{expanding_block_forward.5} parent=35 // pred_fallthru
        _
      // Predicated region
      $region45: #{expanding_block_forward.5} parent=35 // pred_check
        %p2093 = pneg %p200
      $region46: #{expanding_block_forward.5} parent=35 // pred_check_branch
        %2095 = sbr.rel (%p2093) target = $region48
      $region47: #{expanding_block_forward.5} parent=35 // pred_region
        _
      $region48: #{expanding_block_forward.5} parent=35 // pred_fallthru
        _
    $region36: #{expanding_block_forward.5} parent=5 // pred_fallthru
      _
    %p2096 = scmp.le.s32.totalorder 2, %s13
    // Predicated region
    $region49: #{expanding_block_forward.5} parent=5 // pred_check
      %p2097 = pneg %p2096
    $region50: #{expanding_block_forward.5} parent=5 // pred_check_branch
      %2099 = sbr.rel (%p2097) target = $region52
    $region51: #{expanding_block_forward.5} parent=5 // pred_region
      %s2100 = ssub.s32 %s13, 2
      // Predicated region
      $region53: #{expanding_block_forward.5} parent=51 // pred_check
        %p2101 = pneg %p150
      $region54: #{expanding_block_forward.5} parent=51 // pred_check_branch
        %2103 = sbr.rel (%p2101) target = $region56
      $region55: #{expanding_block_forward.5} parent=51 // pred_region
        %p2104 = scmp.lt.s32.totalorder %s24, 1
        %s2105 = scalar_select %p2104, %s24, 1
        %p2106 = scmp.lt.s32.totalorder %s25, 15
        %s2107 = scalar_select %p2106, %s25, 15
        %s2108 = smul.addr %s2107, 2
        %s2109 = smul.addr %s2105, 32
        %s2110 = sadd.s32 %s2108, %s2109
        %s2111 = smul.addr %s2110, 4
        %s2112 = scalar_lea.vmem %s4, %s2111
      $region56: #{expanding_block_forward.5} parent=51 // pred_fallthru
        _
      // Predicated region
      $region57: #{expanding_block_forward.5} parent=51 // pred_check
        %p2113 = pneg %p178
      $region58: #{expanding_block_forward.5} parent=51 // pred_check_branch
        %2115 = sbr.rel (%p2113) target = $region60
      $region59: #{expanding_block_forward.5} parent=51 // pred_region
        %p2116 = scmp.lt.s32.totalorder %s24, 1
        %s2117 = scalar_select %p2116, %s24, 1
        %p2118 = scmp.lt.s32.totalorder %s25, 15
        %s2119 = scalar_select %p2118, %s25, 15
        %s2120 = smul.addr %s2117, 16
        %s2121 = sadd.s32 %s2119, %s2120
        %s2122 = scalar_lea.vmem %s5, %s2121
      $region60: #{expanding_block_forward.5} parent=51 // pred_fallthru
        _
      // Predicated region
      $region61: #{expanding_block_forward.5} parent=51 // pred_check
        %p2123 = pneg %p206
      $region62: #{expanding_block_forward.5} parent=51 // pred_check_branch
        %2125 = sbr.rel (%p2123) target = $region64
      $region63: #{expanding_block_forward.5} parent=51 // pred_region
        %p2126 = scmp.lt.s32.totalorder %s24, 1
        %s2127 = scalar_select %p2126, %s24, 1
        %p2128 = scmp.lt.s32.totalorder %s25, 15
        %s2129 = scalar_select %p2128, %s25, 15
        %s2130 = smul.addr %s2127, 16
        %s2131 = sadd.s32 %s2129, %s2130
        %s2132 = scalar_lea.vmem %s6, %s2131
      $region64: #{expanding_block_forward.5} parent=51 // pred_fallthru
        _
    $region52: #{expanding_block_forward.5} parent=5 // pred_fallthru
      _
  $region6: #{expanding_block_forward.5} parent=0 // loop_footer
    %s17 = sadd.s32 1, %s13
  $region7: #{expanding_block_forward.5} parent=0 // loop_footer_branch
    %12 = sbr.rel target = $region3
  $region8: #{expanding_block_forward.5} parent=0 // loop_exit
    _

</llo_original>
